<compile_context>
chip_gen: v6e
topology: v6e:2x2x1
jax: 0.10.0
libtpu: 0.0.40
codegen_flags: <defaults>
</compile_context>

<pallas_src>
import functools

import jax
import jax.numpy as jnp
from jax import lax
from jax.experimental import pallas as pl
from jax.experimental.pallas import tpu as pltpu

KH = KW = 5
PAD = 2
BN_EPS = 1e-3
CSUB = 128  # lane width; inner per-sub-block channel tile


def _dwconv_bn_kernel(x_ref, w_ref, g_ref, b_ref, o_ref, xpad_ref, *, H, W):
    """One channel block: depthwise 5x5 conv + training-mode batch norm.

    x_ref   : (N, H, W, Cb)      unpadded input block (NHWC)
    w_ref   : (25, Cb)           depthwise taps, row-major (kh*5+kw)
    g_ref   : (1, Cb)            BN gamma
    b_ref   : (1, Cb)            BN beta
    o_ref   : (N, H, W, Cb)      output block
    xpad_ref: (N, H+4, W+4, Cb)  f32 VMEM scratch with zero halo
    """
    N = o_ref.shape[0]
    Cb = o_ref.shape[3]
    Hp = H + 2 * PAD
    Wp = W + 2 * PAD

    # ---- prologue: build the zero-halo padded block in VMEM --------------
    # Zero only the 4 halo slabs (not the whole padded block): top/bottom
    # PAD rows over the full padded width and left/right PAD columns over
    # the interior rows (corners covered by the row slabs).  Then copy the
    # interior.  This writes ~half the bytes of a full-scratch zero + copy.
    zrow = jnp.zeros((N, PAD, Wp, Cb), jnp.float32)
    zcol = jnp.zeros((N, H, PAD, Cb), jnp.float32)
    xpad_ref[:, 0:PAD, :, :] = zrow
    xpad_ref[:, PAD + H:Hp, :, :] = zrow
    xpad_ref[:, PAD:PAD + H, 0:PAD, :] = zcol
    xpad_ref[:, PAD:PAD + H, PAD + W:Wp, :] = zcol
    xpad_ref[:, PAD:PAD + H, PAD:PAD + W, :] = x_ref[...].astype(jnp.float32)

    inv_count = jnp.float32(1.0 / (N * H * W))

    # ---- per 128-lane channel sub-block: conv + BN ------------------------
    # Static Python loop: trip count <= C/128 per grid step, nothing carried
    # across iterations (bounded live ranges per iteration), and every lane
    # slice is static & 128-aligned (dynamic lane offsets avoided on purpose).
    for j in range(Cb // CSUB):
        c0 = j * CSUB

        # All 25 taps for this sub-block in ~4 vregs (one VMEM read instead
        # of 25 single-row loads); per-tap extract happens on the XLU.
        w_blk = w_ref[:, c0:c0 + CSUB].astype(jnp.float32)         # (25, CSUB)

        acc0 = jnp.zeros((N, H, W, CSUB), jnp.float32)
        acc1 = jnp.zeros((N, H, W, CSUB), jnp.float32)             # 2 accs -> ILP

        # kw-outer / kh-inner: the sublane-misaligned W-shifted slab is
        # loaded once per kw (5 loads total); the kh window is a free slice
        # of the loaded value along the major H axis.
        for kw in range(KW):
            xw = xpad_ref[:, :, kw:kw + W, c0:c0 + CSUB]           # (N, Hp, W, CSUB)
            for kh in range(KH):
                tap = w_blk[kh * KW + kw]                          # (CSUB,)
                xs = xw[:, kh:kh + H, :, :]                        # (N, H, W, CSUB)
                if (kh + kw) % 2 == 0:
                    acc0 = acc0 + xs * tap
                else:
                    acc1 = acc1 + xs * tap
        acc = acc0 + acc1

        # Two-pass biased batch statistics over (N, H, W) per lane; acc is
        # already in vregs so the second pass is a few extra VALU ops and
        # matches the reference (y - mean)^2 form numerically.
        mean = jnp.sum(acc, axis=(0, 1, 2), keepdims=True) * inv_count
        d = acc - mean
        var = jnp.sum(d * d, axis=(0, 1, 2), keepdims=True) * inv_count
        inv = lax.rsqrt(var + BN_EPS)

        gamma = g_ref[0, c0:c0 + CSUB].astype(jnp.float32)         # (CSUB,)
        beta = b_ref[0, c0:c0 + CSUB].astype(jnp.float32)
        scale = inv * gamma                                        # (1,1,1,CSUB)

        # y = (conv - mean) * rsqrt(var+eps) * gamma + beta
        o_ref[:, :, :, c0:c0 + CSUB] = (d * scale + beta).astype(o_ref.dtype)


def _num_tensorcores():
    """Best-effort TensorCores-per-chip: 2 on v4/v5p/v7x, 1 on v5e/v6e."""
    try:
        kind = (jax.devices()[0].device_kind or "").lower()
    except Exception:
        return 1
    if any(tag in kind for tag in ("v7", "tpu7", "v4", "v5p")):
        return 2
    return 1


def dwconv_bn_nhwc(x_nhwc, w_taps, gamma, beta, *, c_block=None):
    """NHWC entry point (use this directly if the model can stay NHWC)."""
    N, H, W, C = x_nhwc.shape
    assert w_taps.shape == (KH * KW, C)
    # TODO(synk): channel counts not divisible by 128 would need lane padding.
    assert C % CSUB == 0, "channel count must be a multiple of 128"

    if c_block is None:
        n_tc = _num_tensorcores()
        if n_tc > 1 and C % (n_tc * CSUB) == 0:
            # One block per TensorCore (v7x/v5p/v4): 'parallel' axis shards
            # the 2-step grid across cores.
            c_block = C // n_tc
        else:
            # Single-TC chips (v5e/v6e): the grid is a serial loop, so one
            # big block avoids repeating the scratch prologue.
            c_block = C
    assert C % c_block == 0 and c_block % CSUB == 0

    Hp, Wp = H + 2 * PAD, W + 2 * PAD
    grid = (C // c_block,)
    kernel = functools.partial(_dwconv_bn_kernel, H=H, W=W)

    return pl.pallas_call(
        kernel,
        out_shape=jax.ShapeDtypeStruct((N, H, W, C), x_nhwc.dtype),
        grid_spec=pltpu.PrefetchScalarGridSpec(
            num_scalar_prefetch=0,
            grid=grid,
            in_specs=[
                pl.BlockSpec((N, H, W, c_block), lambda c: (0, 0, 0, c)),
                pl.BlockSpec((KH * KW, c_block), lambda c: (0, c)),
                pl.BlockSpec((1, c_block), lambda c: (0, c)),
                pl.BlockSpec((1, c_block), lambda c: (0, c)),
            ],
            out_specs=pl.BlockSpec((N, H, W, c_block), lambda c: (0, 0, 0, c)),
            scratch_shapes=[pltpu.VMEM((N, Hp, Wp, c_block), jnp.float32)],
        ),
        compiler_params=pltpu.CompilerParams(
            dimension_semantics=("parallel",)),
    )(x_nhwc, w_taps, gamma.reshape(1, C), beta.reshape(1, C))


def dwconv_bn(x_nchw, weight, gamma, beta, *, c_block=None):
    """NCHW wrapper matching the PyTorch module interface.

    x_nchw: (N, C, H, W); weight: (C, 1, 5, 5) PyTorch depthwise layout.
    NOTE: the two transposes below are HBM round-trips; if the surrounding
    model can stay NHWC, call dwconv_bn_nhwc directly to avoid them.
    """
    N, C, H, W = x_nchw.shape
    assert weight.shape == (C, 1, KH, KW)

    x = jnp.transpose(x_nchw, (0, 2, 3, 1))                        # NCHW->NHWC
    w_taps = jnp.transpose(weight.reshape(C, KH * KW), (1, 0))     # (25, C)
    out = dwconv_bn_nhwc(x, w_taps, gamma, beta, c_block=c_block)
    return jnp.transpose(out, (0, 3, 1, 2))                        # back to NCHW


def _reference(x_nchw, weight, gamma, beta):
    """Pure-JAX reference: depthwise conv + training-mode batch norm."""
    C = x_nchw.shape[1]
    y = lax.conv_general_dilated(
        x_nchw.astype(jnp.float32), weight.astype(jnp.float32),
        window_strides=(1, 1), padding=((PAD, PAD), (PAD, PAD)),
        dimension_numbers=("NCHW", "OIHW", "NCHW"),
        feature_group_count=C)
    mean = jnp.mean(y, axis=(0, 2, 3), keepdims=True)
    var = jnp.mean((y - mean) ** 2, axis=(0, 2, 3), keepdims=True)
    yn = (y - mean) * lax.rsqrt(var + BN_EPS)
    return yn * gamma.reshape(1, C, 1, 1) + beta.reshape(1, C, 1, 1)


if __name__ == "__main__":
    # Small shapes consistent with the module (original: (1, 2304, 7, 7)).
    N, C, H, W = 2, 256, 7, 7

    key = jax.random.PRNGKey(0)
    kx, kw, kg, kb = jax.random.split(key, 4)
    x = jax.random.normal(kx, (N, C, H, W), dtype=jnp.float32)
    weight = jax.random.normal(kw, (C, 1, KH, KW), dtype=jnp.float32) * 0.1
    gamma = 1.0 + 0.1 * jax.random.normal(kg, (C,), dtype=jnp.float32)
    beta = 0.1 * jax.random.normal(kb, (C,), dtype=jnp.float32)

    ref = jax.block_until_ready(_reference(x, weight, gamma, beta))

    # Default (generation-aware) blocking.
    out = jax.block_until_ready(dwconv_bn(x, weight, gamma, beta))
    assert out.shape == (N, C, H, W)
    assert jnp.allclose(out, ref, rtol=1e-3, atol=1e-3), \
        f"max abs diff {jnp.max(jnp.abs(out - ref))}"

    # grid=(2,) path (2-TC style split).
    out2 = jax.block_until_ready(dwconv_bn(x, weight, gamma, beta, c_block=128))
    assert jnp.allclose(out2, ref, rtol=1e-3, atol=1e-3), \
        f"max abs diff {jnp.max(jnp.abs(out2 - ref))}"

    # grid=(1,) path exercising the in-kernel channel sub-block loop.
    out1 = jax.block_until_ready(dwconv_bn(x, weight, gamma, beta, c_block=C))
    assert jnp.allclose(out1, ref, rtol=1e-3, atol=1e-3), \
        f"max abs diff {jnp.max(jnp.abs(out1 - ref))}"

    # TODO(synk): BatchNorm2d running_mean/running_var momentum (0.01) buffer
    # updates are a training-time side effect and do not affect the forward
    # output; omitted.
    print("KERNEL_OK")
</pallas_src>

<mosaic_0001>
module attributes {stable_mosaic.version = 11 : i64} {
  func.func @_dwconv_bn_kernel(%arg0: i32, %arg1: memref<2x7x7x256xf32, #tpu.memory_space<vmem>>, %arg2: memref<25x256xf32, #tpu.memory_space<vmem>>, %arg3: memref<1x256xf32, #tpu.memory_space<vmem>>, %arg4: memref<1x256xf32, #tpu.memory_space<vmem>>, %arg5: memref<2x7x7x256xf32, #tpu.memory_space<vmem>>, %arg6: memref<2x11x11x256xf32, #tpu.memory_space<vmem>>) attributes {dimension_semantics = [#tpu.dimension_semantics<parallel>], iteration_bounds = array<i64: 1>, scalar_prefetch = 0 : i64, scratch_operands = 1 : i64, tpu.core_type = #tpu.core_type<tc>, window_params = [{transform_indices = @transform_0, window_bounds = array<i64: 2, 7, 7, 256>}, {transform_indices = @transform_1, window_bounds = array<i64: 25, 256>}, {transform_indices = @transform_2, window_bounds = array<i64: 1, 256>}, {transform_indices = @transform_3, window_bounds = array<i64: 1, 256>}, {transform_indices = @transform_4, window_bounds = array<i64: 2, 7, 7, 256>}]} {
    %cst = arith.constant 0.000000e+00 : f32
    %0 = vector.broadcast %cst : f32 to vector<2x2x11x256xf32>
    %cst_0 = arith.constant 0.000000e+00 : f32
    %1 = vector.broadcast %cst_0 : f32 to vector<2x7x2x256xf32>
    %c0 = arith.constant 0 : index
    %c0_1 = arith.constant 0 : index
    %c0_2 = arith.constant 0 : index
    %c0_3 = arith.constant 0 : index
    %2 = vector.load %arg6[%c0, %c0_1, %c0_2, %c0_3] : memref<2x11x11x256xf32, #tpu.memory_space<vmem>>, vector<2x2x11x256xf32>
    tpu.vector_store %arg6[%c0, %c0_1, %c0_2, %c0_3], %0 {strides = array<i32>} : memref<2x11x11x256xf32, #tpu.memory_space<vmem>>, vector<2x2x11x256xf32>,
    %c0_4 = arith.constant 0 : index
    %c9 = arith.constant 9 : index
    %c0_5 = arith.constant 0 : index
    %c0_6 = arith.constant 0 : index
    %3 = vector.load %arg6[%c0_4, %c9, %c0_5, %c0_6] : memref<2x11x11x256xf32, #tpu.memory_space<vmem>>, vector<2x2x11x256xf32>
    tpu.vector_store %arg6[%c0_4, %c9, %c0_5, %c0_6], %0 {strides = array<i32>} : memref<2x11x11x256xf32, #tpu.memory_space<vmem>>, vector<2x2x11x256xf32>,
    %c0_7 = arith.constant 0 : index
    %c2 = arith.constant 2 : index
    %c0_8 = arith.constant 0 : index
    %c0_9 = arith.constant 0 : index
    %4 = vector.load %arg6[%c0_7, %c2, %c0_8, %c0_9] : memref<2x11x11x256xf32, #tpu.memory_space<vmem>>, vector<2x7x2x256xf32>
    tpu.vector_store %arg6[%c0_7, %c2, %c0_8, %c0_9], %1 {strides = array<i32>} : memref<2x11x11x256xf32, #tpu.memory_space<vmem>>, vector<2x7x2x256xf32>,
    %c0_10 = arith.constant 0 : index
    %c2_11 = arith.constant 2 : index
    %c9_12 = arith.constant 9 : index
    %c0_13 = arith.constant 0 : index
    %5 = vector.load %arg6[%c0_10, %c2_11, %c9_12, %c0_13] : memref<2x11x11x256xf32, #tpu.memory_space<vmem>>, vector<2x7x2x256xf32>
    tpu.vector_store %arg6[%c0_10, %c2_11, %c9_12, %c0_13], %1 {strides = array<i32>} : memref<2x11x11x256xf32, #tpu.memory_space<vmem>>, vector<2x7x2x256xf32>,
    %c0_14 = arith.constant 0 : index
    %c0_15 = arith.constant 0 : index
    %c0_16 = arith.constant 0 : index
    %c0_17 = arith.constant 0 : index
    %6 = vector.load %arg1[%c0_14, %c0_15, %c0_16, %c0_17] : memref<2x7x7x256xf32, #tpu.memory_space<vmem>>, vector<2x7x7x256xf32>
    %c0_18 = arith.constant 0 : index
    %c2_19 = arith.constant 2 : index
    %c2_20 = arith.constant 2 : index
    %c0_21 = arith.constant 0 : index
    %7 = vector.load %arg6[%c0_18, %c2_19, %c2_20, %c0_21] : memref<2x11x11x256xf32, #tpu.memory_space<vmem>>, vector<2x7x7x256xf32>
    tpu.vector_store %arg6[%c0_18, %c2_19, %c2_20, %c0_21], %6 {strides = array<i32>} : memref<2x11x11x256xf32, #tpu.memory_space<vmem>>, vector<2x7x7x256xf32>,
    %c0_22 = arith.constant 0 : index
    %c0_23 = arith.constant 0 : index
    %8 = vector.load %arg2[%c0_22, %c0_23] : memref<25x256xf32, #tpu.memory_space<vmem>>, vector<25x128xf32>
    %cst_24 = arith.constant 0.000000e+00 : f32
    %9 = vector.broadcast %cst_24 : f32 to vector<2x7x7x128xf32>
    %cst_25 = arith.constant 0.000000e+00 : f32
    %10 = vector.broadcast %cst_25 : f32 to vector<2x7x7x128xf32>
    %c0_26 = arith.constant 0 : index
    %c0_27 = arith.constant 0 : index
    %c0_28 = arith.constant 0 : index
    %c0_29 = arith.constant 0 : index
    %11 = vector.load %arg6[%c0_26, %c0_27, %c0_28, %c0_29] : memref<2x11x11x256xf32, #tpu.memory_space<vmem>>, vector<2x11x7x128xf32>
    %12 = vector.extract_strided_slice %8 {offsets = [0, 0], sizes = [1, 128], strides = [1, 1]} : vector<25x128xf32> to vector<1x128xf32>
    %13 = vector.shape_cast %12 : vector<1x128xf32> to vector<128xf32>
    %14 = vector.extract_strided_slice %11 {offsets = [0, 0, 0, 0], sizes = [2, 7, 7, 128], strides = [1, 1, 1, 1]} : vector<2x11x7x128xf32> to vector<2x7x7x128xf32>
    %15 = vector.shape_cast %13 : vector<128xf32> to vector<1x1x1x128xf32>
    %16 = vector.broadcast %15 : vector<1x1x1x128xf32> to vector<2x7x7x128xf32>
    %17 = arith.mulf %14, %16 : vector<2x7x7x128xf32>
    %18 = arith.addf %9, %17 : vector<2x7x7x128xf32>
    %19 = vector.extract_strided_slice %8 {offsets = [5, 0], sizes = [1, 128], strides = [1, 1]} : vector<25x128xf32> to vector<1x128xf32>
    %20 = vector.shape_cast %19 : vector<1x128xf32> to vector<128xf32>
    %21 = vector.extract_strided_slice %11 {offsets = [0, 1, 0, 0], sizes = [2, 7, 7, 128], strides = [1, 1, 1, 1]} : vector<2x11x7x128xf32> to vector<2x7x7x128xf32>
    %22 = vector.shape_cast %20 : vector<128xf32> to vector<1x1x1x128xf32>
    %23 = vector.broadcast %22 : vector<1x1x1x128xf32> to vector<2x7x7x128xf32>
    %24 = arith.mulf %21, %23 : vector<2x7x7x128xf32>
    %25 = arith.addf %10, %24 : vector<2x7x7x128xf32>
    %26 = vector.extract_strided_slice %8 {offsets = [10, 0], sizes = [1, 128], strides = [1, 1]} : vector<25x128xf32> to vector<1x128xf32>
    %27 = vector.shape_cast %26 : vector<1x128xf32> to vector<128xf32>
    %28 = vector.extract_strided_slice %11 {offsets = [0, 2, 0, 0], sizes = [2, 7, 7, 128], strides = [1, 1, 1, 1]} : vector<2x11x7x128xf32> to vector<2x7x7x128xf32>
    %29 = vector.shape_cast %27 : vector<128xf32> to vector<1x1x1x128xf32>
    %30 = vector.broadcast %29 : vector<1x1x1x128xf32> to vector<2x7x7x128xf32>
    %31 = arith.mulf %28, %30 : vector<2x7x7x128xf32>
    %32 = arith.addf %18, %31 : vector<2x7x7x128xf32>
    %33 = vector.extract_strided_slice %8 {offsets = [15, 0], sizes = [1, 128], strides = [1, 1]} : vector<25x128xf32> to vector<1x128xf32>
    %34 = vector.shape_cast %33 : vector<1x128xf32> to vector<128xf32>
    %35 = vector.extract_strided_slice %11 {offsets = [0, 3, 0, 0], sizes = [2, 7, 7, 128], strides = [1, 1, 1, 1]} : vector<2x11x7x128xf32> to vector<2x7x7x128xf32>
    %36 = vector.shape_cast %34 : vector<128xf32> to vector<1x1x1x128xf32>
    %37 = vector.broadcast %36 : vector<1x1x1x128xf32> to vector<2x7x7x128xf32>
    %38 = arith.mulf %35, %37 : vector<2x7x7x128xf32>
    %39 = arith.addf %25, %38 : vector<2x7x7x128xf32>
    %40 = vector.extract_strided_slice %8 {offsets = [20, 0], sizes = [1, 128], strides = [1, 1]} : vector<25x128xf32> to vector<1x128xf32>
    %41 = vector.shape_cast %40 : vector<1x128xf32> to vector<128xf32>
    %42 = vector.extract_strided_slice %11 {offsets = [0, 4, 0, 0], sizes = [2, 7, 7, 128], strides = [1, 1, 1, 1]} : vector<2x11x7x128xf32> to vector<2x7x7x128xf32>
    %43 = vector.shape_cast %41 : vector<128xf32> to vector<1x1x1x128xf32>
    %44 = vector.broadcast %43 : vector<1x1x1x128xf32> to vector<2x7x7x128xf32>
    %45 = arith.mulf %42, %44 : vector<2x7x7x128xf32>
    %46 = arith.addf %32, %45 : vector<2x7x7x128xf32>
    %c0_30 = arith.constant 0 : index
    %c0_31 = arith.constant 0 : index
    %c1 = arith.constant 1 : index
    %c0_32 = arith.constant 0 : index
    %47 = vector.load %arg6[%c0_30, %c0_31, %c1, %c0_32] : memref<2x11x11x256xf32, #tpu.memory_space<vmem>>, vector<2x11x7x128xf32>
    %48 = vector.extract_strided_slice %8 {offsets = [1, 0], sizes = [1, 128], strides = [1, 1]} : vector<25x128xf32> to vector<1x128xf32>
    %49 = vector.shape_cast %48 : vector<1x128xf32> to vector<128xf32>
    %50 = vector.extract_strided_slice %47 {offsets = [0, 0, 0, 0], sizes = [2, 7, 7, 128], strides = [1, 1, 1, 1]} : vector<2x11x7x128xf32> to vector<2x7x7x128xf32>
    %51 = vector.shape_cast %49 : vector<128xf32> to vector<1x1x1x128xf32>
    %52 = vector.broadcast %51 : vector<1x1x1x128xf32> to vector<2x7x7x128xf32>
    %53 = arith.mulf %50, %52 : vector<2x7x7x128xf32>
    %54 = arith.addf %39, %53 : vector<2x7x7x128xf32>
    %55 = vector.extract_strided_slice %8 {offsets = [6, 0], sizes = [1, 128], strides = [1, 1]} : vector<25x128xf32> to vector<1x128xf32>
    %56 = vector.shape_cast %55 : vector<1x128xf32> to vector<128xf32>
    %57 = vector.extract_strided_slice %47 {offsets = [0, 1, 0, 0], sizes = [2, 7, 7, 128], strides = [1, 1, 1, 1]} : vector<2x11x7x128xf32> to vector<2x7x7x128xf32>
    %58 = vector.shape_cast %56 : vector<128xf32> to vector<1x1x1x128xf32>
    %59 = vector.broadcast %58 : vector<1x1x1x128xf32> to vector<2x7x7x128xf32>
    %60 = arith.mulf %57, %59 : vector<2x7x7x128xf32>
    %61 = arith.addf %46, %60 : vector<2x7x7x128xf32>
    %62 = vector.extract_strided_slice %8 {offsets = [11, 0], sizes = [1, 128], strides = [1, 1]} : vector<25x128xf32> to vector<1x128xf32>
    %63 = vector.shape_cast %62 : vector<1x128xf32> to vector<128xf32>
    %64 = vector.extract_strided_slice %47 {offsets = [0, 2, 0, 0], sizes = [2, 7, 7, 128], strides = [1, 1, 1, 1]} : vector<2x11x7x128xf32> to vector<2x7x7x128xf32>
    %65 = vector.shape_cast %63 : vector<128xf32> to vector<1x1x1x128xf32>
    %66 = vector.broadcast %65 : vector<1x1x1x128xf32> to vector<2x7x7x128xf32>
    %67 = arith.mulf %64, %66 : vector<2x7x7x128xf32>
    %68 = arith.addf %54, %67 : vector<2x7x7x128xf32>
    %69 = vector.extract_strided_slice %8 {offsets = [16, 0], sizes = [1, 128], strides = [1, 1]} : vector<25x128xf32> to vector<1x128xf32>
    %70 = vector.shape_cast %69 : vector<1x128xf32> to vector<128xf32>
    %71 = vector.extract_strided_slice %47 {offsets = [0, 3, 0, 0], sizes = [2, 7, 7, 128], strides = [1, 1, 1, 1]} : vector<2x11x7x128xf32> to vector<2x7x7x128xf32>
    %72 = vector.shape_cast %70 : vector<128xf32> to vector<1x1x1x128xf32>
    %73 = vector.broadcast %72 : vector<1x1x1x128xf32> to vector<2x7x7x128xf32>
    %74 = arith.mulf %71, %73 : vector<2x7x7x128xf32>
    %75 = arith.addf %61, %74 : vector<2x7x7x128xf32>
    %76 = vector.extract_strided_slice %8 {offsets = [21, 0], sizes = [1, 128], strides = [1, 1]} : vector<25x128xf32> to vector<1x128xf32>
    %77 = vector.shape_cast %76 : vector<1x128xf32> to vector<128xf32>
    %78 = vector.extract_strided_slice %47 {offsets = [0, 4, 0, 0], sizes = [2, 7, 7, 128], strides = [1, 1, 1, 1]} : vector<2x11x7x128xf32> to vector<2x7x7x128xf32>
    %79 = vector.shape_cast %77 : vector<128xf32> to vector<1x1x1x128xf32>
    %80 = vector.broadcast %79 : vector<1x1x1x128xf32> to vector<2x7x7x128xf32>
    %81 = arith.mulf %78, %80 : vector<2x7x7x128xf32>
    %82 = arith.addf %68, %81 : vector<2x7x7x128xf32>
    %c0_33 = arith.constant 0 : index
    %c0_34 = arith.constant 0 : index
    %c2_35 = arith.constant 2 : index
    %c0_36 = arith.constant 0 : index
    %83 = vector.load %arg6[%c0_33, %c0_34, %c2_35, %c0_36] : memref<2x11x11x256xf32, #tpu.memory_space<vmem>>, vector<2x11x7x128xf32>
    %84 = vector.extract_strided_slice %8 {offsets = [2, 0], sizes = [1, 128], strides = [1, 1]} : vector<25x128xf32> to vector<1x128xf32>
    %85 = vector.shape_cast %84 : vector<1x128xf32> to vector<128xf32>
    %86 = vector.extract_strided_slice %83 {offsets = [0, 0, 0, 0], sizes = [2, 7, 7, 128], strides = [1, 1, 1, 1]} : vector<2x11x7x128xf32> to vector<2x7x7x128xf32>
    %87 = vector.shape_cast %85 : vector<128xf32> to vector<1x1x1x128xf32>
    %88 = vector.broadcast %87 : vector<1x1x1x128xf32> to vector<2x7x7x128xf32>
    %89 = arith.mulf %86, %88 : vector<2x7x7x128xf32>
    %90 = arith.addf %75, %89 : vector<2x7x7x128xf32>
    %91 = vector.extract_strided_slice %8 {offsets = [7, 0], sizes = [1, 128], strides = [1, 1]} : vector<25x128xf32> to vector<1x128xf32>
    %92 = vector.shape_cast %91 : vector<1x128xf32> to vector<128xf32>
    %93 = vector.extract_strided_slice %83 {offsets = [0, 1, 0, 0], sizes = [2, 7, 7, 128], strides = [1, 1, 1, 1]} : vector<2x11x7x128xf32> to vector<2x7x7x128xf32>
    %94 = vector.shape_cast %92 : vector<128xf32> to vector<1x1x1x128xf32>
    %95 = vector.broadcast %94 : vector<1x1x1x128xf32> to vector<2x7x7x128xf32>
    %96 = arith.mulf %93, %95 : vector<2x7x7x128xf32>
    %97 = arith.addf %82, %96 : vector<2x7x7x128xf32>
    %98 = vector.extract_strided_slice %8 {offsets = [12, 0], sizes = [1, 128], strides = [1, 1]} : vector<25x128xf32> to vector<1x128xf32>
    %99 = vector.shape_cast %98 : vector<1x128xf32> to vector<128xf32>
    %100 = vector.extract_strided_slice %83 {offsets = [0, 2, 0, 0], sizes = [2, 7, 7, 128], strides = [1, 1, 1, 1]} : vector<2x11x7x128xf32> to vector<2x7x7x128xf32>
    %101 = vector.shape_cast %99 : vector<128xf32> to vector<1x1x1x128xf32>
    %102 = vector.broadcast %101 : vector<1x1x1x128xf32> to vector<2x7x7x128xf32>
    %103 = arith.mulf %100, %102 : vector<2x7x7x128xf32>
    %104 = arith.addf %90, %103 : vector<2x7x7x128xf32>
    %105 = vector.extract_strided_slice %8 {offsets = [17, 0], sizes = [1, 128], strides = [1, 1]} : vector<25x128xf32> to vector<1x128xf32>
    %106 = vector.shape_cast %105 : vector<1x128xf32> to vector<128xf32>
    %107 = vector.extract_strided_slice %83 {offsets = [0, 3, 0, 0], sizes = [2, 7, 7, 128], strides = [1, 1, 1, 1]} : vector<2x11x7x128xf32> to vector<2x7x7x128xf32>
    %108 = vector.shape_cast %106 : vector<128xf32> to vector<1x1x1x128xf32>
    %109 = vector.broadcast %108 : vector<1x1x1x128xf32> to vector<2x7x7x128xf32>
    %110 = arith.mulf %107, %109 : vector<2x7x7x128xf32>
    %111 = arith.addf %97, %110 : vector<2x7x7x128xf32>
    %112 = vector.extract_strided_slice %8 {offsets = [22, 0], sizes = [1, 128], strides = [1, 1]} : vector<25x128xf32> to vector<1x128xf32>
    %113 = vector.shape_cast %112 : vector<1x128xf32> to vector<128xf32>
    %114 = vector.extract_strided_slice %83 {offsets = [0, 4, 0, 0], sizes = [2, 7, 7, 128], strides = [1, 1, 1, 1]} : vector<2x11x7x128xf32> to vector<2x7x7x128xf32>
    %115 = vector.shape_cast %113 : vector<128xf32> to vector<1x1x1x128xf32>
    %116 = vector.broadcast %115 : vector<1x1x1x128xf32> to vector<2x7x7x128xf32>
    %117 = arith.mulf %114, %116 : vector<2x7x7x128xf32>
    %118 = arith.addf %104, %117 : vector<2x7x7x128xf32>
    %c0_37 = arith.constant 0 : index
    %c0_38 = arith.constant 0 : index
    %c3 = arith.constant 3 : index
    %c0_39 = arith.constant 0 : index
    %119 = vector.load %arg6[%c0_37, %c0_38, %c3, %c0_39] : memref<2x11x11x256xf32, #tpu.memory_space<vmem>>, vector<2x11x7x128xf32>
    %120 = vector.extract_strided_slice %8 {offsets = [3, 0], sizes = [1, 128], strides = [1, 1]} : vector<25x128xf32> to vector<1x128xf32>
    %121 = vector.shape_cast %120 : vector<1x128xf32> to vector<128xf32>
    %122 = vector.extract_strided_slice %119 {offsets = [0, 0, 0, 0], sizes = [2, 7, 7, 128], strides = [1, 1, 1, 1]} : vector<2x11x7x128xf32> to vector<2x7x7x128xf32>
    %123 = vector.shape_cast %121 : vector<128xf32> to vector<1x1x1x128xf32>
    %124 = vector.broadcast %123 : vector<1x1x1x128xf32> to vector<2x7x7x128xf32>
    %125 = arith.mulf %122, %124 : vector<2x7x7x128xf32>
    %126 = arith.addf %111, %125 : vector<2x7x7x128xf32>
    %127 = vector.extract_strided_slice %8 {offsets = [8, 0], sizes = [1, 128], strides = [1, 1]} : vector<25x128xf32> to vector<1x128xf32>
    %128 = vector.shape_cast %127 : vector<1x128xf32> to vector<128xf32>
    %129 = vector.extract_strided_slice %119 {offsets = [0, 1, 0, 0], sizes = [2, 7, 7, 128], strides = [1, 1, 1, 1]} : vector<2x11x7x128xf32> to vector<2x7x7x128xf32>
    %130 = vector.shape_cast %128 : vector<128xf32> to vector<1x1x1x128xf32>
    %131 = vector.broadcast %130 : vector<1x1x1x128xf32> to vector<2x7x7x128xf32>
    %132 = arith.mulf %129, %131 : vector<2x7x7x128xf32>
    %133 = arith.addf %118, %132 : vector<2x7x7x128xf32>
    %134 = vector.extract_strided_slice %8 {offsets = [13, 0], sizes = [1, 128], strides = [1, 1]} : vector<25x128xf32> to vector<1x128xf32>
    %135 = vector.shape_cast %134 : vector<1x128xf32> to vector<128xf32>
    %136 = vector.extract_strided_slice %119 {offsets = [0, 2, 0, 0], sizes = [2, 7, 7, 128], strides = [1, 1, 1, 1]} : vector<2x11x7x128xf32> to vector<2x7x7x128xf32>
    %137 = vector.shape_cast %135 : vector<128xf32> to vector<1x1x1x128xf32>
    %138 = vector.broadcast %137 : vector<1x1x1x128xf32> to vector<2x7x7x128xf32>
    %139 = arith.mulf %136, %138 : vector<2x7x7x128xf32>
    %140 = arith.addf %126, %139 : vector<2x7x7x128xf32>
    %141 = vector.extract_strided_slice %8 {offsets = [18, 0], sizes = [1, 128], strides = [1, 1]} : vector<25x128xf32> to vector<1x128xf32>
    %142 = vector.shape_cast %141 : vector<1x128xf32> to vector<128xf32>
    %143 = vector.extract_strided_slice %119 {offsets = [0, 3, 0, 0], sizes = [2, 7, 7, 128], strides = [1, 1, 1, 1]} : vector<2x11x7x128xf32> to vector<2x7x7x128xf32>
    %144 = vector.shape_cast %142 : vector<128xf32> to vector<1x1x1x128xf32>
    %145 = vector.broadcast %144 : vector<1x1x1x128xf32> to vector<2x7x7x128xf32>
    %146 = arith.mulf %143, %145 : vector<2x7x7x128xf32>
    %147 = arith.addf %133, %146 : vector<2x7x7x128xf32>
    %148 = vector.extract_strided_slice %8 {offsets = [23, 0], sizes = [1, 128], strides = [1, 1]} : vector<25x128xf32> to vector<1x128xf32>
    %149 = vector.shape_cast %148 : vector<1x128xf32> to vector<128xf32>
    %150 = vector.extract_strided_slice %119 {offsets = [0, 4, 0, 0], sizes = [2, 7, 7, 128], strides = [1, 1, 1, 1]} : vector<2x11x7x128xf32> to vector<2x7x7x128xf32>
    %151 = vector.shape_cast %149 : vector<128xf32> to vector<1x1x1x128xf32>
    %152 = vector.broadcast %151 : vector<1x1x1x128xf32> to vector<2x7x7x128xf32>
    %153 = arith.mulf %150, %152 : vector<2x7x7x128xf32>
    %154 = arith.addf %140, %153 : vector<2x7x7x128xf32>
    %c0_40 = arith.constant 0 : index
    %c0_41 = arith.constant 0 : index
    %c4 = arith.constant 4 : index
    %c0_42 = arith.constant 0 : index
    %155 = vector.load %arg6[%c0_40, %c0_41, %c4, %c0_42] : memref<2x11x11x256xf32, #tpu.memory_space<vmem>>, vector<2x11x7x128xf32>
    %156 = vector.extract_strided_slice %8 {offsets = [4, 0], sizes = [1, 128], strides = [1, 1]} : vector<25x128xf32> to vector<1x128xf32>
    %157 = vector.shape_cast %156 : vector<1x128xf32> to vector<128xf32>
    %158 = vector.extract_strided_slice %155 {offsets = [0, 0, 0, 0], sizes = [2, 7, 7, 128], strides = [1, 1, 1, 1]} : vector<2x11x7x128xf32> to vector<2x7x7x128xf32>
    %159 = vector.shape_cast %157 : vector<128xf32> to vector<1x1x1x128xf32>
    %160 = vector.broadcast %159 : vector<1x1x1x128xf32> to vector<2x7x7x128xf32>
    %161 = arith.mulf %158, %160 : vector<2x7x7x128xf32>
    %162 = arith.addf %147, %161 : vector<2x7x7x128xf32>
    %163 = vector.extract_strided_slice %8 {offsets = [9, 0], sizes = [1, 128], strides = [1, 1]} : vector<25x128xf32> to vector<1x128xf32>
    %164 = vector.shape_cast %163 : vector<1x128xf32> to vector<128xf32>
    %165 = vector.extract_strided_slice %155 {offsets = [0, 1, 0, 0], sizes = [2, 7, 7, 128], strides = [1, 1, 1, 1]} : vector<2x11x7x128xf32> to vector<2x7x7x128xf32>
    %166 = vector.shape_cast %164 : vector<128xf32> to vector<1x1x1x128xf32>
    %167 = vector.broadcast %166 : vector<1x1x1x128xf32> to vector<2x7x7x128xf32>
    %168 = arith.mulf %165, %167 : vector<2x7x7x128xf32>
    %169 = arith.addf %154, %168 : vector<2x7x7x128xf32>
    %170 = vector.extract_strided_slice %8 {offsets = [14, 0], sizes = [1, 128], strides = [1, 1]} : vector<25x128xf32> to vector<1x128xf32>
    %171 = vector.shape_cast %170 : vector<1x128xf32> to vector<128xf32>
    %172 = vector.extract_strided_slice %155 {offsets = [0, 2, 0, 0], sizes = [2, 7, 7, 128], strides = [1, 1, 1, 1]} : vector<2x11x7x128xf32> to vector<2x7x7x128xf32>
    %173 = vector.shape_cast %171 : vector<128xf32> to vector<1x1x1x128xf32>
    %174 = vector.broadcast %173 : vector<1x1x1x128xf32> to vector<2x7x7x128xf32>
    %175 = arith.mulf %172, %174 : vector<2x7x7x128xf32>
    %176 = arith.addf %162, %175 : vector<2x7x7x128xf32>
    %177 = vector.extract_strided_slice %8 {offsets = [19, 0], sizes = [1, 128], strides = [1, 1]} : vector<25x128xf32> to vector<1x128xf32>
    %178 = vector.shape_cast %177 : vector<1x128xf32> to vector<128xf32>
    %179 = vector.extract_strided_slice %155 {offsets = [0, 3, 0, 0], sizes = [2, 7, 7, 128], strides = [1, 1, 1, 1]} : vector<2x11x7x128xf32> to vector<2x7x7x128xf32>
    %180 = vector.shape_cast %178 : vector<128xf32> to vector<1x1x1x128xf32>
    %181 = vector.broadcast %180 : vector<1x1x1x128xf32> to vector<2x7x7x128xf32>
    %182 = arith.mulf %179, %181 : vector<2x7x7x128xf32>
    %183 = arith.addf %169, %182 : vector<2x7x7x128xf32>
    %184 = vector.extract_strided_slice %8 {offsets = [24, 0], sizes = [1, 128], strides = [1, 1]} : vector<25x128xf32> to vector<1x128xf32>
    %185 = vector.shape_cast %184 : vector<1x128xf32> to vector<128xf32>
    %186 = vector.extract_strided_slice %155 {offsets = [0, 4, 0, 0], sizes = [2, 7, 7, 128], strides = [1, 1, 1, 1]} : vector<2x11x7x128xf32> to vector<2x7x7x128xf32>
    %187 = vector.shape_cast %185 : vector<128xf32> to vector<1x1x1x128xf32>
    %188 = vector.broadcast %187 : vector<1x1x1x128xf32> to vector<2x7x7x128xf32>
    %189 = arith.mulf %186, %188 : vector<2x7x7x128xf32>
    %190 = arith.addf %176, %189 : vector<2x7x7x128xf32>
    %191 = arith.addf %190, %183 : vector<2x7x7x128xf32>
    %cst_43 = arith.constant dense<0.000000e+00> : vector<128xf32>
    %192 = vector.multi_reduction <add>, %191, %cst_43 [0, 1, 2] : vector<2x7x7x128xf32> to vector<128xf32>
    %193 = vector.shape_cast %192 : vector<128xf32> to vector<1x1x1x128xf32>
    %cst_44 = arith.constant 0.0102040814 : f32
    %194 = vector.broadcast %cst_44 : f32 to vector<1x1x1x128xf32>
    %195 = arith.mulf %193, %194 : vector<1x1x1x128xf32>
    %196 = vector.broadcast %195 : vector<1x1x1x128xf32> to vector<2x7x7x128xf32>
    %197 = arith.subf %191, %196 : vector<2x7x7x128xf32>
    %198 = arith.mulf %197, %197 : vector<2x7x7x128xf32>
    %cst_45 = arith.constant dense<0.000000e+00> : vector<128xf32>
    %199 = vector.multi_reduction <add>, %198, %cst_45 [0, 1, 2] : vector<2x7x7x128xf32> to vector<128xf32>
    %200 = vector.shape_cast %199 : vector<128xf32> to vector<1x1x1x128xf32>
    %cst_46 = arith.constant 0.0102040814 : f32
    %201 = vector.broadcast %cst_46 : f32 to vector<1x1x1x128xf32>
    %202 = arith.mulf %200, %201 : vector<1x1x1x128xf32>
    %cst_47 = arith.constant 1.000000e-03 : f32
    %203 = vector.broadcast %cst_47 : f32 to vector<1x1x1x128xf32>
    %204 = arith.addf %202, %203 : vector<1x1x1x128xf32>
    %205 = math.rsqrt %204 : vector<1x1x1x128xf32>
    %c0_48 = arith.constant 0 : index
    %c0_49 = arith.constant 0 : index
    %206 = vector.load %arg3[%c0_48, %c0_49] : memref<1x256xf32, #tpu.memory_space<vmem>>, vector<1x128xf32>
    %207 = vector.shape_cast %206 : vector<1x128xf32> to vector<128xf32>
    %c0_50 = arith.constant 0 : index
    %c0_51 = arith.constant 0 : index
    %208 = vector.load %arg4[%c0_50, %c0_51] : memref<1x256xf32, #tpu.memory_space<vmem>>, vector<1x128xf32>
    %209 = vector.shape_cast %208 : vector<1x128xf32> to vector<128xf32>
    %210 = vector.shape_cast %207 : vector<128xf32> to vector<1x1x1x128xf32>
    %211 = arith.mulf %205, %210 : vector<1x1x1x128xf32>
    %212 = vector.broadcast %211 : vector<1x1x1x128xf32> to vector<2x7x7x128xf32>
    %213 = arith.mulf %197, %212 : vector<2x7x7x128xf32>
    %214 = vector.shape_cast %209 : vector<128xf32> to vector<1x1x1x128xf32>
    %215 = vector.broadcast %214 : vector<1x1x1x128xf32> to vector<2x7x7x128xf32>
    %216 = arith.addf %213, %215 : vector<2x7x7x128xf32>
    %c0_52 = arith.constant 0 : index
    %c0_53 = arith.constant 0 : index
    %c0_54 = arith.constant 0 : index
    %c0_55 = arith.constant 0 : index
    %217 = vector.load %arg5[%c0_52, %c0_53, %c0_54, %c0_55] : memref<2x7x7x256xf32, #tpu.memory_space<vmem>>, vector<2x7x7x128xf32>
    tpu.vector_store %arg5[%c0_52, %c0_53, %c0_54, %c0_55], %216 {strides = array<i32>} : memref<2x7x7x256xf32, #tpu.memory_space<vmem>>, vector<2x7x7x128xf32>,
    %c0_56 = arith.constant 0 : index
    %c128 = arith.constant 128 : index
    %218 = vector.load %arg2[%c0_56, %c128] : memref<25x256xf32, #tpu.memory_space<vmem>>, vector<25x128xf32>
    %cst_57 = arith.constant 0.000000e+00 : f32
    %219 = vector.broadcast %cst_57 : f32 to vector<2x7x7x128xf32>
    %cst_58 = arith.constant 0.000000e+00 : f32
    %220 = vector.broadcast %cst_58 : f32 to vector<2x7x7x128xf32>
    %c0_59 = arith.constant 0 : index
    %c0_60 = arith.constant 0 : index
    %c0_61 = arith.constant 0 : index
    %c128_62 = arith.constant 128 : index
    %221 = vector.load %arg6[%c0_59, %c0_60, %c0_61, %c128_62] : memref<2x11x11x256xf32, #tpu.memory_space<vmem>>, vector<2x11x7x128xf32>
    %222 = vector.extract_strided_slice %218 {offsets = [0, 0], sizes = [1, 128], strides = [1, 1]} : vector<25x128xf32> to vector<1x128xf32>
    %223 = vector.shape_cast %222 : vector<1x128xf32> to vector<128xf32>
    %224 = vector.extract_strided_slice %221 {offsets = [0, 0, 0, 0], sizes = [2, 7, 7, 128], strides = [1, 1, 1, 1]} : vector<2x11x7x128xf32> to vector<2x7x7x128xf32>
    %225 = vector.shape_cast %223 : vector<128xf32> to vector<1x1x1x128xf32>
    %226 = vector.broadcast %225 : vector<1x1x1x128xf32> to vector<2x7x7x128xf32>
    %227 = arith.mulf %224, %226 : vector<2x7x7x128xf32>
    %228 = arith.addf %219, %227 : vector<2x7x7x128xf32>
    %229 = vector.extract_strided_slice %218 {offsets = [5, 0], sizes = [1, 128], strides = [1, 1]} : vector<25x128xf32> to vector<1x128xf32>
    %230 = vector.shape_cast %229 : vector<1x128xf32> to vector<128xf32>
    %231 = vector.extract_strided_slice %221 {offsets = [0, 1, 0, 0], sizes = [2, 7, 7, 128], strides = [1, 1, 1, 1]} : vector<2x11x7x128xf32> to vector<2x7x7x128xf32>
    %232 = vector.shape_cast %230 : vector<128xf32> to vector<1x1x1x128xf32>
    %233 = vector.broadcast %232 : vector<1x1x1x128xf32> to vector<2x7x7x128xf32>
    %234 = arith.mulf %231, %233 : vector<2x7x7x128xf32>
    %235 = arith.addf %220, %234 : vector<2x7x7x128xf32>
    %236 = vector.extract_strided_slice %218 {offsets = [10, 0], sizes = [1, 128], strides = [1, 1]} : vector<25x128xf32> to vector<1x128xf32>
    %237 = vector.shape_cast %236 : vector<1x128xf32> to vector<128xf32>
    %238 = vector.extract_strided_slice %221 {offsets = [0, 2, 0, 0], sizes = [2, 7, 7, 128], strides = [1, 1, 1, 1]} : vector<2x11x7x128xf32> to vector<2x7x7x128xf32>
    %239 = vector.shape_cast %237 : vector<128xf32> to vector<1x1x1x128xf32>
    %240 = vector.broadcast %239 : vector<1x1x1x128xf32> to vector<2x7x7x128xf32>
    %241 = arith.mulf %238, %240 : vector<2x7x7x128xf32>
    %242 = arith.addf %228, %241 : vector<2x7x7x128xf32>
    %243 = vector.extract_strided_slice %218 {offsets = [15, 0], sizes = [1, 128], strides = [1, 1]} : vector<25x128xf32> to vector<1x128xf32>
    %244 = vector.shape_cast %243 : vector<1x128xf32> to vector<128xf32>
    %245 = vector.extract_strided_slice %221 {offsets = [0, 3, 0, 0], sizes = [2, 7, 7, 128], strides = [1, 1, 1, 1]} : vector<2x11x7x128xf32> to vector<2x7x7x128xf32>
    %246 = vector.shape_cast %244 : vector<128xf32> to vector<1x1x1x128xf32>
    %247 = vector.broadcast %246 : vector<1x1x1x128xf32> to vector<2x7x7x128xf32>
    %248 = arith.mulf %245, %247 : vector<2x7x7x128xf32>
    %249 = arith.addf %235, %248 : vector<2x7x7x128xf32>
    %250 = vector.extract_strided_slice %218 {offsets = [20, 0], sizes = [1, 128], strides = [1, 1]} : vector<25x128xf32> to vector<1x128xf32>
    %251 = vector.shape_cast %250 : vector<1x128xf32> to vector<128xf32>
    %252 = vector.extract_strided_slice %221 {offsets = [0, 4, 0, 0], sizes = [2, 7, 7, 128], strides = [1, 1, 1, 1]} : vector<2x11x7x128xf32> to vector<2x7x7x128xf32>
    %253 = vector.shape_cast %251 : vector<128xf32> to vector<1x1x1x128xf32>
    %254 = vector.broadcast %253 : vector<1x1x1x128xf32> to vector<2x7x7x128xf32>
    %255 = arith.mulf %252, %254 : vector<2x7x7x128xf32>
    %256 = arith.addf %242, %255 : vector<2x7x7x128xf32>
    %c0_63 = arith.constant 0 : index
    %c0_64 = arith.constant 0 : index
    %c1_65 = arith.constant 1 : index
    %c128_66 = arith.constant 128 : index
    %257 = vector.load %arg6[%c0_63, %c0_64, %c1_65, %c128_66] : memref<2x11x11x256xf32, #tpu.memory_space<vmem>>, vector<2x11x7x128xf32>
    %258 = vector.extract_strided_slice %218 {offsets = [1, 0], sizes = [1, 128], strides = [1, 1]} : vector<25x128xf32> to vector<1x128xf32>
    %259 = vector.shape_cast %258 : vector<1x128xf32> to vector<128xf32>
    %260 = vector.extract_strided_slice %257 {offsets = [0, 0, 0, 0], sizes = [2, 7, 7, 128], strides = [1, 1, 1, 1]} : vector<2x11x7x128xf32> to vector<2x7x7x128xf32>
    %261 = vector.shape_cast %259 : vector<128xf32> to vector<1x1x1x128xf32>
    %262 = vector.broadcast %261 : vector<1x1x1x128xf32> to vector<2x7x7x128xf32>
    %263 = arith.mulf %260, %262 : vector<2x7x7x128xf32>
    %264 = arith.addf %249, %263 : vector<2x7x7x128xf32>
    %265 = vector.extract_strided_slice %218 {offsets = [6, 0], sizes = [1, 128], strides = [1, 1]} : vector<25x128xf32> to vector<1x128xf32>
    %266 = vector.shape_cast %265 : vector<1x128xf32> to vector<128xf32>
    %267 = vector.extract_strided_slice %257 {offsets = [0, 1, 0, 0], sizes = [2, 7, 7, 128], strides = [1, 1, 1, 1]} : vector<2x11x7x128xf32> to vector<2x7x7x128xf32>
    %268 = vector.shape_cast %266 : vector<128xf32> to vector<1x1x1x128xf32>
    %269 = vector.broadcast %268 : vector<1x1x1x128xf32> to vector<2x7x7x128xf32>
    %270 = arith.mulf %267, %269 : vector<2x7x7x128xf32>
    %271 = arith.addf %256, %270 : vector<2x7x7x128xf32>
    %272 = vector.extract_strided_slice %218 {offsets = [11, 0], sizes = [1, 128], strides = [1, 1]} : vector<25x128xf32> to vector<1x128xf32>
    %273 = vector.shape_cast %272 : vector<1x128xf32> to vector<128xf32>
    %274 = vector.extract_strided_slice %257 {offsets = [0, 2, 0, 0], sizes = [2, 7, 7, 128], strides = [1, 1, 1, 1]} : vector<2x11x7x128xf32> to vector<2x7x7x128xf32>
    %275 = vector.shape_cast %273 : vector<128xf32> to vector<1x1x1x128xf32>
    %276 = vector.broadcast %275 : vector<1x1x1x128xf32> to vector<2x7x7x128xf32>
    %277 = arith.mulf %274, %276 : vector<2x7x7x128xf32>
    %278 = arith.addf %264, %277 : vector<2x7x7x128xf32>
    %279 = vector.extract_strided_slice %218 {offsets = [16, 0], sizes = [1, 128], strides = [1, 1]} : vector<25x128xf32> to vector<1x128xf32>
    %280 = vector.shape_cast %279 : vector<1x128xf32> to vector<128xf32>
    %281 = vector.extract_strided_slice %257 {offsets = [0, 3, 0, 0], sizes = [2, 7, 7, 128], strides = [1, 1, 1, 1]} : vector<2x11x7x128xf32> to vector<2x7x7x128xf32>
    %282 = vector.shape_cast %280 : vector<128xf32> to vector<1x1x1x128xf32>
    %283 = vector.broadcast %282 : vector<1x1x1x128xf32> to vector<2x7x7x128xf32>
    %284 = arith.mulf %281, %283 : vector<2x7x7x128xf32>
    %285 = arith.addf %271, %284 : vector<2x7x7x128xf32>
    %286 = vector.extract_strided_slice %218 {offsets = [21, 0], sizes = [1, 128], strides = [1, 1]} : vector<25x128xf32> to vector<1x128xf32>
    %287 = vector.shape_cast %286 : vector<1x128xf32> to vector<128xf32>
    %288 = vector.extract_strided_slice %257 {offsets = [0, 4, 0, 0], sizes = [2, 7, 7, 128], strides = [1, 1, 1, 1]} : vector<2x11x7x128xf32> to vector<2x7x7x128xf32>
    %289 = vector.shape_cast %287 : vector<128xf32> to vector<1x1x1x128xf32>
    %290 = vector.broadcast %289 : vector<1x1x1x128xf32> to vector<2x7x7x128xf32>
    %291 = arith.mulf %288, %290 : vector<2x7x7x128xf32>
    %292 = arith.addf %278, %291 : vector<2x7x7x128xf32>
    %c0_67 = arith.constant 0 : index
    %c0_68 = arith.constant 0 : index
    %c2_69 = arith.constant 2 : index
    %c128_70 = arith.constant 128 : index
    %293 = vector.load %arg6[%c0_67, %c0_68, %c2_69, %c128_70] : memref<2x11x11x256xf32, #tpu.memory_space<vmem>>, vector<2x11x7x128xf32>
    %294 = vector.extract_strided_slice %218 {offsets = [2, 0], sizes = [1, 128], strides = [1, 1]} : vector<25x128xf32> to vector<1x128xf32>
    %295 = vector.shape_cast %294 : vector<1x128xf32> to vector<128xf32>
    %296 = vector.extract_strided_slice %293 {offsets = [0, 0, 0, 0], sizes = [2, 7, 7, 128], strides = [1, 1, 1, 1]} : vector<2x11x7x128xf32> to vector<2x7x7x128xf32>
    %297 = vector.shape_cast %295 : vector<128xf32> to vector<1x1x1x128xf32>
    %298 = vector.broadcast %297 : vector<1x1x1x128xf32> to vector<2x7x7x128xf32>
    %299 = arith.mulf %296, %298 : vector<2x7x7x128xf32>
    %300 = arith.addf %285, %299 : vector<2x7x7x128xf32>
    %301 = vector.extract_strided_slice %218 {offsets = [7, 0], sizes = [1, 128], strides = [1, 1]} : vector<25x128xf32> to vector<1x128xf32>
    %302 = vector.shape_cast %301 : vector<1x128xf32> to vector<128xf32>
    %303 = vector.extract_strided_slice %293 {offsets = [0, 1, 0, 0], sizes = [2, 7, 7, 128], strides = [1, 1, 1, 1]} : vector<2x11x7x128xf32> to vector<2x7x7x128xf32>
    %304 = vector.shape_cast %302 : vector<128xf32> to vector<1x1x1x128xf32>
    %305 = vector.broadcast %304 : vector<1x1x1x128xf32> to vector<2x7x7x128xf32>
    %306 = arith.mulf %303, %305 : vector<2x7x7x128xf32>
    %307 = arith.addf %292, %306 : vector<2x7x7x128xf32>
    %308 = vector.extract_strided_slice %218 {offsets = [12, 0], sizes = [1, 128], strides = [1, 1]} : vector<25x128xf32> to vector<1x128xf32>
    %309 = vector.shape_cast %308 : vector<1x128xf32> to vector<128xf32>
    %310 = vector.extract_strided_slice %293 {offsets = [0, 2, 0, 0], sizes = [2, 7, 7, 128], strides = [1, 1, 1, 1]} : vector<2x11x7x128xf32> to vector<2x7x7x128xf32>
    %311 = vector.shape_cast %309 : vector<128xf32> to vector<1x1x1x128xf32>
    %312 = vector.broadcast %311 : vector<1x1x1x128xf32> to vector<2x7x7x128xf32>
    %313 = arith.mulf %310, %312 : vector<2x7x7x128xf32>
    %314 = arith.addf %300, %313 : vector<2x7x7x128xf32>
    %315 = vector.extract_strided_slice %218 {offsets = [17, 0], sizes = [1, 128], strides = [1, 1]} : vector<25x128xf32> to vector<1x128xf32>
    %316 = vector.shape_cast %315 : vector<1x128xf32> to vector<128xf32>
    %317 = vector.extract_strided_slice %293 {offsets = [0, 3, 0, 0], sizes = [2, 7, 7, 128], strides = [1, 1, 1, 1]} : vector<2x11x7x128xf32> to vector<2x7x7x128xf32>
    %318 = vector.shape_cast %316 : vector<128xf32> to vector<1x1x1x128xf32>
    %319 = vector.broadcast %318 : vector<1x1x1x128xf32> to vector<2x7x7x128xf32>
    %320 = arith.mulf %317, %319 : vector<2x7x7x128xf32>
    %321 = arith.addf %307, %320 : vector<2x7x7x128xf32>
    %322 = vector.extract_strided_slice %218 {offsets = [22, 0], sizes = [1, 128], strides = [1, 1]} : vector<25x128xf32> to vector<1x128xf32>
    %323 = vector.shape_cast %322 : vector<1x128xf32> to vector<128xf32>
    %324 = vector.extract_strided_slice %293 {offsets = [0, 4, 0, 0], sizes = [2, 7, 7, 128], strides = [1, 1, 1, 1]} : vector<2x11x7x128xf32> to vector<2x7x7x128xf32>
    %325 = vector.shape_cast %323 : vector<128xf32> to vector<1x1x1x128xf32>
    %326 = vector.broadcast %325 : vector<1x1x1x128xf32> to vector<2x7x7x128xf32>
    %327 = arith.mulf %324, %326 : vector<2x7x7x128xf32>
    %328 = arith.addf %314, %327 : vector<2x7x7x128xf32>
    %c0_71 = arith.constant 0 : index
    %c0_72 = arith.constant 0 : index
    %c3_73 = arith.constant 3 : index
    %c128_74 = arith.constant 128 : index
    %329 = vector.load %arg6[%c0_71, %c0_72, %c3_73, %c128_74] : memref<2x11x11x256xf32, #tpu.memory_space<vmem>>, vector<2x11x7x128xf32>
    %330 = vector.extract_strided_slice %218 {offsets = [3, 0], sizes = [1, 128], strides = [1, 1]} : vector<25x128xf32> to vector<1x128xf32>
    %331 = vector.shape_cast %330 : vector<1x128xf32> to vector<128xf32>
    %332 = vector.extract_strided_slice %329 {offsets = [0, 0, 0, 0], sizes = [2, 7, 7, 128], strides = [1, 1, 1, 1]} : vector<2x11x7x128xf32> to vector<2x7x7x128xf32>
    %333 = vector.shape_cast %331 : vector<128xf32> to vector<1x1x1x128xf32>
    %334 = vector.broadcast %333 : vector<1x1x1x128xf32> to vector<2x7x7x128xf32>
    %335 = arith.mulf %332, %334 : vector<2x7x7x128xf32>
    %336 = arith.addf %321, %335 : vector<2x7x7x128xf32>
    %337 = vector.extract_strided_slice %218 {offsets = [8, 0], sizes = [1, 128], strides = [1, 1]} : vector<25x128xf32> to vector<1x128xf32>
    %338 = vector.shape_cast %337 : vector<1x128xf32> to vector<128xf32>
    %339 = vector.extract_strided_slice %329 {offsets = [0, 1, 0, 0], sizes = [2, 7, 7, 128], strides = [1, 1, 1, 1]} : vector<2x11x7x128xf32> to vector<2x7x7x128xf32>
    %340 = vector.shape_cast %338 : vector<128xf32> to vector<1x1x1x128xf32>
    %341 = vector.broadcast %340 : vector<1x1x1x128xf32> to vector<2x7x7x128xf32>
    %342 = arith.mulf %339, %341 : vector<2x7x7x128xf32>
    %343 = arith.addf %328, %342 : vector<2x7x7x128xf32>
    %344 = vector.extract_strided_slice %218 {offsets = [13, 0], sizes = [1, 128], strides = [1, 1]} : vector<25x128xf32> to vector<1x128xf32>
    %345 = vector.shape_cast %344 : vector<1x128xf32> to vector<128xf32>
    %346 = vector.extract_strided_slice %329 {offsets = [0, 2, 0, 0], sizes = [2, 7, 7, 128], strides = [1, 1, 1, 1]} : vector<2x11x7x128xf32> to vector<2x7x7x128xf32>
    %347 = vector.shape_cast %345 : vector<128xf32> to vector<1x1x1x128xf32>
    %348 = vector.broadcast %347 : vector<1x1x1x128xf32> to vector<2x7x7x128xf32>
    %349 = arith.mulf %346, %348 : vector<2x7x7x128xf32>
    %350 = arith.addf %336, %349 : vector<2x7x7x128xf32>
    %351 = vector.extract_strided_slice %218 {offsets = [18, 0], sizes = [1, 128], strides = [1, 1]} : vector<25x128xf32> to vector<1x128xf32>
    %352 = vector.shape_cast %351 : vector<1x128xf32> to vector<128xf32>
    %353 = vector.extract_strided_slice %329 {offsets = [0, 3, 0, 0], sizes = [2, 7, 7, 128], strides = [1, 1, 1, 1]} : vector<2x11x7x128xf32> to vector<2x7x7x128xf32>
    %354 = vector.shape_cast %352 : vector<128xf32> to vector<1x1x1x128xf32>
    %355 = vector.broadcast %354 : vector<1x1x1x128xf32> to vector<2x7x7x128xf32>
    %356 = arith.mulf %353, %355 : vector<2x7x7x128xf32>
    %357 = arith.addf %343, %356 : vector<2x7x7x128xf32>
    %358 = vector.extract_strided_slice %218 {offsets = [23, 0], sizes = [1, 128], strides = [1, 1]} : vector<25x128xf32> to vector<1x128xf32>
    %359 = vector.shape_cast %358 : vector<1x128xf32> to vector<128xf32>
    %360 = vector.extract_strided_slice %329 {offsets = [0, 4, 0, 0], sizes = [2, 7, 7, 128], strides = [1, 1, 1, 1]} : vector<2x11x7x128xf32> to vector<2x7x7x128xf32>
    %361 = vector.shape_cast %359 : vector<128xf32> to vector<1x1x1x128xf32>
    %362 = vector.broadcast %361 : vector<1x1x1x128xf32> to vector<2x7x7x128xf32>
    %363 = arith.mulf %360, %362 : vector<2x7x7x128xf32>
    %364 = arith.addf %350, %363 : vector<2x7x7x128xf32>
    %c0_75 = arith.constant 0 : index
    %c0_76 = arith.constant 0 : index
    %c4_77 = arith.constant 4 : index
    %c128_78 = arith.constant 128 : index
    %365 = vector.load %arg6[%c0_75, %c0_76, %c4_77, %c128_78] : memref<2x11x11x256xf32, #tpu.memory_space<vmem>>, vector<2x11x7x128xf32>
    %366 = vector.extract_strided_slice %218 {offsets = [4, 0], sizes = [1, 128], strides = [1, 1]} : vector<25x128xf32> to vector<1x128xf32>
    %367 = vector.shape_cast %366 : vector<1x128xf32> to vector<128xf32>
    %368 = vector.extract_strided_slice %365 {offsets = [0, 0, 0, 0], sizes = [2, 7, 7, 128], strides = [1, 1, 1, 1]} : vector<2x11x7x128xf32> to vector<2x7x7x128xf32>
    %369 = vector.shape_cast %367 : vector<128xf32> to vector<1x1x1x128xf32>
    %370 = vector.broadcast %369 : vector<1x1x1x128xf32> to vector<2x7x7x128xf32>
    %371 = arith.mulf %368, %370 : vector<2x7x7x128xf32>
    %372 = arith.addf %357, %371 : vector<2x7x7x128xf32>
    %373 = vector.extract_strided_slice %218 {offsets = [9, 0], sizes = [1, 128], strides = [1, 1]} : vector<25x128xf32> to vector<1x128xf32>
    %374 = vector.shape_cast %373 : vector<1x128xf32> to vector<128xf32>
    %375 = vector.extract_strided_slice %365 {offsets = [0, 1, 0, 0], sizes = [2, 7, 7, 128], strides = [1, 1, 1, 1]} : vector<2x11x7x128xf32> to vector<2x7x7x128xf32>
    %376 = vector.shape_cast %374 : vector<128xf32> to vector<1x1x1x128xf32>
    %377 = vector.broadcast %376 : vector<1x1x1x128xf32> to vector<2x7x7x128xf32>
    %378 = arith.mulf %375, %377 : vector<2x7x7x128xf32>
    %379 = arith.addf %364, %378 : vector<2x7x7x128xf32>
    %380 = vector.extract_strided_slice %218 {offsets = [14, 0], sizes = [1, 128], strides = [1, 1]} : vector<25x128xf32> to vector<1x128xf32>
    %381 = vector.shape_cast %380 : vector<1x128xf32> to vector<128xf32>
    %382 = vector.extract_strided_slice %365 {offsets = [0, 2, 0, 0], sizes = [2, 7, 7, 128], strides = [1, 1, 1, 1]} : vector<2x11x7x128xf32> to vector<2x7x7x128xf32>
    %383 = vector.shape_cast %381 : vector<128xf32> to vector<1x1x1x128xf32>
    %384 = vector.broadcast %383 : vector<1x1x1x128xf32> to vector<2x7x7x128xf32>
    %385 = arith.mulf %382, %384 : vector<2x7x7x128xf32>
    %386 = arith.addf %372, %385 : vector<2x7x7x128xf32>
    %387 = vector.extract_strided_slice %218 {offsets = [19, 0], sizes = [1, 128], strides = [1, 1]} : vector<25x128xf32> to vector<1x128xf32>
    %388 = vector.shape_cast %387 : vector<1x128xf32> to vector<128xf32>
    %389 = vector.extract_strided_slice %365 {offsets = [0, 3, 0, 0], sizes = [2, 7, 7, 128], strides = [1, 1, 1, 1]} : vector<2x11x7x128xf32> to vector<2x7x7x128xf32>
    %390 = vector.shape_cast %388 : vector<128xf32> to vector<1x1x1x128xf32>
    %391 = vector.broadcast %390 : vector<1x1x1x128xf32> to vector<2x7x7x128xf32>
    %392 = arith.mulf %389, %391 : vector<2x7x7x128xf32>
    %393 = arith.addf %379, %392 : vector<2x7x7x128xf32>
    %394 = vector.extract_strided_slice %218 {offsets = [24, 0], sizes = [1, 128], strides = [1, 1]} : vector<25x128xf32> to vector<1x128xf32>
    %395 = vector.shape_cast %394 : vector<1x128xf32> to vector<128xf32>
    %396 = vector.extract_strided_slice %365 {offsets = [0, 4, 0, 0], sizes = [2, 7, 7, 128], strides = [1, 1, 1, 1]} : vector<2x11x7x128xf32> to vector<2x7x7x128xf32>
    %397 = vector.shape_cast %395 : vector<128xf32> to vector<1x1x1x128xf32>
    %398 = vector.broadcast %397 : vector<1x1x1x128xf32> to vector<2x7x7x128xf32>
    %399 = arith.mulf %396, %398 : vector<2x7x7x128xf32>
    %400 = arith.addf %386, %399 : vector<2x7x7x128xf32>
    %401 = arith.addf %400, %393 : vector<2x7x7x128xf32>
    %cst_79 = arith.constant dense<0.000000e+00> : vector<128xf32>
    %402 = vector.multi_reduction <add>, %401, %cst_79 [0, 1, 2] : vector<2x7x7x128xf32> to vector<128xf32>
    %403 = vector.shape_cast %402 : vector<128xf32> to vector<1x1x1x128xf32>
    %cst_80 = arith.constant 0.0102040814 : f32
    %404 = vector.broadcast %cst_80 : f32 to vector<1x1x1x128xf32>
    %405 = arith.mulf %403, %404 : vector<1x1x1x128xf32>
    %406 = vector.broadcast %405 : vector<1x1x1x128xf32> to vector<2x7x7x128xf32>
    %407 = arith.subf %401, %406 : vector<2x7x7x128xf32>
    %408 = arith.mulf %407, %407 : vector<2x7x7x128xf32>
    %cst_81 = arith.constant dense<0.000000e+00> : vector<128xf32>
    %409 = vector.multi_reduction <add>, %408, %cst_81 [0, 1, 2] : vector<2x7x7x128xf32> to vector<128xf32>
    %410 = vector.shape_cast %409 : vector<128xf32> to vector<1x1x1x128xf32>
    %cst_82 = arith.constant 0.0102040814 : f32
    %411 = vector.broadcast %cst_82 : f32 to vector<1x1x1x128xf32>
    %412 = arith.mulf %410, %411 : vector<1x1x1x128xf32>
    %cst_83 = arith.constant 1.000000e-03 : f32
    %413 = vector.broadcast %cst_83 : f32 to vector<1x1x1x128xf32>
    %414 = arith.addf %412, %413 : vector<1x1x1x128xf32>
    %415 = math.rsqrt %414 : vector<1x1x1x128xf32>
    %c0_84 = arith.constant 0 : index
    %c128_85 = arith.constant 128 : index
    %416 = vector.load %arg3[%c0_84, %c128_85] : memref<1x256xf32, #tpu.memory_space<vmem>>, vector<1x128xf32>
    %417 = vector.shape_cast %416 : vector<1x128xf32> to vector<128xf32>
    %c0_86 = arith.constant 0 : index
    %c128_87 = arith.constant 128 : index
    %418 = vector.load %arg4[%c0_86, %c128_87] : memref<1x256xf32, #tpu.memory_space<vmem>>, vector<1x128xf32>
    %419 = vector.shape_cast %418 : vector<1x128xf32> to vector<128xf32>
    %420 = vector.shape_cast %417 : vector<128xf32> to vector<1x1x1x128xf32>
    %421 = arith.mulf %415, %420 : vector<1x1x1x128xf32>
    %422 = vector.broadcast %421 : vector<1x1x1x128xf32> to vector<2x7x7x128xf32>
    %423 = arith.mulf %407, %422 : vector<2x7x7x128xf32>
    %424 = vector.shape_cast %419 : vector<128xf32> to vector<1x1x1x128xf32>
    %425 = vector.broadcast %424 : vector<1x1x1x128xf32> to vector<2x7x7x128xf32>
    %426 = arith.addf %423, %425 : vector<2x7x7x128xf32>
    %c0_88 = arith.constant 0 : index
    %c0_89 = arith.constant 0 : index
    %c0_90 = arith.constant 0 : index
    %c128_91 = arith.constant 128 : index
    %427 = vector.load %arg5[%c0_88, %c0_89, %c0_90, %c128_91] : memref<2x7x7x256xf32, #tpu.memory_space<vmem>>, vector<2x7x7x128xf32>
    tpu.vector_store %arg5[%c0_88, %c0_89, %c0_90, %c128_91], %426 {strides = array<i32>} : memref<2x7x7x256xf32, #tpu.memory_space<vmem>>, vector<2x7x7x128xf32>,
    return
  }
  func.func @transform_0(%arg0: i32) -> (i32, i32, i32, i32) {
    %c0_i32 = arith.constant 0 : i32
    %c0_i32_0 = arith.constant 0 : i32
    %c0_i32_1 = arith.constant 0 : i32
    %c0_i32_2 = arith.constant 0 : i32
    return %c0_i32, %c0_i32_0, %c0_i32_1, %arg0 : i32, i32, i32, i32
  }
  func.func @transform_1(%arg0: i32) -> (i32, i32) {
    %c0_i32 = arith.constant 0 : i32
    %c0_i32_0 = arith.constant 0 : i32
    return %c0_i32, %arg0 : i32, i32
  }
  func.func @transform_2(%arg0: i32) -> (i32, i32) {
    %c0_i32 = arith.constant 0 : i32
    %c0_i32_0 = arith.constant 0 : i32
    return %c0_i32, %arg0 : i32, i32
  }
  func.func @transform_3(%arg0: i32) -> (i32, i32) {
    %c0_i32 = arith.constant 0 : i32
    %c0_i32_0 = arith.constant 0 : i32
    return %c0_i32, %arg0 : i32, i32
  }
  func.func @transform_4(%arg0: i32) -> (i32, i32, i32, i32) {
    %c0_i32 = arith.constant 0 : i32
    %c0_i32_0 = arith.constant 0 : i32
    %c0_i32_1 = arith.constant 0 : i32
    %c0_i32_2 = arith.constant 0 : i32
    return %c0_i32, %c0_i32_0, %c0_i32_1, %arg0 : i32, i32, i32, i32
  }
}

</mosaic_0001>

<llo_original>
// kernel: tpu_custom_call.1
$region0: #{tpu_custom_call.1}
  #allocation0 [shape = 'u32[]', space=smem, size = 0x4, offset = 0x4, fixed_abs, tag = 'smem constant byte address 0x4 - core index']
  #allocation1 [shape = 'u32[144,128]{1,0:T(1,128)}', space=vmem, size = 0x12000, scoped, tag = 'internal scratch']
  #allocation2 [shape = 'f32[2,11,11,256]{3,2,1,0:T(8,128)}', space=vmem, size = 0x58000, scoped, tag = 'scratch operand']
  %s0 = inlined_call_operand.vmem [shape: f32[2,7,7,256], index: 0, kind: input, shape index: {}]
  %s1 = inlined_call_operand.vmem [shape: f32[25,256], index: 1, kind: input, shape index: {}]
  %s2 = inlined_call_operand.vmem [shape: f32[1,256], index: 2, kind: input, shape index: {}]
  %s3 = inlined_call_operand.vmem [shape: f32[1,256], index: 3, kind: input, shape index: {}]
  %s4 = inlined_call_operand.vmem [shape: f32[2,7,7,256], index: 4, kind: output, shape index: {}]
  %s5 = sld [smem:[#allocation0]]
  $region26: #{tpu_custom_call.1} parent=0
    _
  %s7 = ssub.s32 1, %s5
  %s8 = scalar_select 0, %s7, %s5
  // Predicated region
  $region2: #{tpu_custom_call.1} parent=0 // pred_check
    _
  $region3: #{tpu_custom_call.1} parent=0 // pred_check_branch
    %10 = sbr.rel (0) target = $region5
  $region4: #{tpu_custom_call.1} parent=0 // pred_region
    _
  $region5: #{tpu_custom_call.1} parent=0 // pred_fallthru
    _
  // Predicated region
  $region6: #{tpu_custom_call.1} parent=0 // pred_check
    _
  $region7: #{tpu_custom_call.1} parent=0 // pred_check_branch
    %12 = sbr.rel (0) target = $region9
  $region8: #{tpu_custom_call.1} parent=0 // pred_region
    _
  $region9: #{tpu_custom_call.1} parent=0 // pred_fallthru
    _
  // Predicated region
  $region10: #{tpu_custom_call.1} parent=0 // pred_check
    _
  $region11: #{tpu_custom_call.1} parent=0 // pred_check_branch
    %14 = sbr.rel (0) target = $region13
  $region12: #{tpu_custom_call.1} parent=0 // pred_region
    _
  $region13: #{tpu_custom_call.1} parent=0 // pred_fallthru
    _
  // Predicated region
  $region14: #{tpu_custom_call.1} parent=0 // pred_check
    _
  $region15: #{tpu_custom_call.1} parent=0 // pred_check_branch
    %16 = sbr.rel (0) target = $region17
  $region16: #{tpu_custom_call.1} parent=0 // pred_region
    _
  $region17: #{tpu_custom_call.1} parent=0 // pred_fallthru
    _
  %17 = vst [vmem:[#allocation2] sm:$0xff] 0.0
  %18 = vst [vmem:[#allocation2 + $0x8] sm:$0xff] 0.0
  %19 = vst [vmem:[#allocation2 + $0x10] sm:$0x7] 0.0
  %20 = vst [vmem:[#allocation2 + $0x18] sm:$0x7] 0.0
  %21 = vst [vmem:[#allocation2 + $0x20] sm:$0xff] 0.0
  %22 = vst [vmem:[#allocation2 + $0x28] sm:$0xff] 0.0
  %23 = vst [vmem:[#allocation2 + $0x30] sm:$0x7] 0.0
  %24 = vst [vmem:[#allocation2 + $0x38] sm:$0x7] 0.0
  %25 = vst [vmem:[#allocation2 + $0x160] sm:$0xff] 0.0
  %26 = vst [vmem:[#allocation2 + $0x168] sm:$0xff] 0.0
  %27 = vst [vmem:[#allocation2 + $0x170] sm:$0x7] 0.0
  %28 = vst [vmem:[#allocation2 + $0x178] sm:$0x7] 0.0
  %29 = vst [vmem:[#allocation2 + $0x180] sm:$0xff] 0.0
  %30 = vst [vmem:[#allocation2 + $0x188] sm:$0xff] 0.0
  %31 = vst [vmem:[#allocation2 + $0x190] sm:$0x7] 0.0
  %32 = vst [vmem:[#allocation2 + $0x198] sm:$0x7] 0.0
  %s33 = scalar_lea.vmem [#allocation2], 288
  %34 = vst [vmem:[%s33] sm:$0xff] 0.0
  %35 = vst [vmem:[%s33 + $0x8] sm:$0xff] 0.0
  %36 = vst [vmem:[%s33 + $0x10] sm:$0x7] 0.0
  %37 = vst [vmem:[%s33 + $0x18] sm:$0x7] 0.0
  %38 = vst [vmem:[%s33 + $0x20] sm:$0xff] 0.0
  %39 = vst [vmem:[%s33 + $0x28] sm:$0xff] 0.0
  %40 = vst [vmem:[%s33 + $0x30] sm:$0x7] 0.0
  %41 = vst [vmem:[%s33 + $0x38] sm:$0x7] 0.0
  %42 = vst [vmem:[%s33 + $0x160] sm:$0xff] 0.0
  %43 = vst [vmem:[%s33 + $0x168] sm:$0xff] 0.0
  %44 = vst [vmem:[%s33 + $0x170] sm:$0x7] 0.0
  %45 = vst [vmem:[%s33 + $0x178] sm:$0x7] 0.0
  %46 = vst [vmem:[%s33 + $0x180] sm:$0xff] 0.0
  %47 = vst [vmem:[%s33 + $0x188] sm:$0xff] 0.0
  %48 = vst [vmem:[%s33 + $0x190] sm:$0x7] 0.0
  %49 = vst [vmem:[%s33 + $0x198] sm:$0x7] 0.0
  %s50 = scalar_lea.vmem [#allocation2], 64
  %51 = vst [vmem:[%s50] sm:$0x3] 0.0
  %52 = vst [vmem:[%s50 + $0x8] sm:$0x3] 0.0
  %53 = vst [vmem:[%s50 + $0x20] sm:$0x3] 0.0
  %54 = vst [vmem:[%s50 + $0x28] sm:$0x3] 0.0
  %55 = vst [vmem:[%s50 + $0x40] sm:$0x3] 0.0
  %56 = vst [vmem:[%s50 + $0x48] sm:$0x3] 0.0
  %57 = vst [vmem:[%s50 + $0x60] sm:$0x3] 0.0
  %58 = vst [vmem:[%s50 + $0x68] sm:$0x3] 0.0
  %59 = vst [vmem:[%s50 + $0x80] sm:$0x3] 0.0
  %60 = vst [vmem:[%s50 + $0x88] sm:$0x3] 0.0
  %61 = vst [vmem:[%s50 + $0xa0] sm:$0x3] 0.0
  %62 = vst [vmem:[%s50 + $0xa8] sm:$0x3] 0.0
  %63 = vst [vmem:[%s50 + $0xc0] sm:$0x3] 0.0
  %64 = vst [vmem:[%s50 + $0xc8] sm:$0x3] 0.0
  %65 = vst [vmem:[%s50 + $0x160] sm:$0x3] 0.0
  %66 = vst [vmem:[%s50 + $0x168] sm:$0x3] 0.0
  %67 = vst [vmem:[%s50 + $0x180] sm:$0x3] 0.0
  %68 = vst [vmem:[%s50 + $0x188] sm:$0x3] 0.0
  %69 = vst [vmem:[%s50 + $0x1a0] sm:$0x3] 0.0
  %70 = vst [vmem:[%s50 + $0x1a8] sm:$0x3] 0.0
  %71 = vst [vmem:[%s50 + $0x1c0] sm:$0x3] 0.0
  %72 = vst [vmem:[%s50 + $0x1c8] sm:$0x3] 0.0
  %73 = vst [vmem:[%s50 + $0x1e0] sm:$0x3] 0.0
  %74 = vst [vmem:[%s50 + $0x1e8] sm:$0x3] 0.0
  %75 = vst [vmem:[%s50 + $0x200] sm:$0x3] 0.0
  %76 = vst [vmem:[%s50 + $0x208] sm:$0x3] 0.0
  %77 = vst [vmem:[%s50 + $0x220] sm:$0x3] 0.0
  %78 = vst [vmem:[%s50 + $0x228] sm:$0x3] 0.0
  %79 = vst [vmem:[%s50 + $0x10] sm:$0x6] 0.0
  %80 = vst [vmem:[%s50 + $0x18] sm:$0x6] 0.0
  %81 = vst [vmem:[%s50 + $0x30] sm:$0x6] 0.0
  %82 = vst [vmem:[%s50 + $0x38] sm:$0x6] 0.0
  %83 = vst [vmem:[%s50 + $0x50] sm:$0x6] 0.0
  %84 = vst [vmem:[%s50 + $0x58] sm:$0x6] 0.0
  %85 = vst [vmem:[%s50 + $0x70] sm:$0x6] 0.0
  %86 = vst [vmem:[%s50 + $0x78] sm:$0x6] 0.0
  %87 = vst [vmem:[%s50 + $0x90] sm:$0x6] 0.0
  %88 = vst [vmem:[%s50 + $0x98] sm:$0x6] 0.0
  %89 = vst [vmem:[%s50 + $0xb0] sm:$0x6] 0.0
  %90 = vst [vmem:[%s50 + $0xb8] sm:$0x6] 0.0
  %91 = vst [vmem:[%s50 + $0xd0] sm:$0x6] 0.0
  %92 = vst [vmem:[%s50 + $0xd8] sm:$0x6] 0.0
  %93 = vst [vmem:[%s50 + $0x170] sm:$0x6] 0.0
  %94 = vst [vmem:[%s50 + $0x178] sm:$0x6] 0.0
  %95 = vst [vmem:[%s50 + $0x190] sm:$0x6] 0.0
  %96 = vst [vmem:[%s50 + $0x198] sm:$0x6] 0.0
  %97 = vst [vmem:[%s50 + $0x1b0] sm:$0x6] 0.0
  %98 = vst [vmem:[%s50 + $0x1b8] sm:$0x6] 0.0
  %99 = vst [vmem:[%s50 + $0x1d0] sm:$0x6] 0.0
  %100 = vst [vmem:[%s50 + $0x1d8] sm:$0x6] 0.0
  %101 = vst [vmem:[%s50 + $0x1f0] sm:$0x6] 0.0
  %102 = vst [vmem:[%s50 + $0x1f8] sm:$0x6] 0.0
  %103 = vst [vmem:[%s50 + $0x210] sm:$0x6] 0.0
  %104 = vst [vmem:[%s50 + $0x218] sm:$0x6] 0.0
  %105 = vst [vmem:[%s50 + $0x230] sm:$0x6] 0.0
  %106 = vst [vmem:[%s50 + $0x238] sm:$0x6] 0.0
  %v107 = vld [vmem:[%s0] sm:$0x7f]
  %v108 = vld [vmem:[%s0 + $0x8] sm:$0x7f]
  %v109 = vld [vmem:[%s0 + $0x10] sm:$0x7f]
  %v110 = vld [vmem:[%s0 + $0x18] sm:$0x7f]
  %v111 = vld [vmem:[%s0 + $0x20] sm:$0x7f]
  %v112 = vld [vmem:[%s0 + $0x28] sm:$0x7f]
  %v113 = vld [vmem:[%s0 + $0x30] sm:$0x7f]
  %v114 = vld [vmem:[%s0 + $0x38] sm:$0x7f]
  %v115 = vld [vmem:[%s0 + $0x40] sm:$0x7f]
  %v116 = vld [vmem:[%s0 + $0x48] sm:$0x7f]
  %v117 = vld [vmem:[%s0 + $0x50] sm:$0x7f]
  %v118 = vld [vmem:[%s0 + $0x58] sm:$0x7f]
  %v119 = vld [vmem:[%s0 + $0x60] sm:$0x7f]
  %v120 = vld [vmem:[%s0 + $0x68] sm:$0x7f]
  %v121 = vld [vmem:[%s0 + $0x70] sm:$0x7f]
  %v122 = vld [vmem:[%s0 + $0x78] sm:$0x7f]
  %v123 = vld [vmem:[%s0 + $0x80] sm:$0x7f]
  %v124 = vld [vmem:[%s0 + $0x88] sm:$0x7f]
  %v125 = vld [vmem:[%s0 + $0x90] sm:$0x7f]
  %v126 = vld [vmem:[%s0 + $0x98] sm:$0x7f]
  %v127 = vld [vmem:[%s0 + $0xa0] sm:$0x7f]
  %v128 = vld [vmem:[%s0 + $0xa8] sm:$0x7f]
  %v129 = vld [vmem:[%s0 + $0xb0] sm:$0x7f]
  %v130 = vld [vmem:[%s0 + $0xb8] sm:$0x7f]
  %v131 = vld [vmem:[%s0 + $0xc0] sm:$0x7f]
  %v132 = vld [vmem:[%s0 + $0xc8] sm:$0x7f]
  %v133 = vld [vmem:[%s0 + $0xd0] sm:$0x7f]
  %v134 = vld [vmem:[%s0 + $0xd8] sm:$0x7f]
  %v163 = vrot.slane %v107, 6
  %v164 = vrot.slane %v108, 6
  %v165 = vrot.slane %v109, 6
  %v166 = vrot.slane %v110, 6
  %v167 = vrot.slane %v111, 6
  %v168 = vrot.slane %v112, 6
  %v169 = vrot.slane %v113, 6
  %v170 = vrot.slane %v114, 6
  %v171 = vrot.slane %v115, 6
  %v172 = vrot.slane %v116, 6
  %v173 = vrot.slane %v117, 6
  %v174 = vrot.slane %v118, 6
  %v175 = vrot.slane %v119, 6
  %v176 = vrot.slane %v120, 6
  %v177 = vrot.slane %v121, 6
  %v178 = vrot.slane %v122, 6
  %v179 = vrot.slane %v123, 6
  %v180 = vrot.slane %v124, 6
  %v181 = vrot.slane %v125, 6
  %v182 = vrot.slane %v126, 6
  %v183 = vrot.slane %v127, 6
  %v184 = vrot.slane %v128, 6
  %v185 = vrot.slane %v129, 6
  %v186 = vrot.slane %v130, 6
  %v187 = vrot.slane %v131, 6
  %v188 = vrot.slane %v132, 6
  %v189 = vrot.slane %v133, 6
  %v190 = vrot.slane %v134, 6
  %219 = vst [vmem:[%s50] sm:$0xfc] %v163
  %220 = vst [vmem:[%s50 + $0x8] sm:$0xfc] %v164
  %221 = vst [vmem:[%s50 + $0x10] sm:$0x1] %v163
  %222 = vst [vmem:[%s50 + $0x18] sm:$0x1] %v164
  %223 = vst [vmem:[%s50 + $0x20] sm:$0xfc] %v165
  %224 = vst [vmem:[%s50 + $0x28] sm:$0xfc] %v166
  %225 = vst [vmem:[%s50 + $0x30] sm:$0x1] %v165
  %226 = vst [vmem:[%s50 + $0x38] sm:$0x1] %v166
  %227 = vst [vmem:[%s50 + $0x40] sm:$0xfc] %v167
  %228 = vst [vmem:[%s50 + $0x48] sm:$0xfc] %v168
  %229 = vst [vmem:[%s50 + $0x50] sm:$0x1] %v167
  %230 = vst [vmem:[%s50 + $0x58] sm:$0x1] %v168
  %231 = vst [vmem:[%s50 + $0x60] sm:$0xfc] %v169
  %232 = vst [vmem:[%s50 + $0x68] sm:$0xfc] %v170
  %233 = vst [vmem:[%s50 + $0x70] sm:$0x1] %v169
  %234 = vst [vmem:[%s50 + $0x78] sm:$0x1] %v170
  %235 = vst [vmem:[%s50 + $0x80] sm:$0xfc] %v171
  %236 = vst [vmem:[%s50 + $0x88] sm:$0xfc] %v172
  %237 = vst [vmem:[%s50 + $0x90] sm:$0x1] %v171
  %238 = vst [vmem:[%s50 + $0x98] sm:$0x1] %v172
  %239 = vst [vmem:[%s50 + $0xa0] sm:$0xfc] %v173
  %240 = vst [vmem:[%s50 + $0xa8] sm:$0xfc] %v174
  %241 = vst [vmem:[%s50 + $0xb0] sm:$0x1] %v173
  %242 = vst [vmem:[%s50 + $0xb8] sm:$0x1] %v174
  %243 = vst [vmem:[%s50 + $0xc0] sm:$0xfc] %v175
  %244 = vst [vmem:[%s50 + $0xc8] sm:$0xfc] %v176
  %245 = vst [vmem:[%s50 + $0xd0] sm:$0x1] %v175
  %246 = vst [vmem:[%s50 + $0xd8] sm:$0x1] %v176
  %247 = vst [vmem:[%s50 + $0x160] sm:$0xfc] %v177
  %248 = vst [vmem:[%s50 + $0x168] sm:$0xfc] %v178
  %249 = vst [vmem:[%s50 + $0x170] sm:$0x1] %v177
  %250 = vst [vmem:[%s50 + $0x178] sm:$0x1] %v178
  %251 = vst [vmem:[%s50 + $0x180] sm:$0xfc] %v179
  %252 = vst [vmem:[%s50 + $0x188] sm:$0xfc] %v180
  %253 = vst [vmem:[%s50 + $0x190] sm:$0x1] %v179
  %254 = vst [vmem:[%s50 + $0x198] sm:$0x1] %v180
  %255 = vst [vmem:[%s50 + $0x1a0] sm:$0xfc] %v181
  %256 = vst [vmem:[%s50 + $0x1a8] sm:$0xfc] %v182
  %257 = vst [vmem:[%s50 + $0x1b0] sm:$0x1] %v181
  %258 = vst [vmem:[%s50 + $0x1b8] sm:$0x1] %v182
  %259 = vst [vmem:[%s50 + $0x1c0] sm:$0xfc] %v183
  %260 = vst [vmem:[%s50 + $0x1c8] sm:$0xfc] %v184
  %261 = vst [vmem:[%s50 + $0x1d0] sm:$0x1] %v183
  %262 = vst [vmem:[%s50 + $0x1d8] sm:$0x1] %v184
  %263 = vst [vmem:[%s50 + $0x1e0] sm:$0xfc] %v185
  %264 = vst [vmem:[%s50 + $0x1e8] sm:$0xfc] %v186
  %265 = vst [vmem:[%s50 + $0x1f0] sm:$0x1] %v185
  %266 = vst [vmem:[%s50 + $0x1f8] sm:$0x1] %v186
  %267 = vst [vmem:[%s50 + $0x200] sm:$0xfc] %v187
  %268 = vst [vmem:[%s50 + $0x208] sm:$0xfc] %v188
  %269 = vst [vmem:[%s50 + $0x210] sm:$0x1] %v187
  %270 = vst [vmem:[%s50 + $0x218] sm:$0x1] %v188
  %271 = vst [vmem:[%s50 + $0x220] sm:$0xfc] %v189
  %272 = vst [vmem:[%s50 + $0x228] sm:$0xfc] %v190
  %273 = vst [vmem:[%s50 + $0x230] sm:$0x1] %v189
  %274 = vst [vmem:[%s50 + $0x238] sm:$0x1] %v190
  %v275 = vld [vmem:[%s1] sm:$0xff]
  %v276 = vld [vmem:[%s1 + $0x10] sm:$0xff]
  %v277 = vld [vmem:[%s1 + $0x20] sm:$0xff]
  %v278 = vld [vmem:[%s1 + $0x30] sm:$0x1]
  %v279 = vld [vmem:[#allocation2] sm:$0x7f]
  %v280 = vld [vmem:[#allocation2 + $0x20] sm:$0x7f]
  %v281 = vld [vmem:[#allocation2 + $0x40] sm:$0x7f]
  %v282 = vld [vmem:[#allocation2 + $0x60] sm:$0x7f]
  %v283 = vld [vmem:[#allocation2 + $0x80] sm:$0x7f]
  %v284 = vld [vmem:[#allocation2 + $0xa0] sm:$0x7f]
  %v285 = vld [vmem:[#allocation2 + $0xc0] sm:$0x7f]
  %v286 = vld [vmem:[#allocation2 + $0xe0] sm:$0x7f]
  %v287 = vld [vmem:[#allocation2 + $0x100] sm:$0x7f]
  %v288 = vld [vmem:[#allocation2 + $0x120] sm:$0x7f]
  %v289 = vld [vmem:[#allocation2 + $0x140] sm:$0x7f]
  %v290 = vld [vmem:[#allocation2 + $0x160] sm:$0x7f]
  %v291 = vld [vmem:[#allocation2 + $0x180] sm:$0x7f]
  %v292 = vld [vmem:[#allocation2 + $0x1a0] sm:$0x7f]
  %v293 = vld [vmem:[#allocation2 + $0x1c0] sm:$0x7f]
  %v294 = vld [vmem:[#allocation2 + $0x1e0] sm:$0x7f]
  %v295 = vld [vmem:[#allocation2 + $0x200] sm:$0x7f]
  %v296 = vld [vmem:[#allocation2 + $0x220] sm:$0x7f]
  %v297 = vld [vmem:[#allocation2 + $0x240] sm:$0x7f]
  %v298 = vld [vmem:[#allocation2 + $0x260] sm:$0x7f]
  %v299 = vld [vmem:[#allocation2 + $0x280] sm:$0x7f]
  %v300 = vld [vmem:[#allocation2 + $0x2a0] sm:$0x7f]
  %v301 = vlaneseq
  %v302 = vshrl.u32 %v301, 7
  %v303 = vsub.s32 0, %v302
  %v304 = vrot.slane %v275, %v303
  %v305 = vmul.f32 %v279, %v304
  %v306 = vmul.f32 %v280, %v304
  %v307 = vmul.f32 %v281, %v304
  %v308 = vmul.f32 %v282, %v304
  %v309 = vmul.f32 %v283, %v304
  %v310 = vmul.f32 %v284, %v304
  %v311 = vmul.f32 %v285, %v304
  %v312 = vmul.f32 %v290, %v304
  %v313 = vmul.f32 %v291, %v304
  %v314 = vmul.f32 %v292, %v304
  %v315 = vmul.f32 %v293, %v304
  %v316 = vmul.f32 %v294, %v304
  %v317 = vmul.f32 %v295, %v304
  %v318 = vmul.f32 %v296, %v304
  %v319 = vadd.f32 %v305, 0.0
  %v320 = vadd.f32 %v306, 0.0
  %v321 = vadd.f32 %v307, 0.0
  %v322 = vadd.f32 %v308, 0.0
  %v323 = vadd.f32 %v309, 0.0
  %v324 = vadd.f32 %v310, 0.0
  %v325 = vadd.f32 %v311, 0.0
  %v326 = vadd.f32 %v312, 0.0
  %v327 = vadd.f32 %v313, 0.0
  %v328 = vadd.f32 %v314, 0.0
  %v329 = vadd.f32 %v315, 0.0
  %v330 = vadd.f32 %v316, 0.0
  %v331 = vadd.f32 %v317, 0.0
  %v332 = vadd.f32 %v318, 0.0
  %v333 = vlaneseq
  %v334 = vshrl.u32 %v333, 7
  %v335 = vsub.s32 5, %v334
  %v336 = vrot.slane %v275, %v335
  %v337 = vmul.f32 %v280, %v336
  %v338 = vmul.f32 %v281, %v336
  %v339 = vmul.f32 %v282, %v336
  %v340 = vmul.f32 %v283, %v336
  %v341 = vmul.f32 %v284, %v336
  %v342 = vmul.f32 %v285, %v336
  %v343 = vmul.f32 %v286, %v336
  %v344 = vmul.f32 %v291, %v336
  %v345 = vmul.f32 %v292, %v336
  %v346 = vmul.f32 %v293, %v336
  %v347 = vmul.f32 %v294, %v336
  %v348 = vmul.f32 %v295, %v336
  %v349 = vmul.f32 %v296, %v336
  %v350 = vmul.f32 %v297, %v336
  %v351 = vadd.f32 %v337, 0.0
  %v352 = vadd.f32 %v338, 0.0
  %v353 = vadd.f32 %v339, 0.0
  %v354 = vadd.f32 %v340, 0.0
  %v355 = vadd.f32 %v341, 0.0
  %v356 = vadd.f32 %v342, 0.0
  %v357 = vadd.f32 %v343, 0.0
  %v358 = vadd.f32 %v344, 0.0
  %v359 = vadd.f32 %v345, 0.0
  %v360 = vadd.f32 %v346, 0.0
  %v361 = vadd.f32 %v347, 0.0
  %v362 = vadd.f32 %v348, 0.0
  %v363 = vadd.f32 %v349, 0.0
  %v364 = vadd.f32 %v350, 0.0
  %v365 = vlaneseq
  %v366 = vshrl.u32 %v365, 7
  %v367 = vsub.s32 2, %v366
  %v368 = vrot.slane %v276, %v367
  %v369 = vmul.f32 %v281, %v368
  %v370 = vmul.f32 %v282, %v368
  %v371 = vmul.f32 %v283, %v368
  %v372 = vmul.f32 %v284, %v368
  %v373 = vmul.f32 %v285, %v368
  %v374 = vmul.f32 %v286, %v368
  %v375 = vmul.f32 %v287, %v368
  %v376 = vmul.f32 %v292, %v368
  %v377 = vmul.f32 %v293, %v368
  %v378 = vmul.f32 %v294, %v368
  %v379 = vmul.f32 %v295, %v368
  %v380 = vmul.f32 %v296, %v368
  %v381 = vmul.f32 %v297, %v368
  %v382 = vmul.f32 %v298, %v368
  %v383 = vadd.f32 %v319, %v369
  %v384 = vadd.f32 %v320, %v370
  %v385 = vadd.f32 %v321, %v371
  %v386 = vadd.f32 %v322, %v372
  %v387 = vadd.f32 %v323, %v373
  %v388 = vadd.f32 %v324, %v374
  %v389 = vadd.f32 %v325, %v375
  %v390 = vadd.f32 %v326, %v376
  %v391 = vadd.f32 %v327, %v377
  %v392 = vadd.f32 %v328, %v378
  %v393 = vadd.f32 %v329, %v379
  %v394 = vadd.f32 %v330, %v380
  %v395 = vadd.f32 %v331, %v381
  %v396 = vadd.f32 %v332, %v382
  %v397 = vlaneseq
  %v398 = vshrl.u32 %v397, 7
  %v399 = vsub.s32 7, %v398
  %v400 = vrot.slane %v276, %v399
  %v401 = vmul.f32 %v282, %v400
  %v402 = vmul.f32 %v283, %v400
  %v403 = vmul.f32 %v284, %v400
  %v404 = vmul.f32 %v285, %v400
  %v405 = vmul.f32 %v286, %v400
  %v406 = vmul.f32 %v287, %v400
  %v407 = vmul.f32 %v288, %v400
  %v408 = vmul.f32 %v293, %v400
  %v409 = vmul.f32 %v294, %v400
  %v410 = vmul.f32 %v295, %v400
  %v411 = vmul.f32 %v296, %v400
  %v412 = vmul.f32 %v297, %v400
  %v413 = vmul.f32 %v298, %v400
  %v414 = vmul.f32 %v299, %v400
  %v415 = vadd.f32 %v351, %v401
  %v416 = vadd.f32 %v352, %v402
  %v417 = vadd.f32 %v353, %v403
  %v418 = vadd.f32 %v354, %v404
  %v419 = vadd.f32 %v355, %v405
  %v420 = vadd.f32 %v356, %v406
  %v421 = vadd.f32 %v357, %v407
  %v422 = vadd.f32 %v358, %v408
  %v423 = vadd.f32 %v359, %v409
  %v424 = vadd.f32 %v360, %v410
  %v425 = vadd.f32 %v361, %v411
  %v426 = vadd.f32 %v362, %v412
  %v427 = vadd.f32 %v363, %v413
  %v428 = vadd.f32 %v364, %v414
  %v429 = vlaneseq
  %v430 = vshrl.u32 %v429, 7
  %v431 = vsub.s32 4, %v430
  %v432 = vrot.slane %v277, %v431
  %v433 = vmul.f32 %v283, %v432
  %v434 = vmul.f32 %v284, %v432
  %v435 = vmul.f32 %v285, %v432
  %v436 = vmul.f32 %v286, %v432
  %v437 = vmul.f32 %v287, %v432
  %v438 = vmul.f32 %v288, %v432
  %v439 = vmul.f32 %v289, %v432
  %v440 = vmul.f32 %v294, %v432
  %v441 = vmul.f32 %v295, %v432
  %v442 = vmul.f32 %v296, %v432
  %v443 = vmul.f32 %v297, %v432
  %v444 = vmul.f32 %v298, %v432
  %v445 = vmul.f32 %v299, %v432
  %v446 = vmul.f32 %v300, %v432
  %v447 = vadd.f32 %v383, %v433
  %v448 = vadd.f32 %v384, %v434
  %v449 = vadd.f32 %v385, %v435
  %v450 = vadd.f32 %v386, %v436
  %v451 = vadd.f32 %v387, %v437
  %v452 = vadd.f32 %v388, %v438
  %v453 = vadd.f32 %v389, %v439
  %v454 = vadd.f32 %v390, %v440
  %v455 = vadd.f32 %v391, %v441
  %v456 = vadd.f32 %v392, %v442
  %v457 = vadd.f32 %v393, %v443
  %v458 = vadd.f32 %v394, %v444
  %v459 = vadd.f32 %v395, %v445
  %v460 = vadd.f32 %v396, %v446
  %v461 = vld [vmem:[#allocation2] sm:$0xfe]
  %v462 = vld [vmem:[#allocation2 + $0x20] sm:$0xfe]
  %v463 = vld [vmem:[#allocation2 + $0x40] sm:$0xfe]
  %v464 = vld [vmem:[#allocation2 + $0x60] sm:$0xfe]
  %v465 = vld [vmem:[#allocation2 + $0x80] sm:$0xfe]
  %v466 = vld [vmem:[#allocation2 + $0xa0] sm:$0xfe]
  %v467 = vld [vmem:[#allocation2 + $0xc0] sm:$0xfe]
  %v468 = vld [vmem:[#allocation2 + $0xe0] sm:$0xfe]
  %v469 = vld [vmem:[#allocation2 + $0x100] sm:$0xfe]
  %v470 = vld [vmem:[#allocation2 + $0x120] sm:$0xfe]
  %v471 = vld [vmem:[#allocation2 + $0x140] sm:$0xfe]
  %v472 = vld [vmem:[#allocation2 + $0x160] sm:$0xfe]
  %v473 = vld [vmem:[#allocation2 + $0x180] sm:$0xfe]
  %v474 = vld [vmem:[#allocation2 + $0x1a0] sm:$0xfe]
  %v475 = vld [vmem:[#allocation2 + $0x1c0] sm:$0xfe]
  %v476 = vld [vmem:[#allocation2 + $0x1e0] sm:$0xfe]
  %v477 = vld [vmem:[#allocation2 + $0x200] sm:$0xfe]
  %v478 = vld [vmem:[#allocation2 + $0x220] sm:$0xfe]
  %v479 = vld [vmem:[#allocation2 + $0x240] sm:$0xfe]
  %v480 = vld [vmem:[#allocation2 + $0x260] sm:$0xfe]
  %v481 = vld [vmem:[#allocation2 + $0x280] sm:$0xfe]
  %v482 = vld [vmem:[#allocation2 + $0x2a0] sm:$0xfe]
  %v483 = vlaneseq
  %v484 = vshrl.u32 %v483, 7
  %v485 = vsub.s32 1, %v484
  %v486 = vrot.slane %v275, %v485
  %v487 = vmul.f32 %v461, %v486
  %v488 = vmul.f32 %v462, %v486
  %v489 = vmul.f32 %v463, %v486
  %v490 = vmul.f32 %v464, %v486
  %v491 = vmul.f32 %v465, %v486
  %v492 = vmul.f32 %v466, %v486
  %v493 = vmul.f32 %v467, %v486
  %v494 = vmul.f32 %v472, %v486
  %v495 = vmul.f32 %v473, %v486
  %v496 = vmul.f32 %v474, %v486
  %v497 = vmul.f32 %v475, %v486
  %v498 = vmul.f32 %v476, %v486
  %v499 = vmul.f32 %v477, %v486
  %v500 = vmul.f32 %v478, %v486
  %v515 = vrot.slane %v487, 1
  %v516 = vrot.slane %v488, 1
  %v517 = vrot.slane %v489, 1
  %v518 = vrot.slane %v490, 1
  %v519 = vrot.slane %v491, 1
  %v520 = vrot.slane %v492, 1
  %v521 = vrot.slane %v493, 1
  %v522 = vrot.slane %v494, 1
  %v523 = vrot.slane %v495, 1
  %v524 = vrot.slane %v496, 1
  %v525 = vrot.slane %v497, 1
  %v526 = vrot.slane %v498, 1
  %v527 = vrot.slane %v499, 1
  %v528 = vrot.slane %v500, 1
  %v543 = vadd.f32 %v415, %v515
  %v544 = vadd.f32 %v416, %v516
  %v545 = vadd.f32 %v417, %v517
  %v546 = vadd.f32 %v418, %v518
  %v547 = vadd.f32 %v419, %v519
  %v548 = vadd.f32 %v420, %v520
  %v549 = vadd.f32 %v421, %v521
  %v550 = vadd.f32 %v422, %v522
  %v551 = vadd.f32 %v423, %v523
  %v552 = vadd.f32 %v424, %v524
  %v553 = vadd.f32 %v425, %v525
  %v554 = vadd.f32 %v426, %v526
  %v555 = vadd.f32 %v427, %v527
  %v556 = vadd.f32 %v428, %v528
  %v557 = vlaneseq
  %v558 = vshrl.u32 %v557, 7
  %v559 = vsub.s32 6, %v558
  %v560 = vrot.slane %v275, %v559
  %v561 = vmul.f32 %v462, %v560
  %v562 = vmul.f32 %v463, %v560
  %v563 = vmul.f32 %v464, %v560
  %v564 = vmul.f32 %v465, %v560
  %v565 = vmul.f32 %v466, %v560
  %v566 = vmul.f32 %v467, %v560
  %v567 = vmul.f32 %v468, %v560
  %v568 = vmul.f32 %v473, %v560
  %v569 = vmul.f32 %v474, %v560
  %v570 = vmul.f32 %v475, %v560
  %v571 = vmul.f32 %v476, %v560
  %v572 = vmul.f32 %v477, %v560
  %v573 = vmul.f32 %v478, %v560
  %v574 = vmul.f32 %v479, %v560
  %v589 = vrot.slane %v561, 1
  %v590 = vrot.slane %v562, 1
  %v591 = vrot.slane %v563, 1
  %v592 = vrot.slane %v564, 1
  %v593 = vrot.slane %v565, 1
  %v594 = vrot.slane %v566, 1
  %v595 = vrot.slane %v567, 1
  %v596 = vrot.slane %v568, 1
  %v597 = vrot.slane %v569, 1
  %v598 = vrot.slane %v570, 1
  %v599 = vrot.slane %v571, 1
  %v600 = vrot.slane %v572, 1
  %v601 = vrot.slane %v573, 1
  %v602 = vrot.slane %v574, 1
  %v617 = vadd.f32 %v447, %v589
  %v618 = vadd.f32 %v448, %v590
  %v619 = vadd.f32 %v449, %v591
  %v620 = vadd.f32 %v450, %v592
  %v621 = vadd.f32 %v451, %v593
  %v622 = vadd.f32 %v452, %v594
  %v623 = vadd.f32 %v453, %v595
  %v624 = vadd.f32 %v454, %v596
  %v625 = vadd.f32 %v455, %v597
  %v626 = vadd.f32 %v456, %v598
  %v627 = vadd.f32 %v457, %v599
  %v628 = vadd.f32 %v458, %v600
  %v629 = vadd.f32 %v459, %v601
  %v630 = vadd.f32 %v460, %v602
  %v631 = vlaneseq
  %v632 = vshrl.u32 %v631, 7
  %v633 = vsub.s32 3, %v632
  %v634 = vrot.slane %v276, %v633
  %v635 = vmul.f32 %v463, %v634
  %v636 = vmul.f32 %v464, %v634
  %v637 = vmul.f32 %v465, %v634
  %v638 = vmul.f32 %v466, %v634
  %v639 = vmul.f32 %v467, %v634
  %v640 = vmul.f32 %v468, %v634
  %v641 = vmul.f32 %v469, %v634
  %v642 = vmul.f32 %v474, %v634
  %v643 = vmul.f32 %v475, %v634
  %v644 = vmul.f32 %v476, %v634
  %v645 = vmul.f32 %v477, %v634
  %v646 = vmul.f32 %v478, %v634
  %v647 = vmul.f32 %v479, %v634
  %v648 = vmul.f32 %v480, %v634
  %v663 = vrot.slane %v635, 1
  %v664 = vrot.slane %v636, 1
  %v665 = vrot.slane %v637, 1
  %v666 = vrot.slane %v638, 1
  %v667 = vrot.slane %v639, 1
  %v668 = vrot.slane %v640, 1
  %v669 = vrot.slane %v641, 1
  %v670 = vrot.slane %v642, 1
  %v671 = vrot.slane %v643, 1
  %v672 = vrot.slane %v644, 1
  %v673 = vrot.slane %v645, 1
  %v674 = vrot.slane %v646, 1
  %v675 = vrot.slane %v647, 1
  %v676 = vrot.slane %v648, 1
  %v691 = vadd.f32 %v543, %v663
  %v692 = vadd.f32 %v544, %v664
  %v693 = vadd.f32 %v545, %v665
  %v694 = vadd.f32 %v546, %v666
  %v695 = vadd.f32 %v547, %v667
  %v696 = vadd.f32 %v548, %v668
  %v697 = vadd.f32 %v549, %v669
  %v698 = vadd.f32 %v550, %v670
  %v699 = vadd.f32 %v551, %v671
  %v700 = vadd.f32 %v552, %v672
  %v701 = vadd.f32 %v553, %v673
  %v702 = vadd.f32 %v554, %v674
  %v703 = vadd.f32 %v555, %v675
  %v704 = vadd.f32 %v556, %v676
  %v705 = vlaneseq
  %v706 = vshrl.u32 %v705, 7
  %v707 = vsub.s32 0, %v706
  %v708 = vrot.slane %v277, %v707
  %v709 = vmul.f32 %v464, %v708
  %v710 = vmul.f32 %v465, %v708
  %v711 = vmul.f32 %v466, %v708
  %v712 = vmul.f32 %v467, %v708
  %v713 = vmul.f32 %v468, %v708
  %v714 = vmul.f32 %v469, %v708
  %v715 = vmul.f32 %v470, %v708
  %v716 = vmul.f32 %v475, %v708
  %v717 = vmul.f32 %v476, %v708
  %v718 = vmul.f32 %v477, %v708
  %v719 = vmul.f32 %v478, %v708
  %v720 = vmul.f32 %v479, %v708
  %v721 = vmul.f32 %v480, %v708
  %v722 = vmul.f32 %v481, %v708
  %v737 = vrot.slane %v709, 1
  %v738 = vrot.slane %v710, 1
  %v739 = vrot.slane %v711, 1
  %v740 = vrot.slane %v712, 1
  %v741 = vrot.slane %v713, 1
  %v742 = vrot.slane %v714, 1
  %v743 = vrot.slane %v715, 1
  %v744 = vrot.slane %v716, 1
  %v745 = vrot.slane %v717, 1
  %v746 = vrot.slane %v718, 1
  %v747 = vrot.slane %v719, 1
  %v748 = vrot.slane %v720, 1
  %v749 = vrot.slane %v721, 1
  %v750 = vrot.slane %v722, 1
  %v765 = vadd.f32 %v617, %v737
  %v766 = vadd.f32 %v618, %v738
  %v767 = vadd.f32 %v619, %v739
  %v768 = vadd.f32 %v620, %v740
  %v769 = vadd.f32 %v621, %v741
  %v770 = vadd.f32 %v622, %v742
  %v771 = vadd.f32 %v623, %v743
  %v772 = vadd.f32 %v624, %v744
  %v773 = vadd.f32 %v625, %v745
  %v774 = vadd.f32 %v626, %v746
  %v775 = vadd.f32 %v627, %v747
  %v776 = vadd.f32 %v628, %v748
  %v777 = vadd.f32 %v629, %v749
  %v778 = vadd.f32 %v630, %v750
  %v779 = vlaneseq
  %v780 = vshrl.u32 %v779, 7
  %v781 = vsub.s32 5, %v780
  %v782 = vrot.slane %v277, %v781
  %v783 = vmul.f32 %v465, %v782
  %v784 = vmul.f32 %v466, %v782
  %v785 = vmul.f32 %v467, %v782
  %v786 = vmul.f32 %v468, %v782
  %v787 = vmul.f32 %v469, %v782
  %v788 = vmul.f32 %v470, %v782
  %v789 = vmul.f32 %v471, %v782
  %v790 = vmul.f32 %v476, %v782
  %v791 = vmul.f32 %v477, %v782
  %v792 = vmul.f32 %v478, %v782
  %v793 = vmul.f32 %v479, %v782
  %v794 = vmul.f32 %v480, %v782
  %v795 = vmul.f32 %v481, %v782
  %v796 = vmul.f32 %v482, %v782
  %v811 = vrot.slane %v783, 1
  %v812 = vrot.slane %v784, 1
  %v813 = vrot.slane %v785, 1
  %v814 = vrot.slane %v786, 1
  %v815 = vrot.slane %v787, 1
  %v816 = vrot.slane %v788, 1
  %v817 = vrot.slane %v789, 1
  %v818 = vrot.slane %v790, 1
  %v819 = vrot.slane %v791, 1
  %v820 = vrot.slane %v792, 1
  %v821 = vrot.slane %v793, 1
  %v822 = vrot.slane %v794, 1
  %v823 = vrot.slane %v795, 1
  %v824 = vrot.slane %v796, 1
  %v839 = vadd.f32 %v691, %v811
  %v840 = vadd.f32 %v692, %v812
  %v841 = vadd.f32 %v693, %v813
  %v842 = vadd.f32 %v694, %v814
  %v843 = vadd.f32 %v695, %v815
  %v844 = vadd.f32 %v696, %v816
  %v845 = vadd.f32 %v697, %v817
  %v846 = vadd.f32 %v698, %v818
  %v847 = vadd.f32 %v699, %v819
  %v848 = vadd.f32 %v700, %v820
  %v849 = vadd.f32 %v701, %v821
  %v850 = vadd.f32 %v702, %v822
  %v851 = vadd.f32 %v703, %v823
  %v852 = vadd.f32 %v704, %v824
  %v853 = vld [vmem:[#allocation2] sm:$0xfc]
  %v854 = vld [vmem:[#allocation2 + $0x10] sm:$0x1]
  %v855 = vld [vmem:[#allocation2 + $0x20] sm:$0xfc]
  %v856 = vld [vmem:[#allocation2 + $0x30] sm:$0x1]
  %v857 = vld [vmem:[#allocation2 + $0x40] sm:$0xfc]
  %v858 = vld [vmem:[#allocation2 + $0x50] sm:$0x1]
  %v859 = vld [vmem:[#allocation2 + $0x60] sm:$0xfc]
  %v860 = vld [vmem:[#allocation2 + $0x70] sm:$0x1]
  %v861 = vld [vmem:[#allocation2 + $0x80] sm:$0xfc]
  %v862 = vld [vmem:[#allocation2 + $0x90] sm:$0x1]
  %v863 = vld [vmem:[#allocation2 + $0xa0] sm:$0xfc]
  %v864 = vld [vmem:[#allocation2 + $0xb0] sm:$0x1]
  %v865 = vld [vmem:[#allocation2 + $0xc0] sm:$0xfc]
  %v866 = vld [vmem:[#allocation2 + $0xd0] sm:$0x1]
  %v867 = vld [vmem:[#allocation2 + $0xe0] sm:$0xfc]
  %v868 = vld [vmem:[#allocation2 + $0xf0] sm:$0x1]
  %v869 = vld [vmem:[#allocation2 + $0x100] sm:$0xfc]
  %v870 = vld [vmem:[#allocation2 + $0x110] sm:$0x1]
  %v871 = vld [vmem:[#allocation2 + $0x120] sm:$0xfc]
  %v872 = vld [vmem:[#allocation2 + $0x130] sm:$0x1]
  %v873 = vld [vmem:[#allocation2 + $0x140] sm:$0xfc]
  %v874 = vld [vmem:[#allocation2 + $0x150] sm:$0x1]
  %v875 = vld [vmem:[#allocation2 + $0x160] sm:$0xfc]
  %v876 = vld [vmem:[#allocation2 + $0x170] sm:$0x1]
  %v877 = vld [vmem:[#allocation2 + $0x180] sm:$0xfc]
  %v878 = vld [vmem:[#allocation2 + $0x190] sm:$0x1]
  %v879 = vld [vmem:[#allocation2 + $0x1a0] sm:$0xfc]
  %v880 = vld [vmem:[#allocation2 + $0x1b0] sm:$0x1]
  %v881 = vld [vmem:[#allocation2 + $0x1c0] sm:$0xfc]
  %v882 = vld [vmem:[#allocation2 + $0x1d0] sm:$0x1]
  %v883 = vld [vmem:[#allocation2 + $0x1e0] sm:$0xfc]
  %v884 = vld [vmem:[#allocation2 + $0x1f0] sm:$0x1]
  %v885 = vld [vmem:[#allocation2 + $0x200] sm:$0xfc]
  %v886 = vld [vmem:[#allocation2 + $0x210] sm:$0x1]
  %v887 = vld [vmem:[#allocation2 + $0x220] sm:$0xfc]
  %v888 = vld [vmem:[#allocation2 + $0x230] sm:$0x1]
  %v889 = vld [vmem:[#allocation2 + $0x240] sm:$0xfc]
  %v890 = vld [vmem:[#allocation2 + $0x250] sm:$0x1]
  %v891 = vld [vmem:[#allocation2 + $0x260] sm:$0xfc]
  %v892 = vld [vmem:[#allocation2 + $0x270] sm:$0x1]
  %v893 = vld [vmem:[#allocation2 + $0x280] sm:$0xfc]
  %v894 = vld [vmem:[#allocation2 + $0x290] sm:$0x1]
  %v895 = vld [vmem:[#allocation2 + $0x2a0] sm:$0xfc]
  %v896 = vld [vmem:[#allocation2 + $0x2b0] sm:$0x1]
  %v897 = vlaneseq
  %v898 = vshrl.u32 %v897, 7
  %v899 = vsub.s32 2, %v898
  %v900 = vrot.slane %v275, %v899
  %v901 = vmul.f32 %v853, %v900
  %v902 = vmul.f32 %v854, %v900
  %v903 = vmul.f32 %v855, %v900
  %v904 = vmul.f32 %v856, %v900
  %v905 = vmul.f32 %v857, %v900
  %v906 = vmul.f32 %v858, %v900
  %v907 = vmul.f32 %v859, %v900
  %v908 = vmul.f32 %v860, %v900
  %v909 = vmul.f32 %v861, %v900
  %v910 = vmul.f32 %v862, %v900
  %v911 = vmul.f32 %v863, %v900
  %v912 = vmul.f32 %v864, %v900
  %v913 = vmul.f32 %v865, %v900
  %v914 = vmul.f32 %v866, %v900
  %v915 = vmul.f32 %v875, %v900
  %v916 = vmul.f32 %v876, %v900
  %v917 = vmul.f32 %v877, %v900
  %v918 = vmul.f32 %v878, %v900
  %v919 = vmul.f32 %v879, %v900
  %v920 = vmul.f32 %v880, %v900
  %v921 = vmul.f32 %v881, %v900
  %v922 = vmul.f32 %v882, %v900
  %v923 = vmul.f32 %v883, %v900
  %v924 = vmul.f32 %v884, %v900
  %v925 = vmul.f32 %v885, %v900
  %v926 = vmul.f32 %v886, %v900
  %v927 = vmul.f32 %v887, %v900
  %v928 = vmul.f32 %v888, %v900
  %vm957 = vcmask 1045504
  %v958 = vrot.slane %v901, 2
  %v959 = vrot.slane %v902, 2
  %v960 = vsel %vm957, %v958, %v959
  %v961 = vrot.slane %v903, 2
  %v962 = vrot.slane %v904, 2
  %v963 = vsel %vm957, %v961, %v962
  %v964 = vrot.slane %v905, 2
  %v965 = vrot.slane %v906, 2
  %v966 = vsel %vm957, %v964, %v965
  %v967 = vrot.slane %v907, 2
  %v968 = vrot.slane %v908, 2
  %v969 = vsel %vm957, %v967, %v968
  %v970 = vrot.slane %v909, 2
  %v971 = vrot.slane %v910, 2
  %v972 = vsel %vm957, %v970, %v971
  %v973 = vrot.slane %v911, 2
  %v974 = vrot.slane %v912, 2
  %v975 = vsel %vm957, %v973, %v974
  %v976 = vrot.slane %v913, 2
  %v977 = vrot.slane %v914, 2
  %v978 = vsel %vm957, %v976, %v977
  %v979 = vrot.slane %v915, 2
  %v980 = vrot.slane %v916, 2
  %v981 = vsel %vm957, %v979, %v980
  %v982 = vrot.slane %v917, 2
  %v983 = vrot.slane %v918, 2
  %v984 = vsel %vm957, %v982, %v983
  %v985 = vrot.slane %v919, 2
  %v986 = vrot.slane %v920, 2
  %v987 = vsel %vm957, %v985, %v986
  %v988 = vrot.slane %v921, 2
  %v989 = vrot.slane %v922, 2
  %v990 = vsel %vm957, %v988, %v989
  %v991 = vrot.slane %v923, 2
  %v992 = vrot.slane %v924, 2
  %v993 = vsel %vm957, %v991, %v992
  %v994 = vrot.slane %v925, 2
  %v995 = vrot.slane %v926, 2
  %v996 = vsel %vm957, %v994, %v995
  %v997 = vrot.slane %v927, 2
  %v998 = vrot.slane %v928, 2
  %v999 = vsel %vm957, %v997, %v998
  %v1014 = vadd.f32 %v765, %v960
  %v1015 = vadd.f32 %v766, %v963
  %v1016 = vadd.f32 %v767, %v966
  %v1017 = vadd.f32 %v768, %v969
  %v1018 = vadd.f32 %v769, %v972
  %v1019 = vadd.f32 %v770, %v975
  %v1020 = vadd.f32 %v771, %v978
  %v1021 = vadd.f32 %v772, %v981
  %v1022 = vadd.f32 %v773, %v984
  %v1023 = vadd.f32 %v774, %v987
  %v1024 = vadd.f32 %v775, %v990
  %v1025 = vadd.f32 %v776, %v993
  %v1026 = vadd.f32 %v777, %v996
  %v1027 = vadd.f32 %v778, %v999
  %v1028 = vlaneseq
  %v1029 = vshrl.u32 %v1028, 7
  %v1030 = vsub.s32 7, %v1029
  %v1031 = vrot.slane %v275, %v1030
  %v1032 = vmul.f32 %v855, %v1031
  %v1033 = vmul.f32 %v856, %v1031
  %v1034 = vmul.f32 %v857, %v1031
  %v1035 = vmul.f32 %v858, %v1031
  %v1036 = vmul.f32 %v859, %v1031
  %v1037 = vmul.f32 %v860, %v1031
  %v1038 = vmul.f32 %v861, %v1031
  %v1039 = vmul.f32 %v862, %v1031
  %v1040 = vmul.f32 %v863, %v1031
  %v1041 = vmul.f32 %v864, %v1031
  %v1042 = vmul.f32 %v865, %v1031
  %v1043 = vmul.f32 %v866, %v1031
  %v1044 = vmul.f32 %v867, %v1031
  %v1045 = vmul.f32 %v868, %v1031
  %v1046 = vmul.f32 %v877, %v1031
  %v1047 = vmul.f32 %v878, %v1031
  %v1048 = vmul.f32 %v879, %v1031
  %v1049 = vmul.f32 %v880, %v1031
  %v1050 = vmul.f32 %v881, %v1031
  %v1051 = vmul.f32 %v882, %v1031
  %v1052 = vmul.f32 %v883, %v1031
  %v1053 = vmul.f32 %v884, %v1031
  %v1054 = vmul.f32 %v885, %v1031
  %v1055 = vmul.f32 %v886, %v1031
  %v1056 = vmul.f32 %v887, %v1031
  %v1057 = vmul.f32 %v888, %v1031
  %v1058 = vmul.f32 %v889, %v1031
  %v1059 = vmul.f32 %v890, %v1031
  %v1088 = vrot.slane %v1032, 2
  %v1089 = vrot.slane %v1033, 2
  %v1090 = vsel %vm957, %v1088, %v1089
  %v1091 = vrot.slane %v1034, 2
  %v1092 = vrot.slane %v1035, 2
  %v1093 = vsel %vm957, %v1091, %v1092
  %v1094 = vrot.slane %v1036, 2
  %v1095 = vrot.slane %v1037, 2
  %v1096 = vsel %vm957, %v1094, %v1095
  %v1097 = vrot.slane %v1038, 2
  %v1098 = vrot.slane %v1039, 2
  %v1099 = vsel %vm957, %v1097, %v1098
  %v1100 = vrot.slane %v1040, 2
  %v1101 = vrot.slane %v1041, 2
  %v1102 = vsel %vm957, %v1100, %v1101
  %v1103 = vrot.slane %v1042, 2
  %v1104 = vrot.slane %v1043, 2
  %v1105 = vsel %vm957, %v1103, %v1104
  %v1106 = vrot.slane %v1044, 2
  %v1107 = vrot.slane %v1045, 2
  %v1108 = vsel %vm957, %v1106, %v1107
  %v1109 = vrot.slane %v1046, 2
  %v1110 = vrot.slane %v1047, 2
  %v1111 = vsel %vm957, %v1109, %v1110
  %v1112 = vrot.slane %v1048, 2
  %v1113 = vrot.slane %v1049, 2
  %v1114 = vsel %vm957, %v1112, %v1113
  %v1115 = vrot.slane %v1050, 2
  %v1116 = vrot.slane %v1051, 2
  %v1117 = vsel %vm957, %v1115, %v1116
  %v1118 = vrot.slane %v1052, 2
  %v1119 = vrot.slane %v1053, 2
  %v1120 = vsel %vm957, %v1118, %v1119
  %v1121 = vrot.slane %v1054, 2
  %v1122 = vrot.slane %v1055, 2
  %v1123 = vsel %vm957, %v1121, %v1122
  %v1124 = vrot.slane %v1056, 2
  %v1125 = vrot.slane %v1057, 2
  %v1126 = vsel %vm957, %v1124, %v1125
  %v1127 = vrot.slane %v1058, 2
  %v1128 = vrot.slane %v1059, 2
  %v1129 = vsel %vm957, %v1127, %v1128
  %v1144 = vadd.f32 %v839, %v1090
  %v1145 = vadd.f32 %v840, %v1093
  %v1146 = vadd.f32 %v841, %v1096
  %v1147 = vadd.f32 %v842, %v1099
  %v1148 = vadd.f32 %v843, %v1102
  %v1149 = vadd.f32 %v844, %v1105
  %v1150 = vadd.f32 %v845, %v1108
  %v1151 = vadd.f32 %v846, %v1111
  %v1152 = vadd.f32 %v847, %v1114
  %v1153 = vadd.f32 %v848, %v1117
  %v1154 = vadd.f32 %v849, %v1120
  %v1155 = vadd.f32 %v850, %v1123
  %v1156 = vadd.f32 %v851, %v1126
  %v1157 = vadd.f32 %v852, %v1129
  %v1158 = vlaneseq
  %v1159 = vshrl.u32 %v1158, 7
  %v1160 = vsub.s32 4, %v1159
  %v1161 = vrot.slane %v276, %v1160
  %v1162 = vmul.f32 %v857, %v1161
  %v1163 = vmul.f32 %v858, %v1161
  %v1164 = vmul.f32 %v859, %v1161
  %v1165 = vmul.f32 %v860, %v1161
  %v1166 = vmul.f32 %v861, %v1161
  %v1167 = vmul.f32 %v862, %v1161
  %v1168 = vmul.f32 %v863, %v1161
  %v1169 = vmul.f32 %v864, %v1161
  %v1170 = vmul.f32 %v865, %v1161
  %v1171 = vmul.f32 %v866, %v1161
  %v1172 = vmul.f32 %v867, %v1161
  %v1173 = vmul.f32 %v868, %v1161
  %v1174 = vmul.f32 %v869, %v1161
  %v1175 = vmul.f32 %v870, %v1161
  %v1176 = vmul.f32 %v879, %v1161
  %v1177 = vmul.f32 %v880, %v1161
  %v1178 = vmul.f32 %v881, %v1161
  %v1179 = vmul.f32 %v882, %v1161
  %v1180 = vmul.f32 %v883, %v1161
  %v1181 = vmul.f32 %v884, %v1161
  %v1182 = vmul.f32 %v885, %v1161
  %v1183 = vmul.f32 %v886, %v1161
  %v1184 = vmul.f32 %v887, %v1161
  %v1185 = vmul.f32 %v888, %v1161
  %v1186 = vmul.f32 %v889, %v1161
  %v1187 = vmul.f32 %v890, %v1161
  %v1188 = vmul.f32 %v891, %v1161
  %v1189 = vmul.f32 %v892, %v1161
  %v1218 = vrot.slane %v1162, 2
  %v1219 = vrot.slane %v1163, 2
  %v1220 = vsel %vm957, %v1218, %v1219
  %v1221 = vrot.slane %v1164, 2
  %v1222 = vrot.slane %v1165, 2
  %v1223 = vsel %vm957, %v1221, %v1222
  %v1224 = vrot.slane %v1166, 2
  %v1225 = vrot.slane %v1167, 2
  %v1226 = vsel %vm957, %v1224, %v1225
  %v1227 = vrot.slane %v1168, 2
  %v1228 = vrot.slane %v1169, 2
  %v1229 = vsel %vm957, %v1227, %v1228
  %v1230 = vrot.slane %v1170, 2
  %v1231 = vrot.slane %v1171, 2
  %v1232 = vsel %vm957, %v1230, %v1231
  %v1233 = vrot.slane %v1172, 2
  %v1234 = vrot.slane %v1173, 2
  %v1235 = vsel %vm957, %v1233, %v1234
  %v1236 = vrot.slane %v1174, 2
  %v1237 = vrot.slane %v1175, 2
  %v1238 = vsel %vm957, %v1236, %v1237
  %v1239 = vrot.slane %v1176, 2
  %v1240 = vrot.slane %v1177, 2
  %v1241 = vsel %vm957, %v1239, %v1240
  %v1242 = vrot.slane %v1178, 2
  %v1243 = vrot.slane %v1179, 2
  %v1244 = vsel %vm957, %v1242, %v1243
  %v1245 = vrot.slane %v1180, 2
  %v1246 = vrot.slane %v1181, 2
  %v1247 = vsel %vm957, %v1245, %v1246
  %v1248 = vrot.slane %v1182, 2
  %v1249 = vrot.slane %v1183, 2
  %v1250 = vsel %vm957, %v1248, %v1249
  %v1251 = vrot.slane %v1184, 2
  %v1252 = vrot.slane %v1185, 2
  %v1253 = vsel %vm957, %v1251, %v1252
  %v1254 = vrot.slane %v1186, 2
  %v1255 = vrot.slane %v1187, 2
  %v1256 = vsel %vm957, %v1254, %v1255
  %v1257 = vrot.slane %v1188, 2
  %v1258 = vrot.slane %v1189, 2
  %v1259 = vsel %vm957, %v1257, %v1258
  %v1274 = vadd.f32 %v1014, %v1220
  %v1275 = vadd.f32 %v1015, %v1223
  %v1276 = vadd.f32 %v1016, %v1226
  %v1277 = vadd.f32 %v1017, %v1229
  %v1278 = vadd.f32 %v1018, %v1232
  %v1279 = vadd.f32 %v1019, %v1235
  %v1280 = vadd.f32 %v1020, %v1238
  %v1281 = vadd.f32 %v1021, %v1241
  %v1282 = vadd.f32 %v1022, %v1244
  %v1283 = vadd.f32 %v1023, %v1247
  %v1284 = vadd.f32 %v1024, %v1250
  %v1285 = vadd.f32 %v1025, %v1253
  %v1286 = vadd.f32 %v1026, %v1256
  %v1287 = vadd.f32 %v1027, %v1259
  %v1288 = vlaneseq
  %v1289 = vshrl.u32 %v1288, 7
  %v1290 = vsub.s32 1, %v1289
  %v1291 = vrot.slane %v277, %v1290
  %v1292 = vmul.f32 %v859, %v1291
  %v1293 = vmul.f32 %v860, %v1291
  %v1294 = vmul.f32 %v861, %v1291
  %v1295 = vmul.f32 %v862, %v1291
  %v1296 = vmul.f32 %v863, %v1291
  %v1297 = vmul.f32 %v864, %v1291
  %v1298 = vmul.f32 %v865, %v1291
  %v1299 = vmul.f32 %v866, %v1291
  %v1300 = vmul.f32 %v867, %v1291
  %v1301 = vmul.f32 %v868, %v1291
  %v1302 = vmul.f32 %v869, %v1291
  %v1303 = vmul.f32 %v870, %v1291
  %v1304 = vmul.f32 %v871, %v1291
  %v1305 = vmul.f32 %v872, %v1291
  %v1306 = vmul.f32 %v881, %v1291
  %v1307 = vmul.f32 %v882, %v1291
  %v1308 = vmul.f32 %v883, %v1291
  %v1309 = vmul.f32 %v884, %v1291
  %v1310 = vmul.f32 %v885, %v1291
  %v1311 = vmul.f32 %v886, %v1291
  %v1312 = vmul.f32 %v887, %v1291
  %v1313 = vmul.f32 %v888, %v1291
  %v1314 = vmul.f32 %v889, %v1291
  %v1315 = vmul.f32 %v890, %v1291
  %v1316 = vmul.f32 %v891, %v1291
  %v1317 = vmul.f32 %v892, %v1291
  %v1318 = vmul.f32 %v893, %v1291
  %v1319 = vmul.f32 %v894, %v1291
  %v1348 = vrot.slane %v1292, 2
  %v1349 = vrot.slane %v1293, 2
  %v1350 = vsel %vm957, %v1348, %v1349
  %v1351 = vrot.slane %v1294, 2
  %v1352 = vrot.slane %v1295, 2
  %v1353 = vsel %vm957, %v1351, %v1352
  %v1354 = vrot.slane %v1296, 2
  %v1355 = vrot.slane %v1297, 2
  %v1356 = vsel %vm957, %v1354, %v1355
  %v1357 = vrot.slane %v1298, 2
  %v1358 = vrot.slane %v1299, 2
  %v1359 = vsel %vm957, %v1357, %v1358
  %v1360 = vrot.slane %v1300, 2
  %v1361 = vrot.slane %v1301, 2
  %v1362 = vsel %vm957, %v1360, %v1361
  %v1363 = vrot.slane %v1302, 2
  %v1364 = vrot.slane %v1303, 2
  %v1365 = vsel %vm957, %v1363, %v1364
  %v1366 = vrot.slane %v1304, 2
  %v1367 = vrot.slane %v1305, 2
  %v1368 = vsel %vm957, %v1366, %v1367
  %v1369 = vrot.slane %v1306, 2
  %v1370 = vrot.slane %v1307, 2
  %v1371 = vsel %vm957, %v1369, %v1370
  %v1372 = vrot.slane %v1308, 2
  %v1373 = vrot.slane %v1309, 2
  %v1374 = vsel %vm957, %v1372, %v1373
  %v1375 = vrot.slane %v1310, 2
  %v1376 = vrot.slane %v1311, 2
  %v1377 = vsel %vm957, %v1375, %v1376
  %v1378 = vrot.slane %v1312, 2
  %v1379 = vrot.slane %v1313, 2
  %v1380 = vsel %vm957, %v1378, %v1379
  %v1381 = vrot.slane %v1314, 2
  %v1382 = vrot.slane %v1315, 2
  %v1383 = vsel %vm957, %v1381, %v1382
  %v1384 = vrot.slane %v1316, 2
  %v1385 = vrot.slane %v1317, 2
  %v1386 = vsel %vm957, %v1384, %v1385
  %v1387 = vrot.slane %v1318, 2
  %v1388 = vrot.slane %v1319, 2
  %v1389 = vsel %vm957, %v1387, %v1388
  %v1404 = vadd.f32 %v1144, %v1350
  %v1405 = vadd.f32 %v1145, %v1353
  %v1406 = vadd.f32 %v1146, %v1356
  %v1407 = vadd.f32 %v1147, %v1359
  %v1408 = vadd.f32 %v1148, %v1362
  %v1409 = vadd.f32 %v1149, %v1365
  %v1410 = vadd.f32 %v1150, %v1368
  %v1411 = vadd.f32 %v1151, %v1371
  %v1412 = vadd.f32 %v1152, %v1374
  %v1413 = vadd.f32 %v1153, %v1377
  %v1414 = vadd.f32 %v1154, %v1380
  %v1415 = vadd.f32 %v1155, %v1383
  %v1416 = vadd.f32 %v1156, %v1386
  %v1417 = vadd.f32 %v1157, %v1389
  %v1418 = vlaneseq
  %v1419 = vshrl.u32 %v1418, 7
  %v1420 = vsub.s32 6, %v1419
  %v1421 = vrot.slane %v277, %v1420
  %v1422 = vmul.f32 %v861, %v1421
  %v1423 = vmul.f32 %v862, %v1421
  %v1424 = vmul.f32 %v863, %v1421
  %v1425 = vmul.f32 %v864, %v1421
  %v1426 = vmul.f32 %v865, %v1421
  %v1427 = vmul.f32 %v866, %v1421
  %v1428 = vmul.f32 %v867, %v1421
  %v1429 = vmul.f32 %v868, %v1421
  %v1430 = vmul.f32 %v869, %v1421
  %v1431 = vmul.f32 %v870, %v1421
  %v1432 = vmul.f32 %v871, %v1421
  %v1433 = vmul.f32 %v872, %v1421
  %v1434 = vmul.f32 %v873, %v1421
  %v1435 = vmul.f32 %v874, %v1421
  %v1436 = vmul.f32 %v883, %v1421
  %v1437 = vmul.f32 %v884, %v1421
  %v1438 = vmul.f32 %v885, %v1421
  %v1439 = vmul.f32 %v886, %v1421
  %v1440 = vmul.f32 %v887, %v1421
  %v1441 = vmul.f32 %v888, %v1421
  %v1442 = vmul.f32 %v889, %v1421
  %v1443 = vmul.f32 %v890, %v1421
  %v1444 = vmul.f32 %v891, %v1421
  %v1445 = vmul.f32 %v892, %v1421
  %v1446 = vmul.f32 %v893, %v1421
  %v1447 = vmul.f32 %v894, %v1421
  %v1448 = vmul.f32 %v895, %v1421
  %v1449 = vmul.f32 %v896, %v1421
  %v1478 = vrot.slane %v1422, 2
  %v1479 = vrot.slane %v1423, 2
  %v1480 = vsel %vm957, %v1478, %v1479
  %v1481 = vrot.slane %v1424, 2
  %v1482 = vrot.slane %v1425, 2
  %v1483 = vsel %vm957, %v1481, %v1482
  %v1484 = vrot.slane %v1426, 2
  %v1485 = vrot.slane %v1427, 2
  %v1486 = vsel %vm957, %v1484, %v1485
  %v1487 = vrot.slane %v1428, 2
  %v1488 = vrot.slane %v1429, 2
  %v1489 = vsel %vm957, %v1487, %v1488
  %v1490 = vrot.slane %v1430, 2
  %v1491 = vrot.slane %v1431, 2
  %v1492 = vsel %vm957, %v1490, %v1491
  %v1493 = vrot.slane %v1432, 2
  %v1494 = vrot.slane %v1433, 2
  %v1495 = vsel %vm957, %v1493, %v1494
  %v1496 = vrot.slane %v1434, 2
  %v1497 = vrot.slane %v1435, 2
  %v1498 = vsel %vm957, %v1496, %v1497
  %v1499 = vrot.slane %v1436, 2
  %v1500 = vrot.slane %v1437, 2
  %v1501 = vsel %vm957, %v1499, %v1500
  %v1502 = vrot.slane %v1438, 2
  %v1503 = vrot.slane %v1439, 2
  %v1504 = vsel %vm957, %v1502, %v1503
  %v1505 = vrot.slane %v1440, 2
  %v1506 = vrot.slane %v1441, 2
  %v1507 = vsel %vm957, %v1505, %v1506
  %v1508 = vrot.slane %v1442, 2
  %v1509 = vrot.slane %v1443, 2
  %v1510 = vsel %vm957, %v1508, %v1509
  %v1511 = vrot.slane %v1444, 2
  %v1512 = vrot.slane %v1445, 2
  %v1513 = vsel %vm957, %v1511, %v1512
  %v1514 = vrot.slane %v1446, 2
  %v1515 = vrot.slane %v1447, 2
  %v1516 = vsel %vm957, %v1514, %v1515
  %v1517 = vrot.slane %v1448, 2
  %v1518 = vrot.slane %v1449, 2
  %v1519 = vsel %vm957, %v1517, %v1518
  %v1534 = vadd.f32 %v1274, %v1480
  %v1535 = vadd.f32 %v1275, %v1483
  %v1536 = vadd.f32 %v1276, %v1486
  %v1537 = vadd.f32 %v1277, %v1489
  %v1538 = vadd.f32 %v1278, %v1492
  %v1539 = vadd.f32 %v1279, %v1495
  %v1540 = vadd.f32 %v1280, %v1498
  %v1541 = vadd.f32 %v1281, %v1501
  %v1542 = vadd.f32 %v1282, %v1504
  %v1543 = vadd.f32 %v1283, %v1507
  %v1544 = vadd.f32 %v1284, %v1510
  %v1545 = vadd.f32 %v1285, %v1513
  %v1546 = vadd.f32 %v1286, %v1516
  %v1547 = vadd.f32 %v1287, %v1519
  %v1548 = vld [vmem:[#allocation2] sm:$0xf8]
  %v1549 = vld [vmem:[#allocation2 + $0x10] sm:$0x3]
  %v1550 = vld [vmem:[#allocation2 + $0x20] sm:$0xf8]
  %v1551 = vld [vmem:[#allocation2 + $0x30] sm:$0x3]
  %v1552 = vld [vmem:[#allocation2 + $0x40] sm:$0xf8]
  %v1553 = vld [vmem:[#allocation2 + $0x50] sm:$0x3]
  %v1554 = vld [vmem:[#allocation2 + $0x60] sm:$0xf8]
  %v1555 = vld [vmem:[#allocation2 + $0x70] sm:$0x3]
  %v1556 = vld [vmem:[#allocation2 + $0x80] sm:$0xf8]
  %v1557 = vld [vmem:[#allocation2 + $0x90] sm:$0x3]
  %v1558 = vld [vmem:[#allocation2 + $0xa0] sm:$0xf8]
  %v1559 = vld [vmem:[#allocation2 + $0xb0] sm:$0x3]
  %v1560 = vld [vmem:[#allocation2 + $0xc0] sm:$0xf8]
  %v1561 = vld [vmem:[#allocation2 + $0xd0] sm:$0x3]
  %v1562 = vld [vmem:[#allocation2 + $0xe0] sm:$0xf8]
  %v1563 = vld [vmem:[#allocation2 + $0xf0] sm:$0x3]
  %v1564 = vld [vmem:[#allocation2 + $0x100] sm:$0xf8]
  %v1565 = vld [vmem:[#allocation2 + $0x110] sm:$0x3]
  %v1566 = vld [vmem:[#allocation2 + $0x120] sm:$0xf8]
  %v1567 = vld [vmem:[#allocation2 + $0x130] sm:$0x3]
  %v1568 = vld [vmem:[#allocation2 + $0x140] sm:$0xf8]
  %v1569 = vld [vmem:[#allocation2 + $0x150] sm:$0x3]
  %v1570 = vld [vmem:[#allocation2 + $0x160] sm:$0xf8]
  %v1571 = vld [vmem:[#allocation2 + $0x170] sm:$0x3]
  %v1572 = vld [vmem:[#allocation2 + $0x180] sm:$0xf8]
  %v1573 = vld [vmem:[#allocation2 + $0x190] sm:$0x3]
  %v1574 = vld [vmem:[#allocation2 + $0x1a0] sm:$0xf8]
  %v1575 = vld [vmem:[#allocation2 + $0x1b0] sm:$0x3]
  %v1576 = vld [vmem:[#allocation2 + $0x1c0] sm:$0xf8]
  %v1577 = vld [vmem:[#allocation2 + $0x1d0] sm:$0x3]
  %v1578 = vld [vmem:[#allocation2 + $0x1e0] sm:$0xf8]
  %v1579 = vld [vmem:[#allocation2 + $0x1f0] sm:$0x3]
  %v1580 = vld [vmem:[#allocation2 + $0x200] sm:$0xf8]
  %v1581 = vld [vmem:[#allocation2 + $0x210] sm:$0x3]
  %v1582 = vld [vmem:[#allocation2 + $0x220] sm:$0xf8]
  %v1583 = vld [vmem:[#allocation2 + $0x230] sm:$0x3]
  %v1584 = vld [vmem:[#allocation2 + $0x240] sm:$0xf8]
  %v1585 = vld [vmem:[#allocation2 + $0x250] sm:$0x3]
  %v1586 = vld [vmem:[#allocation2 + $0x260] sm:$0xf8]
  %v1587 = vld [vmem:[#allocation2 + $0x270] sm:$0x3]
  %v1588 = vld [vmem:[#allocation2 + $0x280] sm:$0xf8]
  %v1589 = vld [vmem:[#allocation2 + $0x290] sm:$0x3]
  %v1590 = vld [vmem:[#allocation2 + $0x2a0] sm:$0xf8]
  %v1591 = vld [vmem:[#allocation2 + $0x2b0] sm:$0x3]
  %v1592 = vlaneseq
  %v1593 = vshrl.u32 %v1592, 7
  %v1594 = vsub.s32 3, %v1593
  %v1595 = vrot.slane %v275, %v1594
  %v1596 = vmul.f32 %v1548, %v1595
  %v1597 = vmul.f32 %v1549, %v1595
  %v1598 = vmul.f32 %v1550, %v1595
  %v1599 = vmul.f32 %v1551, %v1595
  %v1600 = vmul.f32 %v1552, %v1595
  %v1601 = vmul.f32 %v1553, %v1595
  %v1602 = vmul.f32 %v1554, %v1595
  %v1603 = vmul.f32 %v1555, %v1595
  %v1604 = vmul.f32 %v1556, %v1595
  %v1605 = vmul.f32 %v1557, %v1595
  %v1606 = vmul.f32 %v1558, %v1595
  %v1607 = vmul.f32 %v1559, %v1595
  %v1608 = vmul.f32 %v1560, %v1595
  %v1609 = vmul.f32 %v1561, %v1595
  %v1610 = vmul.f32 %v1570, %v1595
  %v1611 = vmul.f32 %v1571, %v1595
  %v1612 = vmul.f32 %v1572, %v1595
  %v1613 = vmul.f32 %v1573, %v1595
  %v1614 = vmul.f32 %v1574, %v1595
  %v1615 = vmul.f32 %v1575, %v1595
  %v1616 = vmul.f32 %v1576, %v1595
  %v1617 = vmul.f32 %v1577, %v1595
  %v1618 = vmul.f32 %v1578, %v1595
  %v1619 = vmul.f32 %v1579, %v1595
  %v1620 = vmul.f32 %v1580, %v1595
  %v1621 = vmul.f32 %v1581, %v1595
  %v1622 = vmul.f32 %v1582, %v1595
  %v1623 = vmul.f32 %v1583, %v1595
  %vm1652 = vcmask 1044480
  %v1653 = vrot.slane %v1596, 3
  %v1654 = vrot.slane %v1597, 3
  %v1655 = vsel %vm1652, %v1653, %v1654
  %v1656 = vrot.slane %v1598, 3
  %v1657 = vrot.slane %v1599, 3
  %v1658 = vsel %vm1652, %v1656, %v1657
  %v1659 = vrot.slane %v1600, 3
  %v1660 = vrot.slane %v1601, 3
  %v1661 = vsel %vm1652, %v1659, %v1660
  %v1662 = vrot.slane %v1602, 3
  %v1663 = vrot.slane %v1603, 3
  %v1664 = vsel %vm1652, %v1662, %v1663
  %v1665 = vrot.slane %v1604, 3
  %v1666 = vrot.slane %v1605, 3
  %v1667 = vsel %vm1652, %v1665, %v1666
  %v1668 = vrot.slane %v1606, 3
  %v1669 = vrot.slane %v1607, 3
  %v1670 = vsel %vm1652, %v1668, %v1669
  %v1671 = vrot.slane %v1608, 3
  %v1672 = vrot.slane %v1609, 3
  %v1673 = vsel %vm1652, %v1671, %v1672
  %v1674 = vrot.slane %v1610, 3
  %v1675 = vrot.slane %v1611, 3
  %v1676 = vsel %vm1652, %v1674, %v1675
  %v1677 = vrot.slane %v1612, 3
  %v1678 = vrot.slane %v1613, 3
  %v1679 = vsel %vm1652, %v1677, %v1678
  %v1680 = vrot.slane %v1614, 3
  %v1681 = vrot.slane %v1615, 3
  %v1682 = vsel %vm1652, %v1680, %v1681
  %v1683 = vrot.slane %v1616, 3
  %v1684 = vrot.slane %v1617, 3
  %v1685 = vsel %vm1652, %v1683, %v1684
  %v1686 = vrot.slane %v1618, 3
  %v1687 = vrot.slane %v1619, 3
  %v1688 = vsel %vm1652, %v1686, %v1687
  %v1689 = vrot.slane %v1620, 3
  %v1690 = vrot.slane %v1621, 3
  %v1691 = vsel %vm1652, %v1689, %v1690
  %v1692 = vrot.slane %v1622, 3
  %v1693 = vrot.slane %v1623, 3
  %v1694 = vsel %vm1652, %v1692, %v1693
  %v1709 = vadd.f32 %v1404, %v1655
  %v1710 = vadd.f32 %v1405, %v1658
  %v1711 = vadd.f32 %v1406, %v1661
  %v1712 = vadd.f32 %v1407, %v1664
  %v1713 = vadd.f32 %v1408, %v1667
  %v1714 = vadd.f32 %v1409, %v1670
  %v1715 = vadd.f32 %v1410, %v1673
  %v1716 = vadd.f32 %v1411, %v1676
  %v1717 = vadd.f32 %v1412, %v1679
  %v1718 = vadd.f32 %v1413, %v1682
  %v1719 = vadd.f32 %v1414, %v1685
  %v1720 = vadd.f32 %v1415, %v1688
  %v1721 = vadd.f32 %v1416, %v1691
  %v1722 = vadd.f32 %v1417, %v1694
  %v1723 = vlaneseq
  %v1724 = vshrl.u32 %v1723, 7
  %v1725 = vsub.s32 0, %v1724
  %v1726 = vrot.slane %v276, %v1725
  %v1727 = vmul.f32 %v1550, %v1726
  %v1728 = vmul.f32 %v1551, %v1726
  %v1729 = vmul.f32 %v1552, %v1726
  %v1730 = vmul.f32 %v1553, %v1726
  %v1731 = vmul.f32 %v1554, %v1726
  %v1732 = vmul.f32 %v1555, %v1726
  %v1733 = vmul.f32 %v1556, %v1726
  %v1734 = vmul.f32 %v1557, %v1726
  %v1735 = vmul.f32 %v1558, %v1726
  %v1736 = vmul.f32 %v1559, %v1726
  %v1737 = vmul.f32 %v1560, %v1726
  %v1738 = vmul.f32 %v1561, %v1726
  %v1739 = vmul.f32 %v1562, %v1726
  %v1740 = vmul.f32 %v1563, %v1726
  %v1741 = vmul.f32 %v1572, %v1726
  %v1742 = vmul.f32 %v1573, %v1726
  %v1743 = vmul.f32 %v1574, %v1726
  %v1744 = vmul.f32 %v1575, %v1726
  %v1745 = vmul.f32 %v1576, %v1726
  %v1746 = vmul.f32 %v1577, %v1726
  %v1747 = vmul.f32 %v1578, %v1726
  %v1748 = vmul.f32 %v1579, %v1726
  %v1749 = vmul.f32 %v1580, %v1726
  %v1750 = vmul.f32 %v1581, %v1726
  %v1751 = vmul.f32 %v1582, %v1726
  %v1752 = vmul.f32 %v1583, %v1726
  %v1753 = vmul.f32 %v1584, %v1726
  %v1754 = vmul.f32 %v1585, %v1726
  %v1783 = vrot.slane %v1727, 3
  %v1784 = vrot.slane %v1728, 3
  %v1785 = vsel %vm1652, %v1783, %v1784
  %v1786 = vrot.slane %v1729, 3
  %v1787 = vrot.slane %v1730, 3
  %v1788 = vsel %vm1652, %v1786, %v1787
  %v1789 = vrot.slane %v1731, 3
  %v1790 = vrot.slane %v1732, 3
  %v1791 = vsel %vm1652, %v1789, %v1790
  %v1792 = vrot.slane %v1733, 3
  %v1793 = vrot.slane %v1734, 3
  %v1794 = vsel %vm1652, %v1792, %v1793
  %v1795 = vrot.slane %v1735, 3
  %v1796 = vrot.slane %v1736, 3
  %v1797 = vsel %vm1652, %v1795, %v1796
  %v1798 = vrot.slane %v1737, 3
  %v1799 = vrot.slane %v1738, 3
  %v1800 = vsel %vm1652, %v1798, %v1799
  %v1801 = vrot.slane %v1739, 3
  %v1802 = vrot.slane %v1740, 3
  %v1803 = vsel %vm1652, %v1801, %v1802
  %v1804 = vrot.slane %v1741, 3
  %v1805 = vrot.slane %v1742, 3
  %v1806 = vsel %vm1652, %v1804, %v1805
  %v1807 = vrot.slane %v1743, 3
  %v1808 = vrot.slane %v1744, 3
  %v1809 = vsel %vm1652, %v1807, %v1808
  %v1810 = vrot.slane %v1745, 3
  %v1811 = vrot.slane %v1746, 3
  %v1812 = vsel %vm1652, %v1810, %v1811
  %v1813 = vrot.slane %v1747, 3
  %v1814 = vrot.slane %v1748, 3
  %v1815 = vsel %vm1652, %v1813, %v1814
  %v1816 = vrot.slane %v1749, 3
  %v1817 = vrot.slane %v1750, 3
  %v1818 = vsel %vm1652, %v1816, %v1817
  %v1819 = vrot.slane %v1751, 3
  %v1820 = vrot.slane %v1752, 3
  %v1821 = vsel %vm1652, %v1819, %v1820
  %v1822 = vrot.slane %v1753, 3
  %v1823 = vrot.slane %v1754, 3
  %v1824 = vsel %vm1652, %v1822, %v1823
  %v1839 = vadd.f32 %v1534, %v1785
  %v1840 = vadd.f32 %v1535, %v1788
  %v1841 = vadd.f32 %v1536, %v1791
  %v1842 = vadd.f32 %v1537, %v1794
  %v1843 = vadd.f32 %v1538, %v1797
  %v1844 = vadd.f32 %v1539, %v1800
  %v1845 = vadd.f32 %v1540, %v1803
  %v1846 = vadd.f32 %v1541, %v1806
  %v1847 = vadd.f32 %v1542, %v1809
  %v1848 = vadd.f32 %v1543, %v1812
  %v1849 = vadd.f32 %v1544, %v1815
  %v1850 = vadd.f32 %v1545, %v1818
  %v1851 = vadd.f32 %v1546, %v1821
  %v1852 = vadd.f32 %v1547, %v1824
  %v1853 = vlaneseq
  %v1854 = vshrl.u32 %v1853, 7
  %v1855 = vsub.s32 5, %v1854
  %v1856 = vrot.slane %v276, %v1855
  %v1857 = vmul.f32 %v1552, %v1856
  %v1858 = vmul.f32 %v1553, %v1856
  %v1859 = vmul.f32 %v1554, %v1856
  %v1860 = vmul.f32 %v1555, %v1856
  %v1861 = vmul.f32 %v1556, %v1856
  %v1862 = vmul.f32 %v1557, %v1856
  %v1863 = vmul.f32 %v1558, %v1856
  %v1864 = vmul.f32 %v1559, %v1856
  %v1865 = vmul.f32 %v1560, %v1856
  %v1866 = vmul.f32 %v1561, %v1856
  %v1867 = vmul.f32 %v1562, %v1856
  %v1868 = vmul.f32 %v1563, %v1856
  %v1869 = vmul.f32 %v1564, %v1856
  %v1870 = vmul.f32 %v1565, %v1856
  %v1871 = vmul.f32 %v1574, %v1856
  %v1872 = vmul.f32 %v1575, %v1856
  %v1873 = vmul.f32 %v1576, %v1856
  %v1874 = vmul.f32 %v1577, %v1856
  %v1875 = vmul.f32 %v1578, %v1856
  %v1876 = vmul.f32 %v1579, %v1856
  %v1877 = vmul.f32 %v1580, %v1856
  %v1878 = vmul.f32 %v1581, %v1856
  %v1879 = vmul.f32 %v1582, %v1856
  %v1880 = vmul.f32 %v1583, %v1856
  %v1881 = vmul.f32 %v1584, %v1856
  %v1882 = vmul.f32 %v1585, %v1856
  %v1883 = vmul.f32 %v1586, %v1856
  %v1884 = vmul.f32 %v1587, %v1856
  %v1913 = vrot.slane %v1857, 3
  %v1914 = vrot.slane %v1858, 3
  %v1915 = vsel %vm1652, %v1913, %v1914
  %v1916 = vrot.slane %v1859, 3
  %v1917 = vrot.slane %v1860, 3
  %v1918 = vsel %vm1652, %v1916, %v1917
  %v1919 = vrot.slane %v1861, 3
  %v1920 = vrot.slane %v1862, 3
  %v1921 = vsel %vm1652, %v1919, %v1920
  %v1922 = vrot.slane %v1863, 3
  %v1923 = vrot.slane %v1864, 3
  %v1924 = vsel %vm1652, %v1922, %v1923
  %v1925 = vrot.slane %v1865, 3
  %v1926 = vrot.slane %v1866, 3
  %v1927 = vsel %vm1652, %v1925, %v1926
  %v1928 = vrot.slane %v1867, 3
  %v1929 = vrot.slane %v1868, 3
  %v1930 = vsel %vm1652, %v1928, %v1929
  %v1931 = vrot.slane %v1869, 3
  %v1932 = vrot.slane %v1870, 3
  %v1933 = vsel %vm1652, %v1931, %v1932
  %v1934 = vrot.slane %v1871, 3
  %v1935 = vrot.slane %v1872, 3
  %v1936 = vsel %vm1652, %v1934, %v1935
  %v1937 = vrot.slane %v1873, 3
  %v1938 = vrot.slane %v1874, 3
  %v1939 = vsel %vm1652, %v1937, %v1938
  %v1940 = vrot.slane %v1875, 3
  %v1941 = vrot.slane %v1876, 3
  %v1942 = vsel %vm1652, %v1940, %v1941
  %v1943 = vrot.slane %v1877, 3
  %v1944 = vrot.slane %v1878, 3
  %v1945 = vsel %vm1652, %v1943, %v1944
  %v1946 = vrot.slane %v1879, 3
  %v1947 = vrot.slane %v1880, 3
  %v1948 = vsel %vm1652, %v1946, %v1947
  %v1949 = vrot.slane %v1881, 3
  %v1950 = vrot.slane %v1882, 3
  %v1951 = vsel %vm1652, %v1949, %v1950
  %v1952 = vrot.slane %v1883, 3
  %v1953 = vrot.slane %v1884, 3
  %v1954 = vsel %vm1652, %v1952, %v1953
  %v1969 = vadd.f32 %v1709, %v1915
  %v1970 = vadd.f32 %v1710, %v1918
  %v1971 = vadd.f32 %v1711, %v1921
  %v1972 = vadd.f32 %v1712, %v1924
  %v1973 = vadd.f32 %v1713, %v1927
  %v1974 = vadd.f32 %v1714, %v1930
  %v1975 = vadd.f32 %v1715, %v1933
  %v1976 = vadd.f32 %v1716, %v1936
  %v1977 = vadd.f32 %v1717, %v1939
  %v1978 = vadd.f32 %v1718, %v1942
  %v1979 = vadd.f32 %v1719, %v1945
  %v1980 = vadd.f32 %v1720, %v1948
  %v1981 = vadd.f32 %v1721, %v1951
  %v1982 = vadd.f32 %v1722, %v1954
  %v1983 = vlaneseq
  %v1984 = vshrl.u32 %v1983, 7
  %v1985 = vsub.s32 2, %v1984
  %v1986 = vrot.slane %v277, %v1985
  %v1987 = vmul.f32 %v1554, %v1986
  %v1988 = vmul.f32 %v1555, %v1986
  %v1989 = vmul.f32 %v1556, %v1986
  %v1990 = vmul.f32 %v1557, %v1986
  %v1991 = vmul.f32 %v1558, %v1986
  %v1992 = vmul.f32 %v1559, %v1986
  %v1993 = vmul.f32 %v1560, %v1986
  %v1994 = vmul.f32 %v1561, %v1986
  %v1995 = vmul.f32 %v1562, %v1986
  %v1996 = vmul.f32 %v1563, %v1986
  %v1997 = vmul.f32 %v1564, %v1986
  %v1998 = vmul.f32 %v1565, %v1986
  %v1999 = vmul.f32 %v1566, %v1986
  %v2000 = vmul.f32 %v1567, %v1986
  %v2001 = vmul.f32 %v1576, %v1986
  %v2002 = vmul.f32 %v1577, %v1986
  %v2003 = vmul.f32 %v1578, %v1986
  %v2004 = vmul.f32 %v1579, %v1986
  %v2005 = vmul.f32 %v1580, %v1986
  %v2006 = vmul.f32 %v1581, %v1986
  %v2007 = vmul.f32 %v1582, %v1986
  %v2008 = vmul.f32 %v1583, %v1986
  %v2009 = vmul.f32 %v1584, %v1986
  %v2010 = vmul.f32 %v1585, %v1986
  %v2011 = vmul.f32 %v1586, %v1986
  %v2012 = vmul.f32 %v1587, %v1986
  %v2013 = vmul.f32 %v1588, %v1986
  %v2014 = vmul.f32 %v1589, %v1986
  %v2043 = vrot.slane %v1987, 3
  %v2044 = vrot.slane %v1988, 3
  %v2045 = vsel %vm1652, %v2043, %v2044
  %v2046 = vrot.slane %v1989, 3
  %v2047 = vrot.slane %v1990, 3
  %v2048 = vsel %vm1652, %v2046, %v2047
  %v2049 = vrot.slane %v1991, 3
  %v2050 = vrot.slane %v1992, 3
  %v2051 = vsel %vm1652, %v2049, %v2050
  %v2052 = vrot.slane %v1993, 3
  %v2053 = vrot.slane %v1994, 3
  %v2054 = vsel %vm1652, %v2052, %v2053
  %v2055 = vrot.slane %v1995, 3
  %v2056 = vrot.slane %v1996, 3
  %v2057 = vsel %vm1652, %v2055, %v2056
  %v2058 = vrot.slane %v1997, 3
  %v2059 = vrot.slane %v1998, 3
  %v2060 = vsel %vm1652, %v2058, %v2059
  %v2061 = vrot.slane %v1999, 3
  %v2062 = vrot.slane %v2000, 3
  %v2063 = vsel %vm1652, %v2061, %v2062
  %v2064 = vrot.slane %v2001, 3
  %v2065 = vrot.slane %v2002, 3
  %v2066 = vsel %vm1652, %v2064, %v2065
  %v2067 = vrot.slane %v2003, 3
  %v2068 = vrot.slane %v2004, 3
  %v2069 = vsel %vm1652, %v2067, %v2068
  %v2070 = vrot.slane %v2005, 3
  %v2071 = vrot.slane %v2006, 3
  %v2072 = vsel %vm1652, %v2070, %v2071
  %v2073 = vrot.slane %v2007, 3
  %v2074 = vrot.slane %v2008, 3
  %v2075 = vsel %vm1652, %v2073, %v2074
  %v2076 = vrot.slane %v2009, 3
  %v2077 = vrot.slane %v2010, 3
  %v2078 = vsel %vm1652, %v2076, %v2077
  %v2079 = vrot.slane %v2011, 3
  %v2080 = vrot.slane %v2012, 3
  %v2081 = vsel %vm1652, %v2079, %v2080
  %v2082 = vrot.slane %v2013, 3
  %v2083 = vrot.slane %v2014, 3
  %v2084 = vsel %vm1652, %v2082, %v2083
  %v2099 = vadd.f32 %v1839, %v2045
  %v2100 = vadd.f32 %v1840, %v2048
  %v2101 = vadd.f32 %v1841, %v2051
  %v2102 = vadd.f32 %v1842, %v2054
  %v2103 = vadd.f32 %v1843, %v2057
  %v2104 = vadd.f32 %v1844, %v2060
  %v2105 = vadd.f32 %v1845, %v2063
  %v2106 = vadd.f32 %v1846, %v2066
  %v2107 = vadd.f32 %v1847, %v2069
  %v2108 = vadd.f32 %v1848, %v2072
  %v2109 = vadd.f32 %v1849, %v2075
  %v2110 = vadd.f32 %v1850, %v2078
  %v2111 = vadd.f32 %v1851, %v2081
  %v2112 = vadd.f32 %v1852, %v2084
  %v2113 = vlaneseq
  %v2114 = vshrl.u32 %v2113, 7
  %v2115 = vsub.s32 7, %v2114
  %v2116 = vrot.slane %v277, %v2115
  %v2117 = vmul.f32 %v1556, %v2116
  %v2118 = vmul.f32 %v1557, %v2116
  %v2119 = vmul.f32 %v1558, %v2116
  %v2120 = vmul.f32 %v1559, %v2116
  %v2121 = vmul.f32 %v1560, %v2116
  %v2122 = vmul.f32 %v1561, %v2116
  %v2123 = vmul.f32 %v1562, %v2116
  %v2124 = vmul.f32 %v1563, %v2116
  %v2125 = vmul.f32 %v1564, %v2116
  %v2126 = vmul.f32 %v1565, %v2116
  %v2127 = vmul.f32 %v1566, %v2116
  %v2128 = vmul.f32 %v1567, %v2116
  %v2129 = vmul.f32 %v1568, %v2116
  %v2130 = vmul.f32 %v1569, %v2116
  %v2131 = vmul.f32 %v1578, %v2116
  %v2132 = vmul.f32 %v1579, %v2116
  %v2133 = vmul.f32 %v1580, %v2116
  %v2134 = vmul.f32 %v1581, %v2116
  %v2135 = vmul.f32 %v1582, %v2116
  %v2136 = vmul.f32 %v1583, %v2116
  %v2137 = vmul.f32 %v1584, %v2116
  %v2138 = vmul.f32 %v1585, %v2116
  %v2139 = vmul.f32 %v1586, %v2116
  %v2140 = vmul.f32 %v1587, %v2116
  %v2141 = vmul.f32 %v1588, %v2116
  %v2142 = vmul.f32 %v1589, %v2116
  %v2143 = vmul.f32 %v1590, %v2116
  %v2144 = vmul.f32 %v1591, %v2116
  %v2173 = vrot.slane %v2117, 3
  %v2174 = vrot.slane %v2118, 3
  %v2175 = vsel %vm1652, %v2173, %v2174
  %v2176 = vrot.slane %v2119, 3
  %v2177 = vrot.slane %v2120, 3
  %v2178 = vsel %vm1652, %v2176, %v2177
  %v2179 = vrot.slane %v2121, 3
  %v2180 = vrot.slane %v2122, 3
  %v2181 = vsel %vm1652, %v2179, %v2180
  %v2182 = vrot.slane %v2123, 3
  %v2183 = vrot.slane %v2124, 3
  %v2184 = vsel %vm1652, %v2182, %v2183
  %v2185 = vrot.slane %v2125, 3
  %v2186 = vrot.slane %v2126, 3
  %v2187 = vsel %vm1652, %v2185, %v2186
  %v2188 = vrot.slane %v2127, 3
  %v2189 = vrot.slane %v2128, 3
  %v2190 = vsel %vm1652, %v2188, %v2189
  %v2191 = vrot.slane %v2129, 3
  %v2192 = vrot.slane %v2130, 3
  %v2193 = vsel %vm1652, %v2191, %v2192
  %v2194 = vrot.slane %v2131, 3
  %v2195 = vrot.slane %v2132, 3
  %v2196 = vsel %vm1652, %v2194, %v2195
  %v2197 = vrot.slane %v2133, 3
  %v2198 = vrot.slane %v2134, 3
  %v2199 = vsel %vm1652, %v2197, %v2198
  %v2200 = vrot.slane %v2135, 3
  %v2201 = vrot.slane %v2136, 3
  %v2202 = vsel %vm1652, %v2200, %v2201
  %v2203 = vrot.slane %v2137, 3
  %v2204 = vrot.slane %v2138, 3
  %v2205 = vsel %vm1652, %v2203, %v2204
  %v2206 = vrot.slane %v2139, 3
  %v2207 = vrot.slane %v2140, 3
  %v2208 = vsel %vm1652, %v2206, %v2207
  %v2209 = vrot.slane %v2141, 3
  %v2210 = vrot.slane %v2142, 3
  %v2211 = vsel %vm1652, %v2209, %v2210
  %v2212 = vrot.slane %v2143, 3
  %v2213 = vrot.slane %v2144, 3
  %v2214 = vsel %vm1652, %v2212, %v2213
  %v2229 = vadd.f32 %v1969, %v2175
  %v2230 = vadd.f32 %v1970, %v2178
  %v2231 = vadd.f32 %v1971, %v2181
  %v2232 = vadd.f32 %v1972, %v2184
  %v2233 = vadd.f32 %v1973, %v2187
  %v2234 = vadd.f32 %v1974, %v2190
  %v2235 = vadd.f32 %v1975, %v2193
  %v2236 = vadd.f32 %v1976, %v2196
  %v2237 = vadd.f32 %v1977, %v2199
  %v2238 = vadd.f32 %v1978, %v2202
  %v2239 = vadd.f32 %v1979, %v2205
  %v2240 = vadd.f32 %v1980, %v2208
  %v2241 = vadd.f32 %v1981, %v2211
  %v2242 = vadd.f32 %v1982, %v2214
  %v2243 = vld [vmem:[#allocation2] sm:$0xf0]
  %v2244 = vld [vmem:[#allocation2 + $0x10] sm:$0x7]
  %v2245 = vld [vmem:[#allocation2 + $0x20] sm:$0xf0]
  %v2246 = vld [vmem:[#allocation2 + $0x30] sm:$0x7]
  %v2247 = vld [vmem:[#allocation2 + $0x40] sm:$0xf0]
  %v2248 = vld [vmem:[#allocation2 + $0x50] sm:$0x7]
  %v2249 = vld [vmem:[#allocation2 + $0x60] sm:$0xf0]
  %v2250 = vld [vmem:[#allocation2 + $0x70] sm:$0x7]
  %v2251 = vld [vmem:[#allocation2 + $0x80] sm:$0xf0]
  %v2252 = vld [vmem:[#allocation2 + $0x90] sm:$0x7]
  %v2253 = vld [vmem:[#allocation2 + $0xa0] sm:$0xf0]
  %v2254 = vld [vmem:[#allocation2 + $0xb0] sm:$0x7]
  %v2255 = vld [vmem:[#allocation2 + $0xc0] sm:$0xf0]
  %v2256 = vld [vmem:[#allocation2 + $0xd0] sm:$0x7]
  %v2257 = vld [vmem:[#allocation2 + $0xe0] sm:$0xf0]
  %v2258 = vld [vmem:[#allocation2 + $0xf0] sm:$0x7]
  %v2259 = vld [vmem:[#allocation2 + $0x100] sm:$0xf0]
  %v2260 = vld [vmem:[#allocation2 + $0x110] sm:$0x7]
  %v2261 = vld [vmem:[#allocation2 + $0x120] sm:$0xf0]
  %v2262 = vld [vmem:[#allocation2 + $0x130] sm:$0x7]
  %v2263 = vld [vmem:[#allocation2 + $0x140] sm:$0xf0]
  %v2264 = vld [vmem:[#allocation2 + $0x150] sm:$0x7]
  %v2265 = vld [vmem:[#allocation2 + $0x160] sm:$0xf0]
  %v2266 = vld [vmem:[#allocation2 + $0x170] sm:$0x7]
  %v2267 = vld [vmem:[#allocation2 + $0x180] sm:$0xf0]
  %v2268 = vld [vmem:[#allocation2 + $0x190] sm:$0x7]
  %v2269 = vld [vmem:[#allocation2 + $0x1a0] sm:$0xf0]
  %v2270 = vld [vmem:[#allocation2 + $0x1b0] sm:$0x7]
  %v2271 = vld [vmem:[#allocation2 + $0x1c0] sm:$0xf0]
  %v2272 = vld [vmem:[#allocation2 + $0x1d0] sm:$0x7]
  %v2273 = vld [vmem:[#allocation2 + $0x1e0] sm:$0xf0]
  %v2274 = vld [vmem:[#allocation2 + $0x1f0] sm:$0x7]
  %v2275 = vld [vmem:[#allocation2 + $0x200] sm:$0xf0]
  %v2276 = vld [vmem:[#allocation2 + $0x210] sm:$0x7]
  %v2277 = vld [vmem:[#allocation2 + $0x220] sm:$0xf0]
  %v2278 = vld [vmem:[#allocation2 + $0x230] sm:$0x7]
  %v2279 = vld [vmem:[#allocation2 + $0x240] sm:$0xf0]
  %v2280 = vld [vmem:[#allocation2 + $0x250] sm:$0x7]
  %v2281 = vld [vmem:[#allocation2 + $0x260] sm:$0xf0]
  %v2282 = vld [vmem:[#allocation2 + $0x270] sm:$0x7]
  %v2283 = vld [vmem:[#allocation2 + $0x280] sm:$0xf0]
  %v2284 = vld [vmem:[#allocation2 + $0x290] sm:$0x7]
  %v2285 = vld [vmem:[#allocation2 + $0x2a0] sm:$0xf0]
  %v2286 = vld [vmem:[#allocation2 + $0x2b0] sm:$0x7]
  %v2287 = vlaneseq
  %v2288 = vshrl.u32 %v2287, 7
  %v2289 = vsub.s32 4, %v2288
  %v2290 = vrot.slane %v275, %v2289
  %v2291 = vmul.f32 %v2243, %v2290
  %v2292 = vmul.f32 %v2244, %v2290
  %v2293 = vmul.f32 %v2245, %v2290
  %v2294 = vmul.f32 %v2246, %v2290
  %v2295 = vmul.f32 %v2247, %v2290
  %v2296 = vmul.f32 %v2248, %v2290
  %v2297 = vmul.f32 %v2249, %v2290
  %v2298 = vmul.f32 %v2250, %v2290
  %v2299 = vmul.f32 %v2251, %v2290
  %v2300 = vmul.f32 %v2252, %v2290
  %v2301 = vmul.f32 %v2253, %v2290
  %v2302 = vmul.f32 %v2254, %v2290
  %v2303 = vmul.f32 %v2255, %v2290
  %v2304 = vmul.f32 %v2256, %v2290
  %v2305 = vmul.f32 %v2265, %v2290
  %v2306 = vmul.f32 %v2266, %v2290
  %v2307 = vmul.f32 %v2267, %v2290
  %v2308 = vmul.f32 %v2268, %v2290
  %v2309 = vmul.f32 %v2269, %v2290
  %v2310 = vmul.f32 %v2270, %v2290
  %v2311 = vmul.f32 %v2271, %v2290
  %v2312 = vmul.f32 %v2272, %v2290
  %v2313 = vmul.f32 %v2273, %v2290
  %v2314 = vmul.f32 %v2274, %v2290
  %v2315 = vmul.f32 %v2275, %v2290
  %v2316 = vmul.f32 %v2276, %v2290
  %v2317 = vmul.f32 %v2277, %v2290
  %v2318 = vmul.f32 %v2278, %v2290
  %vm2347 = vcmask 1043456
  %v2348 = vrot.slane %v2291, 4
  %v2349 = vrot.slane %v2292, 4
  %v2350 = vsel %vm2347, %v2348, %v2349
  %v2351 = vrot.slane %v2293, 4
  %v2352 = vrot.slane %v2294, 4
  %v2353 = vsel %vm2347, %v2351, %v2352
  %v2354 = vrot.slane %v2295, 4
  %v2355 = vrot.slane %v2296, 4
  %v2356 = vsel %vm2347, %v2354, %v2355
  %v2357 = vrot.slane %v2297, 4
  %v2358 = vrot.slane %v2298, 4
  %v2359 = vsel %vm2347, %v2357, %v2358
  %v2360 = vrot.slane %v2299, 4
  %v2361 = vrot.slane %v2300, 4
  %v2362 = vsel %vm2347, %v2360, %v2361
  %v2363 = vrot.slane %v2301, 4
  %v2364 = vrot.slane %v2302, 4
  %v2365 = vsel %vm2347, %v2363, %v2364
  %v2366 = vrot.slane %v2303, 4
  %v2367 = vrot.slane %v2304, 4
  %v2368 = vsel %vm2347, %v2366, %v2367
  %v2369 = vrot.slane %v2305, 4
  %v2370 = vrot.slane %v2306, 4
  %v2371 = vsel %vm2347, %v2369, %v2370
  %v2372 = vrot.slane %v2307, 4
  %v2373 = vrot.slane %v2308, 4
  %v2374 = vsel %vm2347, %v2372, %v2373
  %v2375 = vrot.slane %v2309, 4
  %v2376 = vrot.slane %v2310, 4
  %v2377 = vsel %vm2347, %v2375, %v2376
  %v2378 = vrot.slane %v2311, 4
  %v2379 = vrot.slane %v2312, 4
  %v2380 = vsel %vm2347, %v2378, %v2379
  %v2381 = vrot.slane %v2313, 4
  %v2382 = vrot.slane %v2314, 4
  %v2383 = vsel %vm2347, %v2381, %v2382
  %v2384 = vrot.slane %v2315, 4
  %v2385 = vrot.slane %v2316, 4
  %v2386 = vsel %vm2347, %v2384, %v2385
  %v2387 = vrot.slane %v2317, 4
  %v2388 = vrot.slane %v2318, 4
  %v2389 = vsel %vm2347, %v2387, %v2388
  %v2404 = vadd.f32 %v2099, %v2350
  %v2405 = vadd.f32 %v2100, %v2353
  %v2406 = vadd.f32 %v2101, %v2356
  %v2407 = vadd.f32 %v2102, %v2359
  %v2408 = vadd.f32 %v2103, %v2362
  %v2409 = vadd.f32 %v2104, %v2365
  %v2410 = vadd.f32 %v2105, %v2368
  %v2411 = vadd.f32 %v2106, %v2371
  %v2412 = vadd.f32 %v2107, %v2374
  %v2413 = vadd.f32 %v2108, %v2377
  %v2414 = vadd.f32 %v2109, %v2380
  %v2415 = vadd.f32 %v2110, %v2383
  %v2416 = vadd.f32 %v2111, %v2386
  %v2417 = vadd.f32 %v2112, %v2389
  %v2418 = vlaneseq
  %v2419 = vshrl.u32 %v2418, 7
  %v2420 = vsub.s32 1, %v2419
  %v2421 = vrot.slane %v276, %v2420
  %v2422 = vmul.f32 %v2245, %v2421
  %v2423 = vmul.f32 %v2246, %v2421
  %v2424 = vmul.f32 %v2247, %v2421
  %v2425 = vmul.f32 %v2248, %v2421
  %v2426 = vmul.f32 %v2249, %v2421
  %v2427 = vmul.f32 %v2250, %v2421
  %v2428 = vmul.f32 %v2251, %v2421
  %v2429 = vmul.f32 %v2252, %v2421
  %v2430 = vmul.f32 %v2253, %v2421
  %v2431 = vmul.f32 %v2254, %v2421
  %v2432 = vmul.f32 %v2255, %v2421
  %v2433 = vmul.f32 %v2256, %v2421
  %v2434 = vmul.f32 %v2257, %v2421
  %v2435 = vmul.f32 %v2258, %v2421
  %v2436 = vmul.f32 %v2267, %v2421
  %v2437 = vmul.f32 %v2268, %v2421
  %v2438 = vmul.f32 %v2269, %v2421
  %v2439 = vmul.f32 %v2270, %v2421
  %v2440 = vmul.f32 %v2271, %v2421
  %v2441 = vmul.f32 %v2272, %v2421
  %v2442 = vmul.f32 %v2273, %v2421
  %v2443 = vmul.f32 %v2274, %v2421
  %v2444 = vmul.f32 %v2275, %v2421
  %v2445 = vmul.f32 %v2276, %v2421
  %v2446 = vmul.f32 %v2277, %v2421
  %v2447 = vmul.f32 %v2278, %v2421
  %v2448 = vmul.f32 %v2279, %v2421
  %v2449 = vmul.f32 %v2280, %v2421
  %v2478 = vrot.slane %v2422, 4
  %v2479 = vrot.slane %v2423, 4
  %v2480 = vsel %vm2347, %v2478, %v2479
  %v2481 = vrot.slane %v2424, 4
  %v2482 = vrot.slane %v2425, 4
  %v2483 = vsel %vm2347, %v2481, %v2482
  %v2484 = vrot.slane %v2426, 4
  %v2485 = vrot.slane %v2427, 4
  %v2486 = vsel %vm2347, %v2484, %v2485
  %v2487 = vrot.slane %v2428, 4
  %v2488 = vrot.slane %v2429, 4
  %v2489 = vsel %vm2347, %v2487, %v2488
  %v2490 = vrot.slane %v2430, 4
  %v2491 = vrot.slane %v2431, 4
  %v2492 = vsel %vm2347, %v2490, %v2491
  %v2493 = vrot.slane %v2432, 4
  %v2494 = vrot.slane %v2433, 4
  %v2495 = vsel %vm2347, %v2493, %v2494
  %v2496 = vrot.slane %v2434, 4
  %v2497 = vrot.slane %v2435, 4
  %v2498 = vsel %vm2347, %v2496, %v2497
  %v2499 = vrot.slane %v2436, 4
  %v2500 = vrot.slane %v2437, 4
  %v2501 = vsel %vm2347, %v2499, %v2500
  %v2502 = vrot.slane %v2438, 4
  %v2503 = vrot.slane %v2439, 4
  %v2504 = vsel %vm2347, %v2502, %v2503
  %v2505 = vrot.slane %v2440, 4
  %v2506 = vrot.slane %v2441, 4
  %v2507 = vsel %vm2347, %v2505, %v2506
  %v2508 = vrot.slane %v2442, 4
  %v2509 = vrot.slane %v2443, 4
  %v2510 = vsel %vm2347, %v2508, %v2509
  %v2511 = vrot.slane %v2444, 4
  %v2512 = vrot.slane %v2445, 4
  %v2513 = vsel %vm2347, %v2511, %v2512
  %v2514 = vrot.slane %v2446, 4
  %v2515 = vrot.slane %v2447, 4
  %v2516 = vsel %vm2347, %v2514, %v2515
  %v2517 = vrot.slane %v2448, 4
  %v2518 = vrot.slane %v2449, 4
  %v2519 = vsel %vm2347, %v2517, %v2518
  %v2534 = vadd.f32 %v2229, %v2480
  %v2535 = vadd.f32 %v2230, %v2483
  %v2536 = vadd.f32 %v2231, %v2486
  %v2537 = vadd.f32 %v2232, %v2489
  %v2538 = vadd.f32 %v2233, %v2492
  %v2539 = vadd.f32 %v2234, %v2495
  %v2540 = vadd.f32 %v2235, %v2498
  %v2541 = vadd.f32 %v2236, %v2501
  %v2542 = vadd.f32 %v2237, %v2504
  %v2543 = vadd.f32 %v2238, %v2507
  %v2544 = vadd.f32 %v2239, %v2510
  %v2545 = vadd.f32 %v2240, %v2513
  %v2546 = vadd.f32 %v2241, %v2516
  %v2547 = vadd.f32 %v2242, %v2519
  %v2548 = vlaneseq
  %v2549 = vshrl.u32 %v2548, 7
  %v2550 = vsub.s32 6, %v2549
  %v2551 = vrot.slane %v276, %v2550
  %v2552 = vmul.f32 %v2247, %v2551
  %v2553 = vmul.f32 %v2248, %v2551
  %v2554 = vmul.f32 %v2249, %v2551
  %v2555 = vmul.f32 %v2250, %v2551
  %v2556 = vmul.f32 %v2251, %v2551
  %v2557 = vmul.f32 %v2252, %v2551
  %v2558 = vmul.f32 %v2253, %v2551
  %v2559 = vmul.f32 %v2254, %v2551
  %v2560 = vmul.f32 %v2255, %v2551
  %v2561 = vmul.f32 %v2256, %v2551
  %v2562 = vmul.f32 %v2257, %v2551
  %v2563 = vmul.f32 %v2258, %v2551
  %v2564 = vmul.f32 %v2259, %v2551
  %v2565 = vmul.f32 %v2260, %v2551
  %v2566 = vmul.f32 %v2269, %v2551
  %v2567 = vmul.f32 %v2270, %v2551
  %v2568 = vmul.f32 %v2271, %v2551
  %v2569 = vmul.f32 %v2272, %v2551
  %v2570 = vmul.f32 %v2273, %v2551
  %v2571 = vmul.f32 %v2274, %v2551
  %v2572 = vmul.f32 %v2275, %v2551
  %v2573 = vmul.f32 %v2276, %v2551
  %v2574 = vmul.f32 %v2277, %v2551
  %v2575 = vmul.f32 %v2278, %v2551
  %v2576 = vmul.f32 %v2279, %v2551
  %v2577 = vmul.f32 %v2280, %v2551
  %v2578 = vmul.f32 %v2281, %v2551
  %v2579 = vmul.f32 %v2282, %v2551
  %v2608 = vrot.slane %v2552, 4
  %v2609 = vrot.slane %v2553, 4
  %v2610 = vsel %vm2347, %v2608, %v2609
  %v2611 = vrot.slane %v2554, 4
  %v2612 = vrot.slane %v2555, 4
  %v2613 = vsel %vm2347, %v2611, %v2612
  %v2614 = vrot.slane %v2556, 4
  %v2615 = vrot.slane %v2557, 4
  %v2616 = vsel %vm2347, %v2614, %v2615
  %v2617 = vrot.slane %v2558, 4
  %v2618 = vrot.slane %v2559, 4
  %v2619 = vsel %vm2347, %v2617, %v2618
  %v2620 = vrot.slane %v2560, 4
  %v2621 = vrot.slane %v2561, 4
  %v2622 = vsel %vm2347, %v2620, %v2621
  %v2623 = vrot.slane %v2562, 4
  %v2624 = vrot.slane %v2563, 4
  %v2625 = vsel %vm2347, %v2623, %v2624
  %v2626 = vrot.slane %v2564, 4
  %v2627 = vrot.slane %v2565, 4
  %v2628 = vsel %vm2347, %v2626, %v2627
  %v2629 = vrot.slane %v2566, 4
  %v2630 = vrot.slane %v2567, 4
  %v2631 = vsel %vm2347, %v2629, %v2630
  %v2632 = vrot.slane %v2568, 4
  %v2633 = vrot.slane %v2569, 4
  %v2634 = vsel %vm2347, %v2632, %v2633
  %v2635 = vrot.slane %v2570, 4
  %v2636 = vrot.slane %v2571, 4
  %v2637 = vsel %vm2347, %v2635, %v2636
  %v2638 = vrot.slane %v2572, 4
  %v2639 = vrot.slane %v2573, 4
  %v2640 = vsel %vm2347, %v2638, %v2639
  %v2641 = vrot.slane %v2574, 4
  %v2642 = vrot.slane %v2575, 4
  %v2643 = vsel %vm2347, %v2641, %v2642
  %v2644 = vrot.slane %v2576, 4
  %v2645 = vrot.slane %v2577, 4
  %v2646 = vsel %vm2347, %v2644, %v2645
  %v2647 = vrot.slane %v2578, 4
  %v2648 = vrot.slane %v2579, 4
  %v2649 = vsel %vm2347, %v2647, %v2648
  %v2664 = vadd.f32 %v2404, %v2610
  %v2665 = vadd.f32 %v2405, %v2613
  %v2666 = vadd.f32 %v2406, %v2616
  %v2667 = vadd.f32 %v2407, %v2619
  %v2668 = vadd.f32 %v2408, %v2622
  %v2669 = vadd.f32 %v2409, %v2625
  %v2670 = vadd.f32 %v2410, %v2628
  %v2671 = vadd.f32 %v2411, %v2631
  %v2672 = vadd.f32 %v2412, %v2634
  %v2673 = vadd.f32 %v2413, %v2637
  %v2674 = vadd.f32 %v2414, %v2640
  %v2675 = vadd.f32 %v2415, %v2643
  %v2676 = vadd.f32 %v2416, %v2646
  %v2677 = vadd.f32 %v2417, %v2649
  %v2678 = vlaneseq
  %v2679 = vshrl.u32 %v2678, 7
  %v2680 = vsub.s32 3, %v2679
  %v2681 = vrot.slane %v277, %v2680
  %v2682 = vmul.f32 %v2249, %v2681
  %v2683 = vmul.f32 %v2250, %v2681
  %v2684 = vmul.f32 %v2251, %v2681
  %v2685 = vmul.f32 %v2252, %v2681
  %v2686 = vmul.f32 %v2253, %v2681
  %v2687 = vmul.f32 %v2254, %v2681
  %v2688 = vmul.f32 %v2255, %v2681
  %v2689 = vmul.f32 %v2256, %v2681
  %v2690 = vmul.f32 %v2257, %v2681
  %v2691 = vmul.f32 %v2258, %v2681
  %v2692 = vmul.f32 %v2259, %v2681
  %v2693 = vmul.f32 %v2260, %v2681
  %v2694 = vmul.f32 %v2261, %v2681
  %v2695 = vmul.f32 %v2262, %v2681
  %v2696 = vmul.f32 %v2271, %v2681
  %v2697 = vmul.f32 %v2272, %v2681
  %v2698 = vmul.f32 %v2273, %v2681
  %v2699 = vmul.f32 %v2274, %v2681
  %v2700 = vmul.f32 %v2275, %v2681
  %v2701 = vmul.f32 %v2276, %v2681
  %v2702 = vmul.f32 %v2277, %v2681
  %v2703 = vmul.f32 %v2278, %v2681
  %v2704 = vmul.f32 %v2279, %v2681
  %v2705 = vmul.f32 %v2280, %v2681
  %v2706 = vmul.f32 %v2281, %v2681
  %v2707 = vmul.f32 %v2282, %v2681
  %v2708 = vmul.f32 %v2283, %v2681
  %v2709 = vmul.f32 %v2284, %v2681
  %v2738 = vrot.slane %v2682, 4
  %v2739 = vrot.slane %v2683, 4
  %v2740 = vsel %vm2347, %v2738, %v2739
  %v2741 = vrot.slane %v2684, 4
  %v2742 = vrot.slane %v2685, 4
  %v2743 = vsel %vm2347, %v2741, %v2742
  %v2744 = vrot.slane %v2686, 4
  %v2745 = vrot.slane %v2687, 4
  %v2746 = vsel %vm2347, %v2744, %v2745
  %v2747 = vrot.slane %v2688, 4
  %v2748 = vrot.slane %v2689, 4
  %v2749 = vsel %vm2347, %v2747, %v2748
  %v2750 = vrot.slane %v2690, 4
  %v2751 = vrot.slane %v2691, 4
  %v2752 = vsel %vm2347, %v2750, %v2751
  %v2753 = vrot.slane %v2692, 4
  %v2754 = vrot.slane %v2693, 4
  %v2755 = vsel %vm2347, %v2753, %v2754
  %v2756 = vrot.slane %v2694, 4
  %v2757 = vrot.slane %v2695, 4
  %v2758 = vsel %vm2347, %v2756, %v2757
  %v2759 = vrot.slane %v2696, 4
  %v2760 = vrot.slane %v2697, 4
  %v2761 = vsel %vm2347, %v2759, %v2760
  %v2762 = vrot.slane %v2698, 4
  %v2763 = vrot.slane %v2699, 4
  %v2764 = vsel %vm2347, %v2762, %v2763
  %v2765 = vrot.slane %v2700, 4
  %v2766 = vrot.slane %v2701, 4
  %v2767 = vsel %vm2347, %v2765, %v2766
  %v2768 = vrot.slane %v2702, 4
  %v2769 = vrot.slane %v2703, 4
  %v2770 = vsel %vm2347, %v2768, %v2769
  %v2771 = vrot.slane %v2704, 4
  %v2772 = vrot.slane %v2705, 4
  %v2773 = vsel %vm2347, %v2771, %v2772
  %v2774 = vrot.slane %v2706, 4
  %v2775 = vrot.slane %v2707, 4
  %v2776 = vsel %vm2347, %v2774, %v2775
  %v2777 = vrot.slane %v2708, 4
  %v2778 = vrot.slane %v2709, 4
  %v2779 = vsel %vm2347, %v2777, %v2778
  %v2794 = vadd.f32 %v2534, %v2740
  %v2795 = vadd.f32 %v2535, %v2743
  %v2796 = vadd.f32 %v2536, %v2746
  %v2797 = vadd.f32 %v2537, %v2749
  %v2798 = vadd.f32 %v2538, %v2752
  %v2799 = vadd.f32 %v2539, %v2755
  %v2800 = vadd.f32 %v2540, %v2758
  %v2801 = vadd.f32 %v2541, %v2761
  %v2802 = vadd.f32 %v2542, %v2764
  %v2803 = vadd.f32 %v2543, %v2767
  %v2804 = vadd.f32 %v2544, %v2770
  %v2805 = vadd.f32 %v2545, %v2773
  %v2806 = vadd.f32 %v2546, %v2776
  %v2807 = vadd.f32 %v2547, %v2779
  %v2808 = vlaneseq
  %v2809 = vshrl.u32 %v2808, 7
  %v2810 = vsub.s32 0, %v2809
  %v2811 = vrot.slane %v278, %v2810
  %v2812 = vmul.f32 %v2251, %v2811
  %v2813 = vmul.f32 %v2252, %v2811
  %v2814 = vmul.f32 %v2253, %v2811
  %v2815 = vmul.f32 %v2254, %v2811
  %v2816 = vmul.f32 %v2255, %v2811
  %v2817 = vmul.f32 %v2256, %v2811
  %v2818 = vmul.f32 %v2257, %v2811
  %v2819 = vmul.f32 %v2258, %v2811
  %v2820 = vmul.f32 %v2259, %v2811
  %v2821 = vmul.f32 %v2260, %v2811
  %v2822 = vmul.f32 %v2261, %v2811
  %v2823 = vmul.f32 %v2262, %v2811
  %v2824 = vmul.f32 %v2263, %v2811
  %v2825 = vmul.f32 %v2264, %v2811
  %v2826 = vmul.f32 %v2273, %v2811
  %v2827 = vmul.f32 %v2274, %v2811
  %v2828 = vmul.f32 %v2275, %v2811
  %v2829 = vmul.f32 %v2276, %v2811
  %v2830 = vmul.f32 %v2277, %v2811
  %v2831 = vmul.f32 %v2278, %v2811
  %v2832 = vmul.f32 %v2279, %v2811
  %v2833 = vmul.f32 %v2280, %v2811
  %v2834 = vmul.f32 %v2281, %v2811
  %v2835 = vmul.f32 %v2282, %v2811
  %v2836 = vmul.f32 %v2283, %v2811
  %v2837 = vmul.f32 %v2284, %v2811
  %v2838 = vmul.f32 %v2285, %v2811
  %v2839 = vmul.f32 %v2286, %v2811
  %v2868 = vrot.slane %v2812, 4
  %v2869 = vrot.slane %v2813, 4
  %v2870 = vsel %vm2347, %v2868, %v2869
  %v2871 = vrot.slane %v2814, 4
  %v2872 = vrot.slane %v2815, 4
  %v2873 = vsel %vm2347, %v2871, %v2872
  %v2874 = vrot.slane %v2816, 4
  %v2875 = vrot.slane %v2817, 4
  %v2876 = vsel %vm2347, %v2874, %v2875
  %v2877 = vrot.slane %v2818, 4
  %v2878 = vrot.slane %v2819, 4
  %v2879 = vsel %vm2347, %v2877, %v2878
  %v2880 = vrot.slane %v2820, 4
  %v2881 = vrot.slane %v2821, 4
  %v2882 = vsel %vm2347, %v2880, %v2881
  %v2883 = vrot.slane %v2822, 4
  %v2884 = vrot.slane %v2823, 4
  %v2885 = vsel %vm2347, %v2883, %v2884
  %v2886 = vrot.slane %v2824, 4
  %v2887 = vrot.slane %v2825, 4
  %v2888 = vsel %vm2347, %v2886, %v2887
  %v2889 = vrot.slane %v2826, 4
  %v2890 = vrot.slane %v2827, 4
  %v2891 = vsel %vm2347, %v2889, %v2890
  %v2892 = vrot.slane %v2828, 4
  %v2893 = vrot.slane %v2829, 4
  %v2894 = vsel %vm2347, %v2892, %v2893
  %v2895 = vrot.slane %v2830, 4
  %v2896 = vrot.slane %v2831, 4
  %v2897 = vsel %vm2347, %v2895, %v2896
  %v2898 = vrot.slane %v2832, 4
  %v2899 = vrot.slane %v2833, 4
  %v2900 = vsel %vm2347, %v2898, %v2899
  %v2901 = vrot.slane %v2834, 4
  %v2902 = vrot.slane %v2835, 4
  %v2903 = vsel %vm2347, %v2901, %v2902
  %v2904 = vrot.slane %v2836, 4
  %v2905 = vrot.slane %v2837, 4
  %v2906 = vsel %vm2347, %v2904, %v2905
  %v2907 = vrot.slane %v2838, 4
  %v2908 = vrot.slane %v2839, 4
  %v2909 = vsel %vm2347, %v2907, %v2908
  %v2924 = vadd.f32 %v2664, %v2870
  %v2925 = vadd.f32 %v2665, %v2873
  %v2926 = vadd.f32 %v2666, %v2876
  %v2927 = vadd.f32 %v2667, %v2879
  %v2928 = vadd.f32 %v2668, %v2882
  %v2929 = vadd.f32 %v2669, %v2885
  %v2930 = vadd.f32 %v2670, %v2888
  %v2931 = vadd.f32 %v2671, %v2891
  %v2932 = vadd.f32 %v2672, %v2894
  %v2933 = vadd.f32 %v2673, %v2897
  %v2934 = vadd.f32 %v2674, %v2900
  %v2935 = vadd.f32 %v2675, %v2903
  %v2936 = vadd.f32 %v2676, %v2906
  %v2937 = vadd.f32 %v2677, %v2909
  %v2938 = vadd.f32 %v2924, %v2794
  %v2939 = vadd.f32 %v2925, %v2795
  %v2940 = vadd.f32 %v2926, %v2796
  %v2941 = vadd.f32 %v2927, %v2797
  %v2942 = vadd.f32 %v2928, %v2798
  %v2943 = vadd.f32 %v2929, %v2799
  %v2944 = vadd.f32 %v2930, %v2800
  %v2945 = vadd.f32 %v2931, %v2801
  %v2946 = vadd.f32 %v2932, %v2802
  %v2947 = vadd.f32 %v2933, %v2803
  %v2948 = vadd.f32 %v2934, %v2804
  %v2949 = vadd.f32 %v2935, %v2805
  %v2950 = vadd.f32 %v2936, %v2806
  %v2951 = vadd.f32 %v2937, %v2807
  %vm2952 = vcmask 1046528
  %v2953 = vsel %vm2952, %v2938, 0.0
  %v2954 = vsel %vm2952, %v2939, 0.0
  %v2955 = vadd.f32 %v2953, %v2954
  %v2956 = vsel %vm2952, %v2940, 0.0
  %v2957 = vadd.f32 %v2955, %v2956
  %v2958 = vsel %vm2952, %v2941, 0.0
  %v2959 = vadd.f32 %v2957, %v2958
  %v2960 = vsel %vm2952, %v2942, 0.0
  %v2961 = vadd.f32 %v2959, %v2960
  %v2962 = vsel %vm2952, %v2943, 0.0
  %v2963 = vadd.f32 %v2961, %v2962
  %v2964 = vsel %vm2952, %v2944, 0.0
  %v2965 = vadd.f32 %v2963, %v2964
  %v2966 = vsel %vm2952, %v2945, 0.0
  %v2967 = vadd.f32 %v2965, %v2966
  %v2968 = vsel %vm2952, %v2946, 0.0
  %v2969 = vadd.f32 %v2967, %v2968
  %v2970 = vsel %vm2952, %v2947, 0.0
  %v2971 = vadd.f32 %v2969, %v2970
  %v2972 = vsel %vm2952, %v2948, 0.0
  %v2973 = vadd.f32 %v2971, %v2972
  %v2974 = vsel %vm2952, %v2949, 0.0
  %v2975 = vadd.f32 %v2973, %v2974
  %v2976 = vsel %vm2952, %v2950, 0.0
  %v2977 = vadd.f32 %v2975, %v2976
  %v2978 = vsel %vm2952, %v2951, 0.0
  %v2979 = vadd.f32 %v2977, %v2978
  %v2980 = vrot.slane %v2979, 4
  %v2981 = vadd.f32 %v2979, %v2980
  %v2982 = vrot.slane %v2981, 2
  %v2983 = vadd.f32 %v2981, %v2982
  %v2984 = vrot.slane %v2983, 1
  %v2985 = vadd.f32 %v2983, %v2984
  %v2986 = vmul.f32 %v2985, 0.010204081
  %v2987 = vsub.f32 %v2938, %v2986
  %v2988 = vsub.f32 %v2939, %v2986
  %v2989 = vsub.f32 %v2940, %v2986
  %v2990 = vsub.f32 %v2941, %v2986
  %v2991 = vsub.f32 %v2942, %v2986
  %v2992 = vsub.f32 %v2943, %v2986
  %v2993 = vsub.f32 %v2944, %v2986
  %v2994 = vsub.f32 %v2945, %v2986
  %v2995 = vsub.f32 %v2946, %v2986
  %v2996 = vsub.f32 %v2947, %v2986
  %v2997 = vsub.f32 %v2948, %v2986
  %v2998 = vsub.f32 %v2949, %v2986
  %v2999 = vsub.f32 %v2950, %v2986
  %v3000 = vsub.f32 %v2951, %v2986
  %v3001 = vmul.f32 %v2987, %v2987
  %v3002 = vmul.f32 %v2988, %v2988
  %v3003 = vmul.f32 %v2989, %v2989
  %v3004 = vmul.f32 %v2990, %v2990
  %v3005 = vmul.f32 %v2991, %v2991
  %v3006 = vmul.f32 %v2992, %v2992
  %v3007 = vmul.f32 %v2993, %v2993
  %v3008 = vmul.f32 %v2994, %v2994
  %v3009 = vmul.f32 %v2995, %v2995
  %v3010 = vmul.f32 %v2996, %v2996
  %v3011 = vmul.f32 %v2997, %v2997
  %v3012 = vmul.f32 %v2998, %v2998
  %v3013 = vmul.f32 %v2999, %v2999
  %v3014 = vmul.f32 %v3000, %v3000
  %v3015 = vsel %vm2952, %v3001, 0.0
  %v3016 = vsel %vm2952, %v3002, 0.0
  %v3017 = vadd.f32 %v3015, %v3016
  %v3018 = vsel %vm2952, %v3003, 0.0
  %v3019 = vadd.f32 %v3017, %v3018
  %v3020 = vsel %vm2952, %v3004, 0.0
  %v3021 = vadd.f32 %v3019, %v3020
  %v3022 = vsel %vm2952, %v3005, 0.0
  %v3023 = vadd.f32 %v3021, %v3022
  %v3024 = vsel %vm2952, %v3006, 0.0
  %v3025 = vadd.f32 %v3023, %v3024
  %v3026 = vsel %vm2952, %v3007, 0.0
  %v3027 = vadd.f32 %v3025, %v3026
  %v3028 = vsel %vm2952, %v3008, 0.0
  %v3029 = vadd.f32 %v3027, %v3028
  %v3030 = vsel %vm2952, %v3009, 0.0
  %v3031 = vadd.f32 %v3029, %v3030
  %v3032 = vsel %vm2952, %v3010, 0.0
  %v3033 = vadd.f32 %v3031, %v3032
  %v3034 = vsel %vm2952, %v3011, 0.0
  %v3035 = vadd.f32 %v3033, %v3034
  %v3036 = vsel %vm2952, %v3012, 0.0
  %v3037 = vadd.f32 %v3035, %v3036
  %v3038 = vsel %vm2952, %v3013, 0.0
  %v3039 = vadd.f32 %v3037, %v3038
  %v3040 = vsel %vm2952, %v3014, 0.0
  %v3041 = vadd.f32 %v3039, %v3040
  %v3042 = vrot.slane %v3041, 4
  %v3043 = vadd.f32 %v3041, %v3042
  %v3044 = vrot.slane %v3043, 2
  %v3045 = vadd.f32 %v3043, %v3044
  %v3046 = vrot.slane %v3045, 1
  %v3047 = vadd.f32 %v3045, %v3046
  %v3048 = vmul.f32 %v3047, 0.010204081
  %v3049 = vadd.f32 %v3048, 0.001
  %v3050 = vrsqrt.pop %v3049
  %v3051 = vld [vmem:[%s2] sm:$0x1]
  %v3052 = vld [vmem:[%s3] sm:$0x1]
  %v3053 = vmul.f32 %v3050, %v3051
  %v3054 = vlaneseq
  %v3055 = vshrl.u32 %v3054, 7
  %v3056 = vsub.s32 0, %v3055
  %v3057 = vrot.slane %v3053, %v3056
  %v3058 = vmul.f32 %v2987, %v3057
  %v3059 = vmul.f32 %v2988, %v3057
  %v3060 = vmul.f32 %v2989, %v3057
  %v3061 = vmul.f32 %v2990, %v3057
  %v3062 = vmul.f32 %v2991, %v3057
  %v3063 = vmul.f32 %v2992, %v3057
  %v3064 = vmul.f32 %v2993, %v3057
  %v3065 = vmul.f32 %v2994, %v3057
  %v3066 = vmul.f32 %v2995, %v3057
  %v3067 = vmul.f32 %v2996, %v3057
  %v3068 = vmul.f32 %v2997, %v3057
  %v3069 = vmul.f32 %v2998, %v3057
  %v3070 = vmul.f32 %v2999, %v3057
  %v3071 = vmul.f32 %v3000, %v3057
  %v3073 = vlaneseq
  %v3074 = vshrl.u32 %v3073, 7
  %v3075 = vsub.s32 0, %v3074
  %v3076 = vrot.slane %v3052, %v3075
  %v3078 = vadd.f32 %v3058, %v3076
  %v3079 = vadd.f32 %v3059, %v3076
  %v3080 = vadd.f32 %v3060, %v3076
  %v3081 = vadd.f32 %v3061, %v3076
  %v3082 = vadd.f32 %v3062, %v3076
  %v3083 = vadd.f32 %v3063, %v3076
  %v3084 = vadd.f32 %v3064, %v3076
  %v3085 = vadd.f32 %v3065, %v3076
  %v3086 = vadd.f32 %v3066, %v3076
  %v3087 = vadd.f32 %v3067, %v3076
  %v3088 = vadd.f32 %v3068, %v3076
  %v3089 = vadd.f32 %v3069, %v3076
  %v3090 = vadd.f32 %v3070, %v3076
  %v3091 = vadd.f32 %v3071, %v3076
  %3092 = vst [vmem:[%s4] sm:$0x7f] %v3078
  %3093 = vst [vmem:[%s4 + $0x10] sm:$0x7f] %v3079
  %3094 = vst [vmem:[%s4 + $0x20] sm:$0x7f] %v3080
  %3095 = vst [vmem:[%s4 + $0x30] sm:$0x7f] %v3081
  %3096 = vst [vmem:[%s4 + $0x40] sm:$0x7f] %v3082
  %3097 = vst [vmem:[%s4 + $0x50] sm:$0x7f] %v3083
  %3098 = vst [vmem:[%s4 + $0x60] sm:$0x7f] %v3084
  %3099 = vst [vmem:[%s4 + $0x70] sm:$0x7f] %v3085
  %3100 = vst [vmem:[%s4 + $0x80] sm:$0x7f] %v3086
  %3101 = vst [vmem:[%s4 + $0x90] sm:$0x7f] %v3087
  %3102 = vst [vmem:[%s4 + $0xa0] sm:$0x7f] %v3088
  %3103 = vst [vmem:[%s4 + $0xb0] sm:$0x7f] %v3089
  %3104 = vst [vmem:[%s4 + $0xc0] sm:$0x7f] %v3090
  %3105 = vst [vmem:[%s4 + $0xd0] sm:$0x7f] %v3091
  %v3106 = vld [vmem:[%s1 + $0x8] sm:$0xff]
  %v3107 = vld [vmem:[%s1 + $0x18] sm:$0xff]
  %v3108 = vld [vmem:[%s1 + $0x28] sm:$0xff]
  %v3109 = vld [vmem:[%s1 + $0x38] sm:$0x1]
  %v3110 = vld [vmem:[#allocation2 + $0x8] sm:$0x7f]
  %v3111 = vld [vmem:[#allocation2 + $0x28] sm:$0x7f]
  %v3112 = vld [vmem:[#allocation2 + $0x48] sm:$0x7f]
  %v3113 = vld [vmem:[#allocation2 + $0x68] sm:$0x7f]
  %v3114 = vld [vmem:[#allocation2 + $0x88] sm:$0x7f]
  %v3115 = vld [vmem:[#allocation2 + $0xa8] sm:$0x7f]
  %v3116 = vld [vmem:[#allocation2 + $0xc8] sm:$0x7f]
  %v3117 = vld [vmem:[#allocation2 + $0xe8] sm:$0x7f]
  %v3118 = vld [vmem:[#allocation2 + $0x108] sm:$0x7f]
  %v3119 = vld [vmem:[#allocation2 + $0x128] sm:$0x7f]
  %v3120 = vld [vmem:[#allocation2 + $0x148] sm:$0x7f]
  %v3121 = vld [vmem:[#allocation2 + $0x168] sm:$0x7f]
  %v3122 = vld [vmem:[#allocation2 + $0x188] sm:$0x7f]
  %v3123 = vld [vmem:[#allocation2 + $0x1a8] sm:$0x7f]
  %v3124 = vld [vmem:[#allocation2 + $0x1c8] sm:$0x7f]
  %v3125 = vld [vmem:[#allocation2 + $0x1e8] sm:$0x7f]
  %v3126 = vld [vmem:[#allocation2 + $0x208] sm:$0x7f]
  %v3127 = vld [vmem:[#allocation2 + $0x228] sm:$0x7f]
  %v3128 = vld [vmem:[#allocation2 + $0x248] sm:$0x7f]
  %v3129 = vld [vmem:[#allocation2 + $0x268] sm:$0x7f]
  %v3130 = vld [vmem:[#allocation2 + $0x288] sm:$0x7f]
  %v3131 = vld [vmem:[#allocation2 + $0x2a8] sm:$0x7f]
  %v3132 = vlaneseq
  %v3133 = vshrl.u32 %v3132, 7
  %v3134 = vsub.s32 0, %v3133
  %v3135 = vrot.slane %v3106, %v3134
  %v3136 = vmul.f32 %v3110, %v3135
  %v3137 = vmul.f32 %v3111, %v3135
  %v3138 = vmul.f32 %v3112, %v3135
  %v3139 = vmul.f32 %v3113, %v3135
  %v3140 = vmul.f32 %v3114, %v3135
  %v3141 = vmul.f32 %v3115, %v3135
  %v3142 = vmul.f32 %v3116, %v3135
  %v3143 = vmul.f32 %v3121, %v3135
  %v3144 = vmul.f32 %v3122, %v3135
  %v3145 = vmul.f32 %v3123, %v3135
  %v3146 = vmul.f32 %v3124, %v3135
  %v3147 = vmul.f32 %v3125, %v3135
  %v3148 = vmul.f32 %v3126, %v3135
  %v3149 = vmul.f32 %v3127, %v3135
  %v3150 = vadd.f32 %v3136, 0.0
  %v3151 = vadd.f32 %v3137, 0.0
  %v3152 = vadd.f32 %v3138, 0.0
  %v3153 = vadd.f32 %v3139, 0.0
  %v3154 = vadd.f32 %v3140, 0.0
  %v3155 = vadd.f32 %v3141, 0.0
  %v3156 = vadd.f32 %v3142, 0.0
  %v3157 = vadd.f32 %v3143, 0.0
  %v3158 = vadd.f32 %v3144, 0.0
  %v3159 = vadd.f32 %v3145, 0.0
  %v3160 = vadd.f32 %v3146, 0.0
  %v3161 = vadd.f32 %v3147, 0.0
  %v3162 = vadd.f32 %v3148, 0.0
  %v3163 = vadd.f32 %v3149, 0.0
  %v3164 = vlaneseq
  %v3165 = vshrl.u32 %v3164, 7
  %v3166 = vsub.s32 5, %v3165
  %v3167 = vrot.slane %v3106, %v3166
  %v3168 = vmul.f32 %v3111, %v3167
  %v3169 = vmul.f32 %v3112, %v3167
  %v3170 = vmul.f32 %v3113, %v3167
  %v3171 = vmul.f32 %v3114, %v3167
  %v3172 = vmul.f32 %v3115, %v3167
  %v3173 = vmul.f32 %v3116, %v3167
  %v3174 = vmul.f32 %v3117, %v3167
  %v3175 = vmul.f32 %v3122, %v3167
  %v3176 = vmul.f32 %v3123, %v3167
  %v3177 = vmul.f32 %v3124, %v3167
  %v3178 = vmul.f32 %v3125, %v3167
  %v3179 = vmul.f32 %v3126, %v3167
  %v3180 = vmul.f32 %v3127, %v3167
  %v3181 = vmul.f32 %v3128, %v3167
  %v3182 = vadd.f32 %v3168, 0.0
  %v3183 = vadd.f32 %v3169, 0.0
  %v3184 = vadd.f32 %v3170, 0.0
  %v3185 = vadd.f32 %v3171, 0.0
  %v3186 = vadd.f32 %v3172, 0.0
  %v3187 = vadd.f32 %v3173, 0.0
  %v3188 = vadd.f32 %v3174, 0.0
  %v3189 = vadd.f32 %v3175, 0.0
  %v3190 = vadd.f32 %v3176, 0.0
  %v3191 = vadd.f32 %v3177, 0.0
  %v3192 = vadd.f32 %v3178, 0.0
  %v3193 = vadd.f32 %v3179, 0.0
  %v3194 = vadd.f32 %v3180, 0.0
  %v3195 = vadd.f32 %v3181, 0.0
  %v3196 = vlaneseq
  %v3197 = vshrl.u32 %v3196, 7
  %v3198 = vsub.s32 2, %v3197
  %v3199 = vrot.slane %v3107, %v3198
  %v3200 = vmul.f32 %v3112, %v3199
  %v3201 = vmul.f32 %v3113, %v3199
  %v3202 = vmul.f32 %v3114, %v3199
  %v3203 = vmul.f32 %v3115, %v3199
  %v3204 = vmul.f32 %v3116, %v3199
  %v3205 = vmul.f32 %v3117, %v3199
  %v3206 = vmul.f32 %v3118, %v3199
  %v3207 = vmul.f32 %v3123, %v3199
  %v3208 = vmul.f32 %v3124, %v3199
  %v3209 = vmul.f32 %v3125, %v3199
  %v3210 = vmul.f32 %v3126, %v3199
  %v3211 = vmul.f32 %v3127, %v3199
  %v3212 = vmul.f32 %v3128, %v3199
  %v3213 = vmul.f32 %v3129, %v3199
  %v3214 = vadd.f32 %v3150, %v3200
  %v3215 = vadd.f32 %v3151, %v3201
  %v3216 = vadd.f32 %v3152, %v3202
  %v3217 = vadd.f32 %v3153, %v3203
  %v3218 = vadd.f32 %v3154, %v3204
  %v3219 = vadd.f32 %v3155, %v3205
  %v3220 = vadd.f32 %v3156, %v3206
  %v3221 = vadd.f32 %v3157, %v3207
  %v3222 = vadd.f32 %v3158, %v3208
  %v3223 = vadd.f32 %v3159, %v3209
  %v3224 = vadd.f32 %v3160, %v3210
  %v3225 = vadd.f32 %v3161, %v3211
  %v3226 = vadd.f32 %v3162, %v3212
  %v3227 = vadd.f32 %v3163, %v3213
  %v3228 = vlaneseq
  %v3229 = vshrl.u32 %v3228, 7
  %v3230 = vsub.s32 7, %v3229
  %v3231 = vrot.slane %v3107, %v3230
  %v3232 = vmul.f32 %v3113, %v3231
  %v3233 = vmul.f32 %v3114, %v3231
  %v3234 = vmul.f32 %v3115, %v3231
  %v3235 = vmul.f32 %v3116, %v3231
  %v3236 = vmul.f32 %v3117, %v3231
  %v3237 = vmul.f32 %v3118, %v3231
  %v3238 = vmul.f32 %v3119, %v3231
  %v3239 = vmul.f32 %v3124, %v3231
  %v3240 = vmul.f32 %v3125, %v3231
  %v3241 = vmul.f32 %v3126, %v3231
  %v3242 = vmul.f32 %v3127, %v3231
  %v3243 = vmul.f32 %v3128, %v3231
  %v3244 = vmul.f32 %v3129, %v3231
  %v3245 = vmul.f32 %v3130, %v3231
  %v3246 = vadd.f32 %v3182, %v3232
  %v3247 = vadd.f32 %v3183, %v3233
  %v3248 = vadd.f32 %v3184, %v3234
  %v3249 = vadd.f32 %v3185, %v3235
  %v3250 = vadd.f32 %v3186, %v3236
  %v3251 = vadd.f32 %v3187, %v3237
  %v3252 = vadd.f32 %v3188, %v3238
  %v3253 = vadd.f32 %v3189, %v3239
  %v3254 = vadd.f32 %v3190, %v3240
  %v3255 = vadd.f32 %v3191, %v3241
  %v3256 = vadd.f32 %v3192, %v3242
  %v3257 = vadd.f32 %v3193, %v3243
  %v3258 = vadd.f32 %v3194, %v3244
  %v3259 = vadd.f32 %v3195, %v3245
  %v3260 = vlaneseq
  %v3261 = vshrl.u32 %v3260, 7
  %v3262 = vsub.s32 4, %v3261
  %v3263 = vrot.slane %v3108, %v3262
  %v3264 = vmul.f32 %v3114, %v3263
  %v3265 = vmul.f32 %v3115, %v3263
  %v3266 = vmul.f32 %v3116, %v3263
  %v3267 = vmul.f32 %v3117, %v3263
  %v3268 = vmul.f32 %v3118, %v3263
  %v3269 = vmul.f32 %v3119, %v3263
  %v3270 = vmul.f32 %v3120, %v3263
  %v3271 = vmul.f32 %v3125, %v3263
  %v3272 = vmul.f32 %v3126, %v3263
  %v3273 = vmul.f32 %v3127, %v3263
  %v3274 = vmul.f32 %v3128, %v3263
  %v3275 = vmul.f32 %v3129, %v3263
  %v3276 = vmul.f32 %v3130, %v3263
  %v3277 = vmul.f32 %v3131, %v3263
  %v3278 = vadd.f32 %v3214, %v3264
  %v3279 = vadd.f32 %v3215, %v3265
  %v3280 = vadd.f32 %v3216, %v3266
  %v3281 = vadd.f32 %v3217, %v3267
  %v3282 = vadd.f32 %v3218, %v3268
  %v3283 = vadd.f32 %v3219, %v3269
  %v3284 = vadd.f32 %v3220, %v3270
  %v3285 = vadd.f32 %v3221, %v3271
  %v3286 = vadd.f32 %v3222, %v3272
  %v3287 = vadd.f32 %v3223, %v3273
  %v3288 = vadd.f32 %v3224, %v3274
  %v3289 = vadd.f32 %v3225, %v3275
  %v3290 = vadd.f32 %v3226, %v3276
  %v3291 = vadd.f32 %v3227, %v3277
  %v3292 = vld [vmem:[#allocation2 + $0x8] sm:$0xfe]
  %v3293 = vld [vmem:[#allocation2 + $0x28] sm:$0xfe]
  %v3294 = vld [vmem:[#allocation2 + $0x48] sm:$0xfe]
  %v3295 = vld [vmem:[#allocation2 + $0x68] sm:$0xfe]
  %v3296 = vld [vmem:[#allocation2 + $0x88] sm:$0xfe]
  %v3297 = vld [vmem:[#allocation2 + $0xa8] sm:$0xfe]
  %v3298 = vld [vmem:[#allocation2 + $0xc8] sm:$0xfe]
  %v3299 = vld [vmem:[#allocation2 + $0xe8] sm:$0xfe]
  %v3300 = vld [vmem:[#allocation2 + $0x108] sm:$0xfe]
  %v3301 = vld [vmem:[#allocation2 + $0x128] sm:$0xfe]
  %v3302 = vld [vmem:[#allocation2 + $0x148] sm:$0xfe]
  %v3303 = vld [vmem:[#allocation2 + $0x168] sm:$0xfe]
  %v3304 = vld [vmem:[#allocation2 + $0x188] sm:$0xfe]
  %v3305 = vld [vmem:[#allocation2 + $0x1a8] sm:$0xfe]
  %v3306 = vld [vmem:[#allocation2 + $0x1c8] sm:$0xfe]
  %v3307 = vld [vmem:[#allocation2 + $0x1e8] sm:$0xfe]
  %v3308 = vld [vmem:[#allocation2 + $0x208] sm:$0xfe]
  %v3309 = vld [vmem:[#allocation2 + $0x228] sm:$0xfe]
  %v3310 = vld [vmem:[#allocation2 + $0x248] sm:$0xfe]
  %v3311 = vld [vmem:[#allocation2 + $0x268] sm:$0xfe]
  %v3312 = vld [vmem:[#allocation2 + $0x288] sm:$0xfe]
  %v3313 = vld [vmem:[#allocation2 + $0x2a8] sm:$0xfe]
  %v3314 = vlaneseq
  %v3315 = vshrl.u32 %v3314, 7
  %v3316 = vsub.s32 1, %v3315
  %v3317 = vrot.slane %v3106, %v3316
  %v3318 = vmul.f32 %v3292, %v3317
  %v3319 = vmul.f32 %v3293, %v3317
  %v3320 = vmul.f32 %v3294, %v3317
  %v3321 = vmul.f32 %v3295, %v3317
  %v3322 = vmul.f32 %v3296, %v3317
  %v3323 = vmul.f32 %v3297, %v3317
  %v3324 = vmul.f32 %v3298, %v3317
  %v3325 = vmul.f32 %v3303, %v3317
  %v3326 = vmul.f32 %v3304, %v3317
  %v3327 = vmul.f32 %v3305, %v3317
  %v3328 = vmul.f32 %v3306, %v3317
  %v3329 = vmul.f32 %v3307, %v3317
  %v3330 = vmul.f32 %v3308, %v3317
  %v3331 = vmul.f32 %v3309, %v3317
  %v3346 = vrot.slane %v3318, 1
  %v3347 = vrot.slane %v3319, 1
  %v3348 = vrot.slane %v3320, 1
  %v3349 = vrot.slane %v3321, 1
  %v3350 = vrot.slane %v3322, 1
  %v3351 = vrot.slane %v3323, 1
  %v3352 = vrot.slane %v3324, 1
  %v3353 = vrot.slane %v3325, 1
  %v3354 = vrot.slane %v3326, 1
  %v3355 = vrot.slane %v3327, 1
  %v3356 = vrot.slane %v3328, 1
  %v3357 = vrot.slane %v3329, 1
  %v3358 = vrot.slane %v3330, 1
  %v3359 = vrot.slane %v3331, 1
  %v3374 = vadd.f32 %v3246, %v3346
  %v3375 = vadd.f32 %v3247, %v3347
  %v3376 = vadd.f32 %v3248, %v3348
  %v3377 = vadd.f32 %v3249, %v3349
  %v3378 = vadd.f32 %v3250, %v3350
  %v3379 = vadd.f32 %v3251, %v3351
  %v3380 = vadd.f32 %v3252, %v3352
  %v3381 = vadd.f32 %v3253, %v3353
  %v3382 = vadd.f32 %v3254, %v3354
  %v3383 = vadd.f32 %v3255, %v3355
  %v3384 = vadd.f32 %v3256, %v3356
  %v3385 = vadd.f32 %v3257, %v3357
  %v3386 = vadd.f32 %v3258, %v3358
  %v3387 = vadd.f32 %v3259, %v3359
  %v3388 = vlaneseq
  %v3389 = vshrl.u32 %v3388, 7
  %v3390 = vsub.s32 6, %v3389
  %v3391 = vrot.slane %v3106, %v3390
  %v3392 = vmul.f32 %v3293, %v3391
  %v3393 = vmul.f32 %v3294, %v3391
  %v3394 = vmul.f32 %v3295, %v3391
  %v3395 = vmul.f32 %v3296, %v3391
  %v3396 = vmul.f32 %v3297, %v3391
  %v3397 = vmul.f32 %v3298, %v3391
  %v3398 = vmul.f32 %v3299, %v3391
  %v3399 = vmul.f32 %v3304, %v3391
  %v3400 = vmul.f32 %v3305, %v3391
  %v3401 = vmul.f32 %v3306, %v3391
  %v3402 = vmul.f32 %v3307, %v3391
  %v3403 = vmul.f32 %v3308, %v3391
  %v3404 = vmul.f32 %v3309, %v3391
  %v3405 = vmul.f32 %v3310, %v3391
  %v3420 = vrot.slane %v3392, 1
  %v3421 = vrot.slane %v3393, 1
  %v3422 = vrot.slane %v3394, 1
  %v3423 = vrot.slane %v3395, 1
  %v3424 = vrot.slane %v3396, 1
  %v3425 = vrot.slane %v3397, 1
  %v3426 = vrot.slane %v3398, 1
  %v3427 = vrot.slane %v3399, 1
  %v3428 = vrot.slane %v3400, 1
  %v3429 = vrot.slane %v3401, 1
  %v3430 = vrot.slane %v3402, 1
  %v3431 = vrot.slane %v3403, 1
  %v3432 = vrot.slane %v3404, 1
  %v3433 = vrot.slane %v3405, 1
  %v3448 = vadd.f32 %v3278, %v3420
  %v3449 = vadd.f32 %v3279, %v3421
  %v3450 = vadd.f32 %v3280, %v3422
  %v3451 = vadd.f32 %v3281, %v3423
  %v3452 = vadd.f32 %v3282, %v3424
  %v3453 = vadd.f32 %v3283, %v3425
  %v3454 = vadd.f32 %v3284, %v3426
  %v3455 = vadd.f32 %v3285, %v3427
  %v3456 = vadd.f32 %v3286, %v3428
  %v3457 = vadd.f32 %v3287, %v3429
  %v3458 = vadd.f32 %v3288, %v3430
  %v3459 = vadd.f32 %v3289, %v3431
  %v3460 = vadd.f32 %v3290, %v3432
  %v3461 = vadd.f32 %v3291, %v3433
  %v3462 = vlaneseq
  %v3463 = vshrl.u32 %v3462, 7
  %v3464 = vsub.s32 3, %v3463
  %v3465 = vrot.slane %v3107, %v3464
  %v3466 = vmul.f32 %v3294, %v3465
  %v3467 = vmul.f32 %v3295, %v3465
  %v3468 = vmul.f32 %v3296, %v3465
  %v3469 = vmul.f32 %v3297, %v3465
  %v3470 = vmul.f32 %v3298, %v3465
  %v3471 = vmul.f32 %v3299, %v3465
  %v3472 = vmul.f32 %v3300, %v3465
  %v3473 = vmul.f32 %v3305, %v3465
  %v3474 = vmul.f32 %v3306, %v3465
  %v3475 = vmul.f32 %v3307, %v3465
  %v3476 = vmul.f32 %v3308, %v3465
  %v3477 = vmul.f32 %v3309, %v3465
  %v3478 = vmul.f32 %v3310, %v3465
  %v3479 = vmul.f32 %v3311, %v3465
  %v3494 = vrot.slane %v3466, 1
  %v3495 = vrot.slane %v3467, 1
  %v3496 = vrot.slane %v3468, 1
  %v3497 = vrot.slane %v3469, 1
  %v3498 = vrot.slane %v3470, 1
  %v3499 = vrot.slane %v3471, 1
  %v3500 = vrot.slane %v3472, 1
  %v3501 = vrot.slane %v3473, 1
  %v3502 = vrot.slane %v3474, 1
  %v3503 = vrot.slane %v3475, 1
  %v3504 = vrot.slane %v3476, 1
  %v3505 = vrot.slane %v3477, 1
  %v3506 = vrot.slane %v3478, 1
  %v3507 = vrot.slane %v3479, 1
  %v3522 = vadd.f32 %v3374, %v3494
  %v3523 = vadd.f32 %v3375, %v3495
  %v3524 = vadd.f32 %v3376, %v3496
  %v3525 = vadd.f32 %v3377, %v3497
  %v3526 = vadd.f32 %v3378, %v3498
  %v3527 = vadd.f32 %v3379, %v3499
  %v3528 = vadd.f32 %v3380, %v3500
  %v3529 = vadd.f32 %v3381, %v3501
  %v3530 = vadd.f32 %v3382, %v3502
  %v3531 = vadd.f32 %v3383, %v3503
  %v3532 = vadd.f32 %v3384, %v3504
  %v3533 = vadd.f32 %v3385, %v3505
  %v3534 = vadd.f32 %v3386, %v3506
  %v3535 = vadd.f32 %v3387, %v3507
  %v3536 = vlaneseq
  %v3537 = vshrl.u32 %v3536, 7
  %v3538 = vsub.s32 0, %v3537
  %v3539 = vrot.slane %v3108, %v3538
  %v3540 = vmul.f32 %v3295, %v3539
  %v3541 = vmul.f32 %v3296, %v3539
  %v3542 = vmul.f32 %v3297, %v3539
  %v3543 = vmul.f32 %v3298, %v3539
  %v3544 = vmul.f32 %v3299, %v3539
  %v3545 = vmul.f32 %v3300, %v3539
  %v3546 = vmul.f32 %v3301, %v3539
  %v3547 = vmul.f32 %v3306, %v3539
  %v3548 = vmul.f32 %v3307, %v3539
  %v3549 = vmul.f32 %v3308, %v3539
  %v3550 = vmul.f32 %v3309, %v3539
  %v3551 = vmul.f32 %v3310, %v3539
  %v3552 = vmul.f32 %v3311, %v3539
  %v3553 = vmul.f32 %v3312, %v3539
  %v3568 = vrot.slane %v3540, 1
  %v3569 = vrot.slane %v3541, 1
  %v3570 = vrot.slane %v3542, 1
  %v3571 = vrot.slane %v3543, 1
  %v3572 = vrot.slane %v3544, 1
  %v3573 = vrot.slane %v3545, 1
  %v3574 = vrot.slane %v3546, 1
  %v3575 = vrot.slane %v3547, 1
  %v3576 = vrot.slane %v3548, 1
  %v3577 = vrot.slane %v3549, 1
  %v3578 = vrot.slane %v3550, 1
  %v3579 = vrot.slane %v3551, 1
  %v3580 = vrot.slane %v3552, 1
  %v3581 = vrot.slane %v3553, 1
  %v3596 = vadd.f32 %v3448, %v3568
  %v3597 = vadd.f32 %v3449, %v3569
  %v3598 = vadd.f32 %v3450, %v3570
  %v3599 = vadd.f32 %v3451, %v3571
  %v3600 = vadd.f32 %v3452, %v3572
  %v3601 = vadd.f32 %v3453, %v3573
  %v3602 = vadd.f32 %v3454, %v3574
  %v3603 = vadd.f32 %v3455, %v3575
  %v3604 = vadd.f32 %v3456, %v3576
  %v3605 = vadd.f32 %v3457, %v3577
  %v3606 = vadd.f32 %v3458, %v3578
  %v3607 = vadd.f32 %v3459, %v3579
  %v3608 = vadd.f32 %v3460, %v3580
  %v3609 = vadd.f32 %v3461, %v3581
  %v3610 = vlaneseq
  %v3611 = vshrl.u32 %v3610, 7
  %v3612 = vsub.s32 5, %v3611
  %v3613 = vrot.slane %v3108, %v3612
  %v3614 = vmul.f32 %v3296, %v3613
  %v3615 = vmul.f32 %v3297, %v3613
  %v3616 = vmul.f32 %v3298, %v3613
  %v3617 = vmul.f32 %v3299, %v3613
  %v3618 = vmul.f32 %v3300, %v3613
  %v3619 = vmul.f32 %v3301, %v3613
  %v3620 = vmul.f32 %v3302, %v3613
  %v3621 = vmul.f32 %v3307, %v3613
  %v3622 = vmul.f32 %v3308, %v3613
  %v3623 = vmul.f32 %v3309, %v3613
  %v3624 = vmul.f32 %v3310, %v3613
  %v3625 = vmul.f32 %v3311, %v3613
  %v3626 = vmul.f32 %v3312, %v3613
  %v3627 = vmul.f32 %v3313, %v3613
  %v3642 = vrot.slane %v3614, 1
  %v3643 = vrot.slane %v3615, 1
  %v3644 = vrot.slane %v3616, 1
  %v3645 = vrot.slane %v3617, 1
  %v3646 = vrot.slane %v3618, 1
  %v3647 = vrot.slane %v3619, 1
  %v3648 = vrot.slane %v3620, 1
  %v3649 = vrot.slane %v3621, 1
  %v3650 = vrot.slane %v3622, 1
  %v3651 = vrot.slane %v3623, 1
  %v3652 = vrot.slane %v3624, 1
  %v3653 = vrot.slane %v3625, 1
  %v3654 = vrot.slane %v3626, 1
  %v3655 = vrot.slane %v3627, 1
  %v3670 = vadd.f32 %v3522, %v3642
  %v3671 = vadd.f32 %v3523, %v3643
  %v3672 = vadd.f32 %v3524, %v3644
  %v3673 = vadd.f32 %v3525, %v3645
  %v3674 = vadd.f32 %v3526, %v3646
  %v3675 = vadd.f32 %v3527, %v3647
  %v3676 = vadd.f32 %v3528, %v3648
  %v3677 = vadd.f32 %v3529, %v3649
  %v3678 = vadd.f32 %v3530, %v3650
  %v3679 = vadd.f32 %v3531, %v3651
  %v3680 = vadd.f32 %v3532, %v3652
  %v3681 = vadd.f32 %v3533, %v3653
  %v3682 = vadd.f32 %v3534, %v3654
  %v3683 = vadd.f32 %v3535, %v3655
  %v3684 = vld [vmem:[#allocation2 + $0x8] sm:$0xfc]
  %v3685 = vld [vmem:[#allocation2 + $0x18] sm:$0x1]
  %v3686 = vld [vmem:[#allocation2 + $0x28] sm:$0xfc]
  %v3687 = vld [vmem:[#allocation2 + $0x38] sm:$0x1]
  %v3688 = vld [vmem:[#allocation2 + $0x48] sm:$0xfc]
  %v3689 = vld [vmem:[#allocation2 + $0x58] sm:$0x1]
  %v3690 = vld [vmem:[#allocation2 + $0x68] sm:$0xfc]
  %v3691 = vld [vmem:[#allocation2 + $0x78] sm:$0x1]
  %v3692 = vld [vmem:[#allocation2 + $0x88] sm:$0xfc]
  %v3693 = vld [vmem:[#allocation2 + $0x98] sm:$0x1]
  %v3694 = vld [vmem:[#allocation2 + $0xa8] sm:$0xfc]
  %v3695 = vld [vmem:[#allocation2 + $0xb8] sm:$0x1]
  %v3696 = vld [vmem:[#allocation2 + $0xc8] sm:$0xfc]
  %v3697 = vld [vmem:[#allocation2 + $0xd8] sm:$0x1]
  %v3698 = vld [vmem:[#allocation2 + $0xe8] sm:$0xfc]
  %v3699 = vld [vmem:[#allocation2 + $0xf8] sm:$0x1]
  %v3700 = vld [vmem:[#allocation2 + $0x108] sm:$0xfc]
  %v3701 = vld [vmem:[#allocation2 + $0x118] sm:$0x1]
  %v3702 = vld [vmem:[#allocation2 + $0x128] sm:$0xfc]
  %v3703 = vld [vmem:[#allocation2 + $0x138] sm:$0x1]
  %v3704 = vld [vmem:[#allocation2 + $0x148] sm:$0xfc]
  %v3705 = vld [vmem:[#allocation2 + $0x158] sm:$0x1]
  %v3706 = vld [vmem:[#allocation2 + $0x168] sm:$0xfc]
  %v3707 = vld [vmem:[#allocation2 + $0x178] sm:$0x1]
  %v3708 = vld [vmem:[#allocation2 + $0x188] sm:$0xfc]
  %v3709 = vld [vmem:[#allocation2 + $0x198] sm:$0x1]
  %v3710 = vld [vmem:[#allocation2 + $0x1a8] sm:$0xfc]
  %v3711 = vld [vmem:[#allocation2 + $0x1b8] sm:$0x1]
  %v3712 = vld [vmem:[#allocation2 + $0x1c8] sm:$0xfc]
  %v3713 = vld [vmem:[#allocation2 + $0x1d8] sm:$0x1]
  %v3714 = vld [vmem:[#allocation2 + $0x1e8] sm:$0xfc]
  %v3715 = vld [vmem:[#allocation2 + $0x1f8] sm:$0x1]
  %v3716 = vld [vmem:[#allocation2 + $0x208] sm:$0xfc]
  %v3717 = vld [vmem:[#allocation2 + $0x218] sm:$0x1]
  %v3718 = vld [vmem:[#allocation2 + $0x228] sm:$0xfc]
  %v3719 = vld [vmem:[#allocation2 + $0x238] sm:$0x1]
  %v3720 = vld [vmem:[#allocation2 + $0x248] sm:$0xfc]
  %v3721 = vld [vmem:[#allocation2 + $0x258] sm:$0x1]
  %v3722 = vld [vmem:[#allocation2 + $0x268] sm:$0xfc]
  %v3723 = vld [vmem:[#allocation2 + $0x278] sm:$0x1]
  %v3724 = vld [vmem:[#allocation2 + $0x288] sm:$0xfc]
  %v3725 = vld [vmem:[#allocation2 + $0x298] sm:$0x1]
  %v3726 = vld [vmem:[#allocation2 + $0x2a8] sm:$0xfc]
  %v3727 = vld [vmem:[#allocation2 + $0x2b8] sm:$0x1]
  %v3728 = vlaneseq
  %v3729 = vshrl.u32 %v3728, 7
  %v3730 = vsub.s32 2, %v3729
  %v3731 = vrot.slane %v3106, %v3730
  %v3732 = vmul.f32 %v3684, %v3731
  %v3733 = vmul.f32 %v3685, %v3731
  %v3734 = vmul.f32 %v3686, %v3731
  %v3735 = vmul.f32 %v3687, %v3731
  %v3736 = vmul.f32 %v3688, %v3731
  %v3737 = vmul.f32 %v3689, %v3731
  %v3738 = vmul.f32 %v3690, %v3731
  %v3739 = vmul.f32 %v3691, %v3731
  %v3740 = vmul.f32 %v3692, %v3731
  %v3741 = vmul.f32 %v3693, %v3731
  %v3742 = vmul.f32 %v3694, %v3731
  %v3743 = vmul.f32 %v3695, %v3731
  %v3744 = vmul.f32 %v3696, %v3731
  %v3745 = vmul.f32 %v3697, %v3731
  %v3746 = vmul.f32 %v3706, %v3731
  %v3747 = vmul.f32 %v3707, %v3731
  %v3748 = vmul.f32 %v3708, %v3731
  %v3749 = vmul.f32 %v3709, %v3731
  %v3750 = vmul.f32 %v3710, %v3731
  %v3751 = vmul.f32 %v3711, %v3731
  %v3752 = vmul.f32 %v3712, %v3731
  %v3753 = vmul.f32 %v3713, %v3731
  %v3754 = vmul.f32 %v3714, %v3731
  %v3755 = vmul.f32 %v3715, %v3731
  %v3756 = vmul.f32 %v3716, %v3731
  %v3757 = vmul.f32 %v3717, %v3731
  %v3758 = vmul.f32 %v3718, %v3731
  %v3759 = vmul.f32 %v3719, %v3731
  %v3788 = vrot.slane %v3732, 2
  %v3789 = vrot.slane %v3733, 2
  %v3790 = vsel %vm957, %v3788, %v3789
  %v3791 = vrot.slane %v3734, 2
  %v3792 = vrot.slane %v3735, 2
  %v3793 = vsel %vm957, %v3791, %v3792
  %v3794 = vrot.slane %v3736, 2
  %v3795 = vrot.slane %v3737, 2
  %v3796 = vsel %vm957, %v3794, %v3795
  %v3797 = vrot.slane %v3738, 2
  %v3798 = vrot.slane %v3739, 2
  %v3799 = vsel %vm957, %v3797, %v3798
  %v3800 = vrot.slane %v3740, 2
  %v3801 = vrot.slane %v3741, 2
  %v3802 = vsel %vm957, %v3800, %v3801
  %v3803 = vrot.slane %v3742, 2
  %v3804 = vrot.slane %v3743, 2
  %v3805 = vsel %vm957, %v3803, %v3804
  %v3806 = vrot.slane %v3744, 2
  %v3807 = vrot.slane %v3745, 2
  %v3808 = vsel %vm957, %v3806, %v3807
  %v3809 = vrot.slane %v3746, 2
  %v3810 = vrot.slane %v3747, 2
  %v3811 = vsel %vm957, %v3809, %v3810
  %v3812 = vrot.slane %v3748, 2
  %v3813 = vrot.slane %v3749, 2
  %v3814 = vsel %vm957, %v3812, %v3813
  %v3815 = vrot.slane %v3750, 2
  %v3816 = vrot.slane %v3751, 2
  %v3817 = vsel %vm957, %v3815, %v3816
  %v3818 = vrot.slane %v3752, 2
  %v3819 = vrot.slane %v3753, 2
  %v3820 = vsel %vm957, %v3818, %v3819
  %v3821 = vrot.slane %v3754, 2
  %v3822 = vrot.slane %v3755, 2
  %v3823 = vsel %vm957, %v3821, %v3822
  %v3824 = vrot.slane %v3756, 2
  %v3825 = vrot.slane %v3757, 2
  %v3826 = vsel %vm957, %v3824, %v3825
  %v3827 = vrot.slane %v3758, 2
  %v3828 = vrot.slane %v3759, 2
  %v3829 = vsel %vm957, %v3827, %v3828
  %v3844 = vadd.f32 %v3596, %v3790
  %v3845 = vadd.f32 %v3597, %v3793
  %v3846 = vadd.f32 %v3598, %v3796
  %v3847 = vadd.f32 %v3599, %v3799
  %v3848 = vadd.f32 %v3600, %v3802
  %v3849 = vadd.f32 %v3601, %v3805
  %v3850 = vadd.f32 %v3602, %v3808
  %v3851 = vadd.f32 %v3603, %v3811
  %v3852 = vadd.f32 %v3604, %v3814
  %v3853 = vadd.f32 %v3605, %v3817
  %v3854 = vadd.f32 %v3606, %v3820
  %v3855 = vadd.f32 %v3607, %v3823
  %v3856 = vadd.f32 %v3608, %v3826
  %v3857 = vadd.f32 %v3609, %v3829
  %v3858 = vlaneseq
  %v3859 = vshrl.u32 %v3858, 7
  %v3860 = vsub.s32 7, %v3859
  %v3861 = vrot.slane %v3106, %v3860
  %v3862 = vmul.f32 %v3686, %v3861
  %v3863 = vmul.f32 %v3687, %v3861
  %v3864 = vmul.f32 %v3688, %v3861
  %v3865 = vmul.f32 %v3689, %v3861
  %v3866 = vmul.f32 %v3690, %v3861
  %v3867 = vmul.f32 %v3691, %v3861
  %v3868 = vmul.f32 %v3692, %v3861
  %v3869 = vmul.f32 %v3693, %v3861
  %v3870 = vmul.f32 %v3694, %v3861
  %v3871 = vmul.f32 %v3695, %v3861
  %v3872 = vmul.f32 %v3696, %v3861
  %v3873 = vmul.f32 %v3697, %v3861
  %v3874 = vmul.f32 %v3698, %v3861
  %v3875 = vmul.f32 %v3699, %v3861
  %v3876 = vmul.f32 %v3708, %v3861
  %v3877 = vmul.f32 %v3709, %v3861
  %v3878 = vmul.f32 %v3710, %v3861
  %v3879 = vmul.f32 %v3711, %v3861
  %v3880 = vmul.f32 %v3712, %v3861
  %v3881 = vmul.f32 %v3713, %v3861
  %v3882 = vmul.f32 %v3714, %v3861
  %v3883 = vmul.f32 %v3715, %v3861
  %v3884 = vmul.f32 %v3716, %v3861
  %v3885 = vmul.f32 %v3717, %v3861
  %v3886 = vmul.f32 %v3718, %v3861
  %v3887 = vmul.f32 %v3719, %v3861
  %v3888 = vmul.f32 %v3720, %v3861
  %v3889 = vmul.f32 %v3721, %v3861
  %v3918 = vrot.slane %v3862, 2
  %v3919 = vrot.slane %v3863, 2
  %v3920 = vsel %vm957, %v3918, %v3919
  %v3921 = vrot.slane %v3864, 2
  %v3922 = vrot.slane %v3865, 2
  %v3923 = vsel %vm957, %v3921, %v3922
  %v3924 = vrot.slane %v3866, 2
  %v3925 = vrot.slane %v3867, 2
  %v3926 = vsel %vm957, %v3924, %v3925
  %v3927 = vrot.slane %v3868, 2
  %v3928 = vrot.slane %v3869, 2
  %v3929 = vsel %vm957, %v3927, %v3928
  %v3930 = vrot.slane %v3870, 2
  %v3931 = vrot.slane %v3871, 2
  %v3932 = vsel %vm957, %v3930, %v3931
  %v3933 = vrot.slane %v3872, 2
  %v3934 = vrot.slane %v3873, 2
  %v3935 = vsel %vm957, %v3933, %v3934
  %v3936 = vrot.slane %v3874, 2
  %v3937 = vrot.slane %v3875, 2
  %v3938 = vsel %vm957, %v3936, %v3937
  %v3939 = vrot.slane %v3876, 2
  %v3940 = vrot.slane %v3877, 2
  %v3941 = vsel %vm957, %v3939, %v3940
  %v3942 = vrot.slane %v3878, 2
  %v3943 = vrot.slane %v3879, 2
  %v3944 = vsel %vm957, %v3942, %v3943
  %v3945 = vrot.slane %v3880, 2
  %v3946 = vrot.slane %v3881, 2
  %v3947 = vsel %vm957, %v3945, %v3946
  %v3948 = vrot.slane %v3882, 2
  %v3949 = vrot.slane %v3883, 2
  %v3950 = vsel %vm957, %v3948, %v3949
  %v3951 = vrot.slane %v3884, 2
  %v3952 = vrot.slane %v3885, 2
  %v3953 = vsel %vm957, %v3951, %v3952
  %v3954 = vrot.slane %v3886, 2
  %v3955 = vrot.slane %v3887, 2
  %v3956 = vsel %vm957, %v3954, %v3955
  %v3957 = vrot.slane %v3888, 2
  %v3958 = vrot.slane %v3889, 2
  %v3959 = vsel %vm957, %v3957, %v3958
  %v3974 = vadd.f32 %v3670, %v3920
  %v3975 = vadd.f32 %v3671, %v3923
  %v3976 = vadd.f32 %v3672, %v3926
  %v3977 = vadd.f32 %v3673, %v3929
  %v3978 = vadd.f32 %v3674, %v3932
  %v3979 = vadd.f32 %v3675, %v3935
  %v3980 = vadd.f32 %v3676, %v3938
  %v3981 = vadd.f32 %v3677, %v3941
  %v3982 = vadd.f32 %v3678, %v3944
  %v3983 = vadd.f32 %v3679, %v3947
  %v3984 = vadd.f32 %v3680, %v3950
  %v3985 = vadd.f32 %v3681, %v3953
  %v3986 = vadd.f32 %v3682, %v3956
  %v3987 = vadd.f32 %v3683, %v3959
  %v3988 = vlaneseq
  %v3989 = vshrl.u32 %v3988, 7
  %v3990 = vsub.s32 4, %v3989
  %v3991 = vrot.slane %v3107, %v3990
  %v3992 = vmul.f32 %v3688, %v3991
  %v3993 = vmul.f32 %v3689, %v3991
  %v3994 = vmul.f32 %v3690, %v3991
  %v3995 = vmul.f32 %v3691, %v3991
  %v3996 = vmul.f32 %v3692, %v3991
  %v3997 = vmul.f32 %v3693, %v3991
  %v3998 = vmul.f32 %v3694, %v3991
  %v3999 = vmul.f32 %v3695, %v3991
  %v4000 = vmul.f32 %v3696, %v3991
  %v4001 = vmul.f32 %v3697, %v3991
  %v4002 = vmul.f32 %v3698, %v3991
  %v4003 = vmul.f32 %v3699, %v3991
  %v4004 = vmul.f32 %v3700, %v3991
  %v4005 = vmul.f32 %v3701, %v3991
  %v4006 = vmul.f32 %v3710, %v3991
  %v4007 = vmul.f32 %v3711, %v3991
  %v4008 = vmul.f32 %v3712, %v3991
  %v4009 = vmul.f32 %v3713, %v3991
  %v4010 = vmul.f32 %v3714, %v3991
  %v4011 = vmul.f32 %v3715, %v3991
  %v4012 = vmul.f32 %v3716, %v3991
  %v4013 = vmul.f32 %v3717, %v3991
  %v4014 = vmul.f32 %v3718, %v3991
  %v4015 = vmul.f32 %v3719, %v3991
  %v4016 = vmul.f32 %v3720, %v3991
  %v4017 = vmul.f32 %v3721, %v3991
  %v4018 = vmul.f32 %v3722, %v3991
  %v4019 = vmul.f32 %v3723, %v3991
  %v4048 = vrot.slane %v3992, 2
  %v4049 = vrot.slane %v3993, 2
  %v4050 = vsel %vm957, %v4048, %v4049
  %v4051 = vrot.slane %v3994, 2
  %v4052 = vrot.slane %v3995, 2
  %v4053 = vsel %vm957, %v4051, %v4052
  %v4054 = vrot.slane %v3996, 2
  %v4055 = vrot.slane %v3997, 2
  %v4056 = vsel %vm957, %v4054, %v4055
  %v4057 = vrot.slane %v3998, 2
  %v4058 = vrot.slane %v3999, 2
  %v4059 = vsel %vm957, %v4057, %v4058
  %v4060 = vrot.slane %v4000, 2
  %v4061 = vrot.slane %v4001, 2
  %v4062 = vsel %vm957, %v4060, %v4061
  %v4063 = vrot.slane %v4002, 2
  %v4064 = vrot.slane %v4003, 2
  %v4065 = vsel %vm957, %v4063, %v4064
  %v4066 = vrot.slane %v4004, 2
  %v4067 = vrot.slane %v4005, 2
  %v4068 = vsel %vm957, %v4066, %v4067
  %v4069 = vrot.slane %v4006, 2
  %v4070 = vrot.slane %v4007, 2
  %v4071 = vsel %vm957, %v4069, %v4070
  %v4072 = vrot.slane %v4008, 2
  %v4073 = vrot.slane %v4009, 2
  %v4074 = vsel %vm957, %v4072, %v4073
  %v4075 = vrot.slane %v4010, 2
  %v4076 = vrot.slane %v4011, 2
  %v4077 = vsel %vm957, %v4075, %v4076
  %v4078 = vrot.slane %v4012, 2
  %v4079 = vrot.slane %v4013, 2
  %v4080 = vsel %vm957, %v4078, %v4079
  %v4081 = vrot.slane %v4014, 2
  %v4082 = vrot.slane %v4015, 2
  %v4083 = vsel %vm957, %v4081, %v4082
  %v4084 = vrot.slane %v4016, 2
  %v4085 = vrot.slane %v4017, 2
  %v4086 = vsel %vm957, %v4084, %v4085
  %v4087 = vrot.slane %v4018, 2
  %v4088 = vrot.slane %v4019, 2
  %v4089 = vsel %vm957, %v4087, %v4088
  %v4104 = vadd.f32 %v3844, %v4050
  %v4105 = vadd.f32 %v3845, %v4053
  %v4106 = vadd.f32 %v3846, %v4056
  %v4107 = vadd.f32 %v3847, %v4059
  %v4108 = vadd.f32 %v3848, %v4062
  %v4109 = vadd.f32 %v3849, %v4065
  %v4110 = vadd.f32 %v3850, %v4068
  %v4111 = vadd.f32 %v3851, %v4071
  %v4112 = vadd.f32 %v3852, %v4074
  %v4113 = vadd.f32 %v3853, %v4077
  %v4114 = vadd.f32 %v3854, %v4080
  %v4115 = vadd.f32 %v3855, %v4083
  %v4116 = vadd.f32 %v3856, %v4086
  %v4117 = vadd.f32 %v3857, %v4089
  %v4118 = vlaneseq
  %v4119 = vshrl.u32 %v4118, 7
  %v4120 = vsub.s32 1, %v4119
  %v4121 = vrot.slane %v3108, %v4120
  %v4122 = vmul.f32 %v3690, %v4121
  %v4123 = vmul.f32 %v3691, %v4121
  %v4124 = vmul.f32 %v3692, %v4121
  %v4125 = vmul.f32 %v3693, %v4121
  %v4126 = vmul.f32 %v3694, %v4121
  %v4127 = vmul.f32 %v3695, %v4121
  %v4128 = vmul.f32 %v3696, %v4121
  %v4129 = vmul.f32 %v3697, %v4121
  %v4130 = vmul.f32 %v3698, %v4121
  %v4131 = vmul.f32 %v3699, %v4121
  %v4132 = vmul.f32 %v3700, %v4121
  %v4133 = vmul.f32 %v3701, %v4121
  %v4134 = vmul.f32 %v3702, %v4121
  %v4135 = vmul.f32 %v3703, %v4121
  %v4136 = vmul.f32 %v3712, %v4121
  %v4137 = vmul.f32 %v3713, %v4121
  %v4138 = vmul.f32 %v3714, %v4121
  %v4139 = vmul.f32 %v3715, %v4121
  %v4140 = vmul.f32 %v3716, %v4121
  %v4141 = vmul.f32 %v3717, %v4121
  %v4142 = vmul.f32 %v3718, %v4121
  %v4143 = vmul.f32 %v3719, %v4121
  %v4144 = vmul.f32 %v3720, %v4121
  %v4145 = vmul.f32 %v3721, %v4121
  %v4146 = vmul.f32 %v3722, %v4121
  %v4147 = vmul.f32 %v3723, %v4121
  %v4148 = vmul.f32 %v3724, %v4121
  %v4149 = vmul.f32 %v3725, %v4121
  %v4178 = vrot.slane %v4122, 2
  %v4179 = vrot.slane %v4123, 2
  %v4180 = vsel %vm957, %v4178, %v4179
  %v4181 = vrot.slane %v4124, 2
  %v4182 = vrot.slane %v4125, 2
  %v4183 = vsel %vm957, %v4181, %v4182
  %v4184 = vrot.slane %v4126, 2
  %v4185 = vrot.slane %v4127, 2
  %v4186 = vsel %vm957, %v4184, %v4185
  %v4187 = vrot.slane %v4128, 2
  %v4188 = vrot.slane %v4129, 2
  %v4189 = vsel %vm957, %v4187, %v4188
  %v4190 = vrot.slane %v4130, 2
  %v4191 = vrot.slane %v4131, 2
  %v4192 = vsel %vm957, %v4190, %v4191
  %v4193 = vrot.slane %v4132, 2
  %v4194 = vrot.slane %v4133, 2
  %v4195 = vsel %vm957, %v4193, %v4194
  %v4196 = vrot.slane %v4134, 2
  %v4197 = vrot.slane %v4135, 2
  %v4198 = vsel %vm957, %v4196, %v4197
  %v4199 = vrot.slane %v4136, 2
  %v4200 = vrot.slane %v4137, 2
  %v4201 = vsel %vm957, %v4199, %v4200
  %v4202 = vrot.slane %v4138, 2
  %v4203 = vrot.slane %v4139, 2
  %v4204 = vsel %vm957, %v4202, %v4203
  %v4205 = vrot.slane %v4140, 2
  %v4206 = vrot.slane %v4141, 2
  %v4207 = vsel %vm957, %v4205, %v4206
  %v4208 = vrot.slane %v4142, 2
  %v4209 = vrot.slane %v4143, 2
  %v4210 = vsel %vm957, %v4208, %v4209
  %v4211 = vrot.slane %v4144, 2
  %v4212 = vrot.slane %v4145, 2
  %v4213 = vsel %vm957, %v4211, %v4212
  %v4214 = vrot.slane %v4146, 2
  %v4215 = vrot.slane %v4147, 2
  %v4216 = vsel %vm957, %v4214, %v4215
  %v4217 = vrot.slane %v4148, 2
  %v4218 = vrot.slane %v4149, 2
  %v4219 = vsel %vm957, %v4217, %v4218
  %v4234 = vadd.f32 %v3974, %v4180
  %v4235 = vadd.f32 %v3975, %v4183
  %v4236 = vadd.f32 %v3976, %v4186
  %v4237 = vadd.f32 %v3977, %v4189
  %v4238 = vadd.f32 %v3978, %v4192
  %v4239 = vadd.f32 %v3979, %v4195
  %v4240 = vadd.f32 %v3980, %v4198
  %v4241 = vadd.f32 %v3981, %v4201
  %v4242 = vadd.f32 %v3982, %v4204
  %v4243 = vadd.f32 %v3983, %v4207
  %v4244 = vadd.f32 %v3984, %v4210
  %v4245 = vadd.f32 %v3985, %v4213
  %v4246 = vadd.f32 %v3986, %v4216
  %v4247 = vadd.f32 %v3987, %v4219
  %v4248 = vlaneseq
  %v4249 = vshrl.u32 %v4248, 7
  %v4250 = vsub.s32 6, %v4249
  %v4251 = vrot.slane %v3108, %v4250
  %v4252 = vmul.f32 %v3692, %v4251
  %v4253 = vmul.f32 %v3693, %v4251
  %v4254 = vmul.f32 %v3694, %v4251
  %v4255 = vmul.f32 %v3695, %v4251
  %v4256 = vmul.f32 %v3696, %v4251
  %v4257 = vmul.f32 %v3697, %v4251
  %v4258 = vmul.f32 %v3698, %v4251
  %v4259 = vmul.f32 %v3699, %v4251
  %v4260 = vmul.f32 %v3700, %v4251
  %v4261 = vmul.f32 %v3701, %v4251
  %v4262 = vmul.f32 %v3702, %v4251
  %v4263 = vmul.f32 %v3703, %v4251
  %v4264 = vmul.f32 %v3704, %v4251
  %v4265 = vmul.f32 %v3705, %v4251
  %v4266 = vmul.f32 %v3714, %v4251
  %v4267 = vmul.f32 %v3715, %v4251
  %v4268 = vmul.f32 %v3716, %v4251
  %v4269 = vmul.f32 %v3717, %v4251
  %v4270 = vmul.f32 %v3718, %v4251
  %v4271 = vmul.f32 %v3719, %v4251
  %v4272 = vmul.f32 %v3720, %v4251
  %v4273 = vmul.f32 %v3721, %v4251
  %v4274 = vmul.f32 %v3722, %v4251
  %v4275 = vmul.f32 %v3723, %v4251
  %v4276 = vmul.f32 %v3724, %v4251
  %v4277 = vmul.f32 %v3725, %v4251
  %v4278 = vmul.f32 %v3726, %v4251
  %v4279 = vmul.f32 %v3727, %v4251
  %v4308 = vrot.slane %v4252, 2
  %v4309 = vrot.slane %v4253, 2
  %v4310 = vsel %vm957, %v4308, %v4309
  %v4311 = vrot.slane %v4254, 2
  %v4312 = vrot.slane %v4255, 2
  %v4313 = vsel %vm957, %v4311, %v4312
  %v4314 = vrot.slane %v4256, 2
  %v4315 = vrot.slane %v4257, 2
  %v4316 = vsel %vm957, %v4314, %v4315
  %v4317 = vrot.slane %v4258, 2
  %v4318 = vrot.slane %v4259, 2
  %v4319 = vsel %vm957, %v4317, %v4318
  %v4320 = vrot.slane %v4260, 2
  %v4321 = vrot.slane %v4261, 2
  %v4322 = vsel %vm957, %v4320, %v4321
  %v4323 = vrot.slane %v4262, 2
  %v4324 = vrot.slane %v4263, 2
  %v4325 = vsel %vm957, %v4323, %v4324
  %v4326 = vrot.slane %v4264, 2
  %v4327 = vrot.slane %v4265, 2
  %v4328 = vsel %vm957, %v4326, %v4327
  %v4329 = vrot.slane %v4266, 2
  %v4330 = vrot.slane %v4267, 2
  %v4331 = vsel %vm957, %v4329, %v4330
  %v4332 = vrot.slane %v4268, 2
  %v4333 = vrot.slane %v4269, 2
  %v4334 = vsel %vm957, %v4332, %v4333
  %v4335 = vrot.slane %v4270, 2
  %v4336 = vrot.slane %v4271, 2
  %v4337 = vsel %vm957, %v4335, %v4336
  %v4338 = vrot.slane %v4272, 2
  %v4339 = vrot.slane %v4273, 2
  %v4340 = vsel %vm957, %v4338, %v4339
  %v4341 = vrot.slane %v4274, 2
  %v4342 = vrot.slane %v4275, 2
  %v4343 = vsel %vm957, %v4341, %v4342
  %v4344 = vrot.slane %v4276, 2
  %v4345 = vrot.slane %v4277, 2
  %v4346 = vsel %vm957, %v4344, %v4345
  %v4347 = vrot.slane %v4278, 2
  %v4348 = vrot.slane %v4279, 2
  %v4349 = vsel %vm957, %v4347, %v4348
  %v4364 = vadd.f32 %v4104, %v4310
  %v4365 = vadd.f32 %v4105, %v4313
  %v4366 = vadd.f32 %v4106, %v4316
  %v4367 = vadd.f32 %v4107, %v4319
  %v4368 = vadd.f32 %v4108, %v4322
  %v4369 = vadd.f32 %v4109, %v4325
  %v4370 = vadd.f32 %v4110, %v4328
  %v4371 = vadd.f32 %v4111, %v4331
  %v4372 = vadd.f32 %v4112, %v4334
  %v4373 = vadd.f32 %v4113, %v4337
  %v4374 = vadd.f32 %v4114, %v4340
  %v4375 = vadd.f32 %v4115, %v4343
  %v4376 = vadd.f32 %v4116, %v4346
  %v4377 = vadd.f32 %v4117, %v4349
  %v4378 = vld [vmem:[#allocation2 + $0x8] sm:$0xf8]
  %v4379 = vld [vmem:[#allocation2 + $0x18] sm:$0x3]
  %v4380 = vld [vmem:[#allocation2 + $0x28] sm:$0xf8]
  %v4381 = vld [vmem:[#allocation2 + $0x38] sm:$0x3]
  %v4382 = vld [vmem:[#allocation2 + $0x48] sm:$0xf8]
  %v4383 = vld [vmem:[#allocation2 + $0x58] sm:$0x3]
  %v4384 = vld [vmem:[#allocation2 + $0x68] sm:$0xf8]
  %v4385 = vld [vmem:[#allocation2 + $0x78] sm:$0x3]
  %v4386 = vld [vmem:[#allocation2 + $0x88] sm:$0xf8]
  %v4387 = vld [vmem:[#allocation2 + $0x98] sm:$0x3]
  %v4388 = vld [vmem:[#allocation2 + $0xa8] sm:$0xf8]
  %v4389 = vld [vmem:[#allocation2 + $0xb8] sm:$0x3]
  %v4390 = vld [vmem:[#allocation2 + $0xc8] sm:$0xf8]
  %v4391 = vld [vmem:[#allocation2 + $0xd8] sm:$0x3]
  %v4392 = vld [vmem:[#allocation2 + $0xe8] sm:$0xf8]
  %v4393 = vld [vmem:[#allocation2 + $0xf8] sm:$0x3]
  %v4394 = vld [vmem:[#allocation2 + $0x108] sm:$0xf8]
  %v4395 = vld [vmem:[#allocation2 + $0x118] sm:$0x3]
  %v4396 = vld [vmem:[#allocation2 + $0x128] sm:$0xf8]
  %v4397 = vld [vmem:[#allocation2 + $0x138] sm:$0x3]
  %v4398 = vld [vmem:[#allocation2 + $0x148] sm:$0xf8]
  %v4399 = vld [vmem:[#allocation2 + $0x158] sm:$0x3]
  %v4400 = vld [vmem:[#allocation2 + $0x168] sm:$0xf8]
  %v4401 = vld [vmem:[#allocation2 + $0x178] sm:$0x3]
  %v4402 = vld [vmem:[#allocation2 + $0x188] sm:$0xf8]
  %v4403 = vld [vmem:[#allocation2 + $0x198] sm:$0x3]
  %v4404 = vld [vmem:[#allocation2 + $0x1a8] sm:$0xf8]
  %v4405 = vld [vmem:[#allocation2 + $0x1b8] sm:$0x3]
  %v4406 = vld [vmem:[#allocation2 + $0x1c8] sm:$0xf8]
  %v4407 = vld [vmem:[#allocation2 + $0x1d8] sm:$0x3]
  %v4408 = vld [vmem:[#allocation2 + $0x1e8] sm:$0xf8]
  %v4409 = vld [vmem:[#allocation2 + $0x1f8] sm:$0x3]
  %v4410 = vld [vmem:[#allocation2 + $0x208] sm:$0xf8]
  %v4411 = vld [vmem:[#allocation2 + $0x218] sm:$0x3]
  %v4412 = vld [vmem:[#allocation2 + $0x228] sm:$0xf8]
  %v4413 = vld [vmem:[#allocation2 + $0x238] sm:$0x3]
  %v4414 = vld [vmem:[#allocation2 + $0x248] sm:$0xf8]
  %v4415 = vld [vmem:[#allocation2 + $0x258] sm:$0x3]
  %v4416 = vld [vmem:[#allocation2 + $0x268] sm:$0xf8]
  %v4417 = vld [vmem:[#allocation2 + $0x278] sm:$0x3]
  %v4418 = vld [vmem:[#allocation2 + $0x288] sm:$0xf8]
  %v4419 = vld [vmem:[#allocation2 + $0x298] sm:$0x3]
  %v4420 = vld [vmem:[#allocation2 + $0x2a8] sm:$0xf8]
  %v4421 = vld [vmem:[#allocation2 + $0x2b8] sm:$0x3]
  %v4422 = vlaneseq
  %v4423 = vshrl.u32 %v4422, 7
  %v4424 = vsub.s32 3, %v4423
  %v4425 = vrot.slane %v3106, %v4424
  %v4426 = vmul.f32 %v4378, %v4425
  %v4427 = vmul.f32 %v4379, %v4425
  %v4428 = vmul.f32 %v4380, %v4425
  %v4429 = vmul.f32 %v4381, %v4425
  %v4430 = vmul.f32 %v4382, %v4425
  %v4431 = vmul.f32 %v4383, %v4425
  %v4432 = vmul.f32 %v4384, %v4425
  %v4433 = vmul.f32 %v4385, %v4425
  %v4434 = vmul.f32 %v4386, %v4425
  %v4435 = vmul.f32 %v4387, %v4425
  %v4436 = vmul.f32 %v4388, %v4425
  %v4437 = vmul.f32 %v4389, %v4425
  %v4438 = vmul.f32 %v4390, %v4425
  %v4439 = vmul.f32 %v4391, %v4425
  %v4440 = vmul.f32 %v4400, %v4425
  %v4441 = vmul.f32 %v4401, %v4425
  %v4442 = vmul.f32 %v4402, %v4425
  %v4443 = vmul.f32 %v4403, %v4425
  %v4444 = vmul.f32 %v4404, %v4425
  %v4445 = vmul.f32 %v4405, %v4425
  %v4446 = vmul.f32 %v4406, %v4425
  %v4447 = vmul.f32 %v4407, %v4425
  %v4448 = vmul.f32 %v4408, %v4425
  %v4449 = vmul.f32 %v4409, %v4425
  %v4450 = vmul.f32 %v4410, %v4425
  %v4451 = vmul.f32 %v4411, %v4425
  %v4452 = vmul.f32 %v4412, %v4425
  %v4453 = vmul.f32 %v4413, %v4425
  %v4482 = vrot.slane %v4426, 3
  %v4483 = vrot.slane %v4427, 3
  %v4484 = vsel %vm1652, %v4482, %v4483
  %v4485 = vrot.slane %v4428, 3
  %v4486 = vrot.slane %v4429, 3
  %v4487 = vsel %vm1652, %v4485, %v4486
  %v4488 = vrot.slane %v4430, 3
  %v4489 = vrot.slane %v4431, 3
  %v4490 = vsel %vm1652, %v4488, %v4489
  %v4491 = vrot.slane %v4432, 3
  %v4492 = vrot.slane %v4433, 3
  %v4493 = vsel %vm1652, %v4491, %v4492
  %v4494 = vrot.slane %v4434, 3
  %v4495 = vrot.slane %v4435, 3
  %v4496 = vsel %vm1652, %v4494, %v4495
  %v4497 = vrot.slane %v4436, 3
  %v4498 = vrot.slane %v4437, 3
  %v4499 = vsel %vm1652, %v4497, %v4498
  %v4500 = vrot.slane %v4438, 3
  %v4501 = vrot.slane %v4439, 3
  %v4502 = vsel %vm1652, %v4500, %v4501
  %v4503 = vrot.slane %v4440, 3
  %v4504 = vrot.slane %v4441, 3
  %v4505 = vsel %vm1652, %v4503, %v4504
  %v4506 = vrot.slane %v4442, 3
  %v4507 = vrot.slane %v4443, 3
  %v4508 = vsel %vm1652, %v4506, %v4507
  %v4509 = vrot.slane %v4444, 3
  %v4510 = vrot.slane %v4445, 3
  %v4511 = vsel %vm1652, %v4509, %v4510
  %v4512 = vrot.slane %v4446, 3
  %v4513 = vrot.slane %v4447, 3
  %v4514 = vsel %vm1652, %v4512, %v4513
  %v4515 = vrot.slane %v4448, 3
  %v4516 = vrot.slane %v4449, 3
  %v4517 = vsel %vm1652, %v4515, %v4516
  %v4518 = vrot.slane %v4450, 3
  %v4519 = vrot.slane %v4451, 3
  %v4520 = vsel %vm1652, %v4518, %v4519
  %v4521 = vrot.slane %v4452, 3
  %v4522 = vrot.slane %v4453, 3
  %v4523 = vsel %vm1652, %v4521, %v4522
  %v4538 = vadd.f32 %v4234, %v4484
  %v4539 = vadd.f32 %v4235, %v4487
  %v4540 = vadd.f32 %v4236, %v4490
  %v4541 = vadd.f32 %v4237, %v4493
  %v4542 = vadd.f32 %v4238, %v4496
  %v4543 = vadd.f32 %v4239, %v4499
  %v4544 = vadd.f32 %v4240, %v4502
  %v4545 = vadd.f32 %v4241, %v4505
  %v4546 = vadd.f32 %v4242, %v4508
  %v4547 = vadd.f32 %v4243, %v4511
  %v4548 = vadd.f32 %v4244, %v4514
  %v4549 = vadd.f32 %v4245, %v4517
  %v4550 = vadd.f32 %v4246, %v4520
  %v4551 = vadd.f32 %v4247, %v4523
  %v4552 = vlaneseq
  %v4553 = vshrl.u32 %v4552, 7
  %v4554 = vsub.s32 0, %v4553
  %v4555 = vrot.slane %v3107, %v4554
  %v4556 = vmul.f32 %v4380, %v4555
  %v4557 = vmul.f32 %v4381, %v4555
  %v4558 = vmul.f32 %v4382, %v4555
  %v4559 = vmul.f32 %v4383, %v4555
  %v4560 = vmul.f32 %v4384, %v4555
  %v4561 = vmul.f32 %v4385, %v4555
  %v4562 = vmul.f32 %v4386, %v4555
  %v4563 = vmul.f32 %v4387, %v4555
  %v4564 = vmul.f32 %v4388, %v4555
  %v4565 = vmul.f32 %v4389, %v4555
  %v4566 = vmul.f32 %v4390, %v4555
  %v4567 = vmul.f32 %v4391, %v4555
  %v4568 = vmul.f32 %v4392, %v4555
  %v4569 = vmul.f32 %v4393, %v4555
  %v4570 = vmul.f32 %v4402, %v4555
  %v4571 = vmul.f32 %v4403, %v4555
  %v4572 = vmul.f32 %v4404, %v4555
  %v4573 = vmul.f32 %v4405, %v4555
  %v4574 = vmul.f32 %v4406, %v4555
  %v4575 = vmul.f32 %v4407, %v4555
  %v4576 = vmul.f32 %v4408, %v4555
  %v4577 = vmul.f32 %v4409, %v4555
  %v4578 = vmul.f32 %v4410, %v4555
  %v4579 = vmul.f32 %v4411, %v4555
  %v4580 = vmul.f32 %v4412, %v4555
  %v4581 = vmul.f32 %v4413, %v4555
  %v4582 = vmul.f32 %v4414, %v4555
  %v4583 = vmul.f32 %v4415, %v4555
  %v4612 = vrot.slane %v4556, 3
  %v4613 = vrot.slane %v4557, 3
  %v4614 = vsel %vm1652, %v4612, %v4613
  %v4615 = vrot.slane %v4558, 3
  %v4616 = vrot.slane %v4559, 3
  %v4617 = vsel %vm1652, %v4615, %v4616
  %v4618 = vrot.slane %v4560, 3
  %v4619 = vrot.slane %v4561, 3
  %v4620 = vsel %vm1652, %v4618, %v4619
  %v4621 = vrot.slane %v4562, 3
  %v4622 = vrot.slane %v4563, 3
  %v4623 = vsel %vm1652, %v4621, %v4622
  %v4624 = vrot.slane %v4564, 3
  %v4625 = vrot.slane %v4565, 3
  %v4626 = vsel %vm1652, %v4624, %v4625
  %v4627 = vrot.slane %v4566, 3
  %v4628 = vrot.slane %v4567, 3
  %v4629 = vsel %vm1652, %v4627, %v4628
  %v4630 = vrot.slane %v4568, 3
  %v4631 = vrot.slane %v4569, 3
  %v4632 = vsel %vm1652, %v4630, %v4631
  %v4633 = vrot.slane %v4570, 3
  %v4634 = vrot.slane %v4571, 3
  %v4635 = vsel %vm1652, %v4633, %v4634
  %v4636 = vrot.slane %v4572, 3
  %v4637 = vrot.slane %v4573, 3
  %v4638 = vsel %vm1652, %v4636, %v4637
  %v4639 = vrot.slane %v4574, 3
  %v4640 = vrot.slane %v4575, 3
  %v4641 = vsel %vm1652, %v4639, %v4640
  %v4642 = vrot.slane %v4576, 3
  %v4643 = vrot.slane %v4577, 3
  %v4644 = vsel %vm1652, %v4642, %v4643
  %v4645 = vrot.slane %v4578, 3
  %v4646 = vrot.slane %v4579, 3
  %v4647 = vsel %vm1652, %v4645, %v4646
  %v4648 = vrot.slane %v4580, 3
  %v4649 = vrot.slane %v4581, 3
  %v4650 = vsel %vm1652, %v4648, %v4649
  %v4651 = vrot.slane %v4582, 3
  %v4652 = vrot.slane %v4583, 3
  %v4653 = vsel %vm1652, %v4651, %v4652
  %v4668 = vadd.f32 %v4364, %v4614
  %v4669 = vadd.f32 %v4365, %v4617
  %v4670 = vadd.f32 %v4366, %v4620
  %v4671 = vadd.f32 %v4367, %v4623
  %v4672 = vadd.f32 %v4368, %v4626
  %v4673 = vadd.f32 %v4369, %v4629
  %v4674 = vadd.f32 %v4370, %v4632
  %v4675 = vadd.f32 %v4371, %v4635
  %v4676 = vadd.f32 %v4372, %v4638
  %v4677 = vadd.f32 %v4373, %v4641
  %v4678 = vadd.f32 %v4374, %v4644
  %v4679 = vadd.f32 %v4375, %v4647
  %v4680 = vadd.f32 %v4376, %v4650
  %v4681 = vadd.f32 %v4377, %v4653
  %v4682 = vlaneseq
  %v4683 = vshrl.u32 %v4682, 7
  %v4684 = vsub.s32 5, %v4683
  %v4685 = vrot.slane %v3107, %v4684
  %v4686 = vmul.f32 %v4382, %v4685
  %v4687 = vmul.f32 %v4383, %v4685
  %v4688 = vmul.f32 %v4384, %v4685
  %v4689 = vmul.f32 %v4385, %v4685
  %v4690 = vmul.f32 %v4386, %v4685
  %v4691 = vmul.f32 %v4387, %v4685
  %v4692 = vmul.f32 %v4388, %v4685
  %v4693 = vmul.f32 %v4389, %v4685
  %v4694 = vmul.f32 %v4390, %v4685
  %v4695 = vmul.f32 %v4391, %v4685
  %v4696 = vmul.f32 %v4392, %v4685
  %v4697 = vmul.f32 %v4393, %v4685
  %v4698 = vmul.f32 %v4394, %v4685
  %v4699 = vmul.f32 %v4395, %v4685
  %v4700 = vmul.f32 %v4404, %v4685
  %v4701 = vmul.f32 %v4405, %v4685
  %v4702 = vmul.f32 %v4406, %v4685
  %v4703 = vmul.f32 %v4407, %v4685
  %v4704 = vmul.f32 %v4408, %v4685
  %v4705 = vmul.f32 %v4409, %v4685
  %v4706 = vmul.f32 %v4410, %v4685
  %v4707 = vmul.f32 %v4411, %v4685
  %v4708 = vmul.f32 %v4412, %v4685
  %v4709 = vmul.f32 %v4413, %v4685
  %v4710 = vmul.f32 %v4414, %v4685
  %v4711 = vmul.f32 %v4415, %v4685
  %v4712 = vmul.f32 %v4416, %v4685
  %v4713 = vmul.f32 %v4417, %v4685
  %v4742 = vrot.slane %v4686, 3
  %v4743 = vrot.slane %v4687, 3
  %v4744 = vsel %vm1652, %v4742, %v4743
  %v4745 = vrot.slane %v4688, 3
  %v4746 = vrot.slane %v4689, 3
  %v4747 = vsel %vm1652, %v4745, %v4746
  %v4748 = vrot.slane %v4690, 3
  %v4749 = vrot.slane %v4691, 3
  %v4750 = vsel %vm1652, %v4748, %v4749
  %v4751 = vrot.slane %v4692, 3
  %v4752 = vrot.slane %v4693, 3
  %v4753 = vsel %vm1652, %v4751, %v4752
  %v4754 = vrot.slane %v4694, 3
  %v4755 = vrot.slane %v4695, 3
  %v4756 = vsel %vm1652, %v4754, %v4755
  %v4757 = vrot.slane %v4696, 3
  %v4758 = vrot.slane %v4697, 3
  %v4759 = vsel %vm1652, %v4757, %v4758
  %v4760 = vrot.slane %v4698, 3
  %v4761 = vrot.slane %v4699, 3
  %v4762 = vsel %vm1652, %v4760, %v4761
  %v4763 = vrot.slane %v4700, 3
  %v4764 = vrot.slane %v4701, 3
  %v4765 = vsel %vm1652, %v4763, %v4764
  %v4766 = vrot.slane %v4702, 3
  %v4767 = vrot.slane %v4703, 3
  %v4768 = vsel %vm1652, %v4766, %v4767
  %v4769 = vrot.slane %v4704, 3
  %v4770 = vrot.slane %v4705, 3
  %v4771 = vsel %vm1652, %v4769, %v4770
  %v4772 = vrot.slane %v4706, 3
  %v4773 = vrot.slane %v4707, 3
  %v4774 = vsel %vm1652, %v4772, %v4773
  %v4775 = vrot.slane %v4708, 3
  %v4776 = vrot.slane %v4709, 3
  %v4777 = vsel %vm1652, %v4775, %v4776
  %v4778 = vrot.slane %v4710, 3
  %v4779 = vrot.slane %v4711, 3
  %v4780 = vsel %vm1652, %v4778, %v4779
  %v4781 = vrot.slane %v4712, 3
  %v4782 = vrot.slane %v4713, 3
  %v4783 = vsel %vm1652, %v4781, %v4782
  %v4798 = vadd.f32 %v4538, %v4744
  %v4799 = vadd.f32 %v4539, %v4747
  %v4800 = vadd.f32 %v4540, %v4750
  %v4801 = vadd.f32 %v4541, %v4753
  %v4802 = vadd.f32 %v4542, %v4756
  %v4803 = vadd.f32 %v4543, %v4759
  %v4804 = vadd.f32 %v4544, %v4762
  %v4805 = vadd.f32 %v4545, %v4765
  %v4806 = vadd.f32 %v4546, %v4768
  %v4807 = vadd.f32 %v4547, %v4771
  %v4808 = vadd.f32 %v4548, %v4774
  %v4809 = vadd.f32 %v4549, %v4777
  %v4810 = vadd.f32 %v4550, %v4780
  %v4811 = vadd.f32 %v4551, %v4783
  %v4812 = vlaneseq
  %v4813 = vshrl.u32 %v4812, 7
  %v4814 = vsub.s32 2, %v4813
  %v4815 = vrot.slane %v3108, %v4814
  %v4816 = vmul.f32 %v4384, %v4815
  %v4817 = vmul.f32 %v4385, %v4815
  %v4818 = vmul.f32 %v4386, %v4815
  %v4819 = vmul.f32 %v4387, %v4815
  %v4820 = vmul.f32 %v4388, %v4815
  %v4821 = vmul.f32 %v4389, %v4815
  %v4822 = vmul.f32 %v4390, %v4815
  %v4823 = vmul.f32 %v4391, %v4815
  %v4824 = vmul.f32 %v4392, %v4815
  %v4825 = vmul.f32 %v4393, %v4815
  %v4826 = vmul.f32 %v4394, %v4815
  %v4827 = vmul.f32 %v4395, %v4815
  %v4828 = vmul.f32 %v4396, %v4815
  %v4829 = vmul.f32 %v4397, %v4815
  %v4830 = vmul.f32 %v4406, %v4815
  %v4831 = vmul.f32 %v4407, %v4815
  %v4832 = vmul.f32 %v4408, %v4815
  %v4833 = vmul.f32 %v4409, %v4815
  %v4834 = vmul.f32 %v4410, %v4815
  %v4835 = vmul.f32 %v4411, %v4815
  %v4836 = vmul.f32 %v4412, %v4815
  %v4837 = vmul.f32 %v4413, %v4815
  %v4838 = vmul.f32 %v4414, %v4815
  %v4839 = vmul.f32 %v4415, %v4815
  %v4840 = vmul.f32 %v4416, %v4815
  %v4841 = vmul.f32 %v4417, %v4815
  %v4842 = vmul.f32 %v4418, %v4815
  %v4843 = vmul.f32 %v4419, %v4815
  %v4872 = vrot.slane %v4816, 3
  %v4873 = vrot.slane %v4817, 3
  %v4874 = vsel %vm1652, %v4872, %v4873
  %v4875 = vrot.slane %v4818, 3
  %v4876 = vrot.slane %v4819, 3
  %v4877 = vsel %vm1652, %v4875, %v4876
  %v4878 = vrot.slane %v4820, 3
  %v4879 = vrot.slane %v4821, 3
  %v4880 = vsel %vm1652, %v4878, %v4879
  %v4881 = vrot.slane %v4822, 3
  %v4882 = vrot.slane %v4823, 3
  %v4883 = vsel %vm1652, %v4881, %v4882
  %v4884 = vrot.slane %v4824, 3
  %v4885 = vrot.slane %v4825, 3
  %v4886 = vsel %vm1652, %v4884, %v4885
  %v4887 = vrot.slane %v4826, 3
  %v4888 = vrot.slane %v4827, 3
  %v4889 = vsel %vm1652, %v4887, %v4888
  %v4890 = vrot.slane %v4828, 3
  %v4891 = vrot.slane %v4829, 3
  %v4892 = vsel %vm1652, %v4890, %v4891
  %v4893 = vrot.slane %v4830, 3
  %v4894 = vrot.slane %v4831, 3
  %v4895 = vsel %vm1652, %v4893, %v4894
  %v4896 = vrot.slane %v4832, 3
  %v4897 = vrot.slane %v4833, 3
  %v4898 = vsel %vm1652, %v4896, %v4897
  %v4899 = vrot.slane %v4834, 3
  %v4900 = vrot.slane %v4835, 3
  %v4901 = vsel %vm1652, %v4899, %v4900
  %v4902 = vrot.slane %v4836, 3
  %v4903 = vrot.slane %v4837, 3
  %v4904 = vsel %vm1652, %v4902, %v4903
  %v4905 = vrot.slane %v4838, 3
  %v4906 = vrot.slane %v4839, 3
  %v4907 = vsel %vm1652, %v4905, %v4906
  %v4908 = vrot.slane %v4840, 3
  %v4909 = vrot.slane %v4841, 3
  %v4910 = vsel %vm1652, %v4908, %v4909
  %v4911 = vrot.slane %v4842, 3
  %v4912 = vrot.slane %v4843, 3
  %v4913 = vsel %vm1652, %v4911, %v4912
  %v4928 = vadd.f32 %v4668, %v4874
  %v4929 = vadd.f32 %v4669, %v4877
  %v4930 = vadd.f32 %v4670, %v4880
  %v4931 = vadd.f32 %v4671, %v4883
  %v4932 = vadd.f32 %v4672, %v4886
  %v4933 = vadd.f32 %v4673, %v4889
  %v4934 = vadd.f32 %v4674, %v4892
  %v4935 = vadd.f32 %v4675, %v4895
  %v4936 = vadd.f32 %v4676, %v4898
  %v4937 = vadd.f32 %v4677, %v4901
  %v4938 = vadd.f32 %v4678, %v4904
  %v4939 = vadd.f32 %v4679, %v4907
  %v4940 = vadd.f32 %v4680, %v4910
  %v4941 = vadd.f32 %v4681, %v4913
  %v4942 = vlaneseq
  %v4943 = vshrl.u32 %v4942, 7
  %v4944 = vsub.s32 7, %v4943
  %v4945 = vrot.slane %v3108, %v4944
  %v4946 = vmul.f32 %v4386, %v4945
  %v4947 = vmul.f32 %v4387, %v4945
  %v4948 = vmul.f32 %v4388, %v4945
  %v4949 = vmul.f32 %v4389, %v4945
  %v4950 = vmul.f32 %v4390, %v4945
  %v4951 = vmul.f32 %v4391, %v4945
  %v4952 = vmul.f32 %v4392, %v4945
  %v4953 = vmul.f32 %v4393, %v4945
  %v4954 = vmul.f32 %v4394, %v4945
  %v4955 = vmul.f32 %v4395, %v4945
  %v4956 = vmul.f32 %v4396, %v4945
  %v4957 = vmul.f32 %v4397, %v4945
  %v4958 = vmul.f32 %v4398, %v4945
  %v4959 = vmul.f32 %v4399, %v4945
  %v4960 = vmul.f32 %v4408, %v4945
  %v4961 = vmul.f32 %v4409, %v4945
  %v4962 = vmul.f32 %v4410, %v4945
  %v4963 = vmul.f32 %v4411, %v4945
  %v4964 = vmul.f32 %v4412, %v4945
  %v4965 = vmul.f32 %v4413, %v4945
  %v4966 = vmul.f32 %v4414, %v4945
  %v4967 = vmul.f32 %v4415, %v4945
  %v4968 = vmul.f32 %v4416, %v4945
  %v4969 = vmul.f32 %v4417, %v4945
  %v4970 = vmul.f32 %v4418, %v4945
  %v4971 = vmul.f32 %v4419, %v4945
  %v4972 = vmul.f32 %v4420, %v4945
  %v4973 = vmul.f32 %v4421, %v4945
  %v5002 = vrot.slane %v4946, 3
  %v5003 = vrot.slane %v4947, 3
  %v5004 = vsel %vm1652, %v5002, %v5003
  %v5005 = vrot.slane %v4948, 3
  %v5006 = vrot.slane %v4949, 3
  %v5007 = vsel %vm1652, %v5005, %v5006
  %v5008 = vrot.slane %v4950, 3
  %v5009 = vrot.slane %v4951, 3
  %v5010 = vsel %vm1652, %v5008, %v5009
  %v5011 = vrot.slane %v4952, 3
  %v5012 = vrot.slane %v4953, 3
  %v5013 = vsel %vm1652, %v5011, %v5012
  %v5014 = vrot.slane %v4954, 3
  %v5015 = vrot.slane %v4955, 3
  %v5016 = vsel %vm1652, %v5014, %v5015
  %v5017 = vrot.slane %v4956, 3
  %v5018 = vrot.slane %v4957, 3
  %v5019 = vsel %vm1652, %v5017, %v5018
  %v5020 = vrot.slane %v4958, 3
  %v5021 = vrot.slane %v4959, 3
  %v5022 = vsel %vm1652, %v5020, %v5021
  %v5023 = vrot.slane %v4960, 3
  %v5024 = vrot.slane %v4961, 3
  %v5025 = vsel %vm1652, %v5023, %v5024
  %v5026 = vrot.slane %v4962, 3
  %v5027 = vrot.slane %v4963, 3
  %v5028 = vsel %vm1652, %v5026, %v5027
  %v5029 = vrot.slane %v4964, 3
  %v5030 = vrot.slane %v4965, 3
  %v5031 = vsel %vm1652, %v5029, %v5030
  %v5032 = vrot.slane %v4966, 3
  %v5033 = vrot.slane %v4967, 3
  %v5034 = vsel %vm1652, %v5032, %v5033
  %v5035 = vrot.slane %v4968, 3
  %v5036 = vrot.slane %v4969, 3
  %v5037 = vsel %vm1652, %v5035, %v5036
  %v5038 = vrot.slane %v4970, 3
  %v5039 = vrot.slane %v4971, 3
  %v5040 = vsel %vm1652, %v5038, %v5039
  %v5041 = vrot.slane %v4972, 3
  %v5042 = vrot.slane %v4973, 3
  %v5043 = vsel %vm1652, %v5041, %v5042
  %v5058 = vadd.f32 %v4798, %v5004
  %v5059 = vadd.f32 %v4799, %v5007
  %v5060 = vadd.f32 %v4800, %v5010
  %v5061 = vadd.f32 %v4801, %v5013
  %v5062 = vadd.f32 %v4802, %v5016
  %v5063 = vadd.f32 %v4803, %v5019
  %v5064 = vadd.f32 %v4804, %v5022
  %v5065 = vadd.f32 %v4805, %v5025
  %v5066 = vadd.f32 %v4806, %v5028
  %v5067 = vadd.f32 %v4807, %v5031
  %v5068 = vadd.f32 %v4808, %v5034
  %v5069 = vadd.f32 %v4809, %v5037
  %v5070 = vadd.f32 %v4810, %v5040
  %v5071 = vadd.f32 %v4811, %v5043
  %v5072 = vld [vmem:[#allocation2 + $0x8] sm:$0xf0]
  %v5073 = vld [vmem:[#allocation2 + $0x18] sm:$0x7]
  %v5074 = vld [vmem:[#allocation2 + $0x28] sm:$0xf0]
  %v5075 = vld [vmem:[#allocation2 + $0x38] sm:$0x7]
  %v5076 = vld [vmem:[#allocation2 + $0x48] sm:$0xf0]
  %v5077 = vld [vmem:[#allocation2 + $0x58] sm:$0x7]
  %v5078 = vld [vmem:[#allocation2 + $0x68] sm:$0xf0]
  %v5079 = vld [vmem:[#allocation2 + $0x78] sm:$0x7]
  %v5080 = vld [vmem:[#allocation2 + $0x88] sm:$0xf0]
  %v5081 = vld [vmem:[#allocation2 + $0x98] sm:$0x7]
  %v5082 = vld [vmem:[#allocation2 + $0xa8] sm:$0xf0]
  %v5083 = vld [vmem:[#allocation2 + $0xb8] sm:$0x7]
  %v5084 = vld [vmem:[#allocation2 + $0xc8] sm:$0xf0]
  %v5085 = vld [vmem:[#allocation2 + $0xd8] sm:$0x7]
  %v5086 = vld [vmem:[#allocation2 + $0xe8] sm:$0xf0]
  %v5087 = vld [vmem:[#allocation2 + $0xf8] sm:$0x7]
  %v5088 = vld [vmem:[#allocation2 + $0x108] sm:$0xf0]
  %v5089 = vld [vmem:[#allocation2 + $0x118] sm:$0x7]
  %v5090 = vld [vmem:[#allocation2 + $0x128] sm:$0xf0]
  %v5091 = vld [vmem:[#allocation2 + $0x138] sm:$0x7]
  %v5092 = vld [vmem:[#allocation2 + $0x148] sm:$0xf0]
  %v5093 = vld [vmem:[#allocation2 + $0x158] sm:$0x7]
  %v5094 = vld [vmem:[#allocation2 + $0x168] sm:$0xf0]
  %v5095 = vld [vmem:[#allocation2 + $0x178] sm:$0x7]
  %v5096 = vld [vmem:[#allocation2 + $0x188] sm:$0xf0]
  %v5097 = vld [vmem:[#allocation2 + $0x198] sm:$0x7]
  %v5098 = vld [vmem:[#allocation2 + $0x1a8] sm:$0xf0]
  %v5099 = vld [vmem:[#allocation2 + $0x1b8] sm:$0x7]
  %v5100 = vld [vmem:[#allocation2 + $0x1c8] sm:$0xf0]
  %v5101 = vld [vmem:[#allocation2 + $0x1d8] sm:$0x7]
  %v5102 = vld [vmem:[#allocation2 + $0x1e8] sm:$0xf0]
  %v5103 = vld [vmem:[#allocation2 + $0x1f8] sm:$0x7]
  %v5104 = vld [vmem:[#allocation2 + $0x208] sm:$0xf0]
  %v5105 = vld [vmem:[#allocation2 + $0x218] sm:$0x7]
  %v5106 = vld [vmem:[#allocation2 + $0x228] sm:$0xf0]
  %v5107 = vld [vmem:[#allocation2 + $0x238] sm:$0x7]
  %v5108 = vld [vmem:[#allocation2 + $0x248] sm:$0xf0]
  %v5109 = vld [vmem:[#allocation2 + $0x258] sm:$0x7]
  %v5110 = vld [vmem:[#allocation2 + $0x268] sm:$0xf0]
  %v5111 = vld [vmem:[#allocation2 + $0x278] sm:$0x7]
  %v5112 = vld [vmem:[#allocation2 + $0x288] sm:$0xf0]
  %v5113 = vld [vmem:[#allocation2 + $0x298] sm:$0x7]
  %v5114 = vld [vmem:[#allocation2 + $0x2a8] sm:$0xf0]
  %v5115 = vld [vmem:[#allocation2 + $0x2b8] sm:$0x7]
  %v5116 = vlaneseq
  %v5117 = vshrl.u32 %v5116, 7
  %v5118 = vsub.s32 4, %v5117
  %v5119 = vrot.slane %v3106, %v5118
  %v5120 = vmul.f32 %v5072, %v5119
  %v5121 = vmul.f32 %v5073, %v5119
  %v5122 = vmul.f32 %v5074, %v5119
  %v5123 = vmul.f32 %v5075, %v5119
  %v5124 = vmul.f32 %v5076, %v5119
  %v5125 = vmul.f32 %v5077, %v5119
  %v5126 = vmul.f32 %v5078, %v5119
  %v5127 = vmul.f32 %v5079, %v5119
  %v5128 = vmul.f32 %v5080, %v5119
  %v5129 = vmul.f32 %v5081, %v5119
  %v5130 = vmul.f32 %v5082, %v5119
  %v5131 = vmul.f32 %v5083, %v5119
  %v5132 = vmul.f32 %v5084, %v5119
  %v5133 = vmul.f32 %v5085, %v5119
  %v5134 = vmul.f32 %v5094, %v5119
  %v5135 = vmul.f32 %v5095, %v5119
  %v5136 = vmul.f32 %v5096, %v5119
  %v5137 = vmul.f32 %v5097, %v5119
  %v5138 = vmul.f32 %v5098, %v5119
  %v5139 = vmul.f32 %v5099, %v5119
  %v5140 = vmul.f32 %v5100, %v5119
  %v5141 = vmul.f32 %v5101, %v5119
  %v5142 = vmul.f32 %v5102, %v5119
  %v5143 = vmul.f32 %v5103, %v5119
  %v5144 = vmul.f32 %v5104, %v5119
  %v5145 = vmul.f32 %v5105, %v5119
  %v5146 = vmul.f32 %v5106, %v5119
  %v5147 = vmul.f32 %v5107, %v5119
  %v5176 = vrot.slane %v5120, 4
  %v5177 = vrot.slane %v5121, 4
  %v5178 = vsel %vm2347, %v5176, %v5177
  %v5179 = vrot.slane %v5122, 4
  %v5180 = vrot.slane %v5123, 4
  %v5181 = vsel %vm2347, %v5179, %v5180
  %v5182 = vrot.slane %v5124, 4
  %v5183 = vrot.slane %v5125, 4
  %v5184 = vsel %vm2347, %v5182, %v5183
  %v5185 = vrot.slane %v5126, 4
  %v5186 = vrot.slane %v5127, 4
  %v5187 = vsel %vm2347, %v5185, %v5186
  %v5188 = vrot.slane %v5128, 4
  %v5189 = vrot.slane %v5129, 4
  %v5190 = vsel %vm2347, %v5188, %v5189
  %v5191 = vrot.slane %v5130, 4
  %v5192 = vrot.slane %v5131, 4
  %v5193 = vsel %vm2347, %v5191, %v5192
  %v5194 = vrot.slane %v5132, 4
  %v5195 = vrot.slane %v5133, 4
  %v5196 = vsel %vm2347, %v5194, %v5195
  %v5197 = vrot.slane %v5134, 4
  %v5198 = vrot.slane %v5135, 4
  %v5199 = vsel %vm2347, %v5197, %v5198
  %v5200 = vrot.slane %v5136, 4
  %v5201 = vrot.slane %v5137, 4
  %v5202 = vsel %vm2347, %v5200, %v5201
  %v5203 = vrot.slane %v5138, 4
  %v5204 = vrot.slane %v5139, 4
  %v5205 = vsel %vm2347, %v5203, %v5204
  %v5206 = vrot.slane %v5140, 4
  %v5207 = vrot.slane %v5141, 4
  %v5208 = vsel %vm2347, %v5206, %v5207
  %v5209 = vrot.slane %v5142, 4
  %v5210 = vrot.slane %v5143, 4
  %v5211 = vsel %vm2347, %v5209, %v5210
  %v5212 = vrot.slane %v5144, 4
  %v5213 = vrot.slane %v5145, 4
  %v5214 = vsel %vm2347, %v5212, %v5213
  %v5215 = vrot.slane %v5146, 4
  %v5216 = vrot.slane %v5147, 4
  %v5217 = vsel %vm2347, %v5215, %v5216
  %v5232 = vadd.f32 %v4928, %v5178
  %v5233 = vadd.f32 %v4929, %v5181
  %v5234 = vadd.f32 %v4930, %v5184
  %v5235 = vadd.f32 %v4931, %v5187
  %v5236 = vadd.f32 %v4932, %v5190
  %v5237 = vadd.f32 %v4933, %v5193
  %v5238 = vadd.f32 %v4934, %v5196
  %v5239 = vadd.f32 %v4935, %v5199
  %v5240 = vadd.f32 %v4936, %v5202
  %v5241 = vadd.f32 %v4937, %v5205
  %v5242 = vadd.f32 %v4938, %v5208
  %v5243 = vadd.f32 %v4939, %v5211
  %v5244 = vadd.f32 %v4940, %v5214
  %v5245 = vadd.f32 %v4941, %v5217
  %v5246 = vlaneseq
  %v5247 = vshrl.u32 %v5246, 7
  %v5248 = vsub.s32 1, %v5247
  %v5249 = vrot.slane %v3107, %v5248
  %v5250 = vmul.f32 %v5074, %v5249
  %v5251 = vmul.f32 %v5075, %v5249
  %v5252 = vmul.f32 %v5076, %v5249
  %v5253 = vmul.f32 %v5077, %v5249
  %v5254 = vmul.f32 %v5078, %v5249
  %v5255 = vmul.f32 %v5079, %v5249
  %v5256 = vmul.f32 %v5080, %v5249
  %v5257 = vmul.f32 %v5081, %v5249
  %v5258 = vmul.f32 %v5082, %v5249
  %v5259 = vmul.f32 %v5083, %v5249
  %v5260 = vmul.f32 %v5084, %v5249
  %v5261 = vmul.f32 %v5085, %v5249
  %v5262 = vmul.f32 %v5086, %v5249
  %v5263 = vmul.f32 %v5087, %v5249
  %v5264 = vmul.f32 %v5096, %v5249
  %v5265 = vmul.f32 %v5097, %v5249
  %v5266 = vmul.f32 %v5098, %v5249
  %v5267 = vmul.f32 %v5099, %v5249
  %v5268 = vmul.f32 %v5100, %v5249
  %v5269 = vmul.f32 %v5101, %v5249
  %v5270 = vmul.f32 %v5102, %v5249
  %v5271 = vmul.f32 %v5103, %v5249
  %v5272 = vmul.f32 %v5104, %v5249
  %v5273 = vmul.f32 %v5105, %v5249
  %v5274 = vmul.f32 %v5106, %v5249
  %v5275 = vmul.f32 %v5107, %v5249
  %v5276 = vmul.f32 %v5108, %v5249
  %v5277 = vmul.f32 %v5109, %v5249
  %v5306 = vrot.slane %v5250, 4
  %v5307 = vrot.slane %v5251, 4
  %v5308 = vsel %vm2347, %v5306, %v5307
  %v5309 = vrot.slane %v5252, 4
  %v5310 = vrot.slane %v5253, 4
  %v5311 = vsel %vm2347, %v5309, %v5310
  %v5312 = vrot.slane %v5254, 4
  %v5313 = vrot.slane %v5255, 4
  %v5314 = vsel %vm2347, %v5312, %v5313
  %v5315 = vrot.slane %v5256, 4
  %v5316 = vrot.slane %v5257, 4
  %v5317 = vsel %vm2347, %v5315, %v5316
  %v5318 = vrot.slane %v5258, 4
  %v5319 = vrot.slane %v5259, 4
  %v5320 = vsel %vm2347, %v5318, %v5319
  %v5321 = vrot.slane %v5260, 4
  %v5322 = vrot.slane %v5261, 4
  %v5323 = vsel %vm2347, %v5321, %v5322
  %v5324 = vrot.slane %v5262, 4
  %v5325 = vrot.slane %v5263, 4
  %v5326 = vsel %vm2347, %v5324, %v5325
  %v5327 = vrot.slane %v5264, 4
  %v5328 = vrot.slane %v5265, 4
  %v5329 = vsel %vm2347, %v5327, %v5328
  %v5330 = vrot.slane %v5266, 4
  %v5331 = vrot.slane %v5267, 4
  %v5332 = vsel %vm2347, %v5330, %v5331
  %v5333 = vrot.slane %v5268, 4
  %v5334 = vrot.slane %v5269, 4
  %v5335 = vsel %vm2347, %v5333, %v5334
  %v5336 = vrot.slane %v5270, 4
  %v5337 = vrot.slane %v5271, 4
  %v5338 = vsel %vm2347, %v5336, %v5337
  %v5339 = vrot.slane %v5272, 4
  %v5340 = vrot.slane %v5273, 4
  %v5341 = vsel %vm2347, %v5339, %v5340
  %v5342 = vrot.slane %v5274, 4
  %v5343 = vrot.slane %v5275, 4
  %v5344 = vsel %vm2347, %v5342, %v5343
  %v5345 = vrot.slane %v5276, 4
  %v5346 = vrot.slane %v5277, 4
  %v5347 = vsel %vm2347, %v5345, %v5346
  %v5362 = vadd.f32 %v5058, %v5308
  %v5363 = vadd.f32 %v5059, %v5311
  %v5364 = vadd.f32 %v5060, %v5314
  %v5365 = vadd.f32 %v5061, %v5317
  %v5366 = vadd.f32 %v5062, %v5320
  %v5367 = vadd.f32 %v5063, %v5323
  %v5368 = vadd.f32 %v5064, %v5326
  %v5369 = vadd.f32 %v5065, %v5329
  %v5370 = vadd.f32 %v5066, %v5332
  %v5371 = vadd.f32 %v5067, %v5335
  %v5372 = vadd.f32 %v5068, %v5338
  %v5373 = vadd.f32 %v5069, %v5341
  %v5374 = vadd.f32 %v5070, %v5344
  %v5375 = vadd.f32 %v5071, %v5347
  %v5376 = vlaneseq
  %v5377 = vshrl.u32 %v5376, 7
  %v5378 = vsub.s32 6, %v5377
  %v5379 = vrot.slane %v3107, %v5378
  %v5380 = vmul.f32 %v5076, %v5379
  %v5381 = vmul.f32 %v5077, %v5379
  %v5382 = vmul.f32 %v5078, %v5379
  %v5383 = vmul.f32 %v5079, %v5379
  %v5384 = vmul.f32 %v5080, %v5379
  %v5385 = vmul.f32 %v5081, %v5379
  %v5386 = vmul.f32 %v5082, %v5379
  %v5387 = vmul.f32 %v5083, %v5379
  %v5388 = vmul.f32 %v5084, %v5379
  %v5389 = vmul.f32 %v5085, %v5379
  %v5390 = vmul.f32 %v5086, %v5379
  %v5391 = vmul.f32 %v5087, %v5379
  %v5392 = vmul.f32 %v5088, %v5379
  %v5393 = vmul.f32 %v5089, %v5379
  %v5394 = vmul.f32 %v5098, %v5379
  %v5395 = vmul.f32 %v5099, %v5379
  %v5396 = vmul.f32 %v5100, %v5379
  %v5397 = vmul.f32 %v5101, %v5379
  %v5398 = vmul.f32 %v5102, %v5379
  %v5399 = vmul.f32 %v5103, %v5379
  %v5400 = vmul.f32 %v5104, %v5379
  %v5401 = vmul.f32 %v5105, %v5379
  %v5402 = vmul.f32 %v5106, %v5379
  %v5403 = vmul.f32 %v5107, %v5379
  %v5404 = vmul.f32 %v5108, %v5379
  %v5405 = vmul.f32 %v5109, %v5379
  %v5406 = vmul.f32 %v5110, %v5379
  %v5407 = vmul.f32 %v5111, %v5379
  %v5436 = vrot.slane %v5380, 4
  %v5437 = vrot.slane %v5381, 4
  %v5438 = vsel %vm2347, %v5436, %v5437
  %v5439 = vrot.slane %v5382, 4
  %v5440 = vrot.slane %v5383, 4
  %v5441 = vsel %vm2347, %v5439, %v5440
  %v5442 = vrot.slane %v5384, 4
  %v5443 = vrot.slane %v5385, 4
  %v5444 = vsel %vm2347, %v5442, %v5443
  %v5445 = vrot.slane %v5386, 4
  %v5446 = vrot.slane %v5387, 4
  %v5447 = vsel %vm2347, %v5445, %v5446
  %v5448 = vrot.slane %v5388, 4
  %v5449 = vrot.slane %v5389, 4
  %v5450 = vsel %vm2347, %v5448, %v5449
  %v5451 = vrot.slane %v5390, 4
  %v5452 = vrot.slane %v5391, 4
  %v5453 = vsel %vm2347, %v5451, %v5452
  %v5454 = vrot.slane %v5392, 4
  %v5455 = vrot.slane %v5393, 4
  %v5456 = vsel %vm2347, %v5454, %v5455
  %v5457 = vrot.slane %v5394, 4
  %v5458 = vrot.slane %v5395, 4
  %v5459 = vsel %vm2347, %v5457, %v5458
  %v5460 = vrot.slane %v5396, 4
  %v5461 = vrot.slane %v5397, 4
  %v5462 = vsel %vm2347, %v5460, %v5461
  %v5463 = vrot.slane %v5398, 4
  %v5464 = vrot.slane %v5399, 4
  %v5465 = vsel %vm2347, %v5463, %v5464
  %v5466 = vrot.slane %v5400, 4
  %v5467 = vrot.slane %v5401, 4
  %v5468 = vsel %vm2347, %v5466, %v5467
  %v5469 = vrot.slane %v5402, 4
  %v5470 = vrot.slane %v5403, 4
  %v5471 = vsel %vm2347, %v5469, %v5470
  %v5472 = vrot.slane %v5404, 4
  %v5473 = vrot.slane %v5405, 4
  %v5474 = vsel %vm2347, %v5472, %v5473
  %v5475 = vrot.slane %v5406, 4
  %v5476 = vrot.slane %v5407, 4
  %v5477 = vsel %vm2347, %v5475, %v5476
  %v5492 = vadd.f32 %v5232, %v5438
  %v5493 = vadd.f32 %v5233, %v5441
  %v5494 = vadd.f32 %v5234, %v5444
  %v5495 = vadd.f32 %v5235, %v5447
  %v5496 = vadd.f32 %v5236, %v5450
  %v5497 = vadd.f32 %v5237, %v5453
  %v5498 = vadd.f32 %v5238, %v5456
  %v5499 = vadd.f32 %v5239, %v5459
  %v5500 = vadd.f32 %v5240, %v5462
  %v5501 = vadd.f32 %v5241, %v5465
  %v5502 = vadd.f32 %v5242, %v5468
  %v5503 = vadd.f32 %v5243, %v5471
  %v5504 = vadd.f32 %v5244, %v5474
  %v5505 = vadd.f32 %v5245, %v5477
  %v5506 = vlaneseq
  %v5507 = vshrl.u32 %v5506, 7
  %v5508 = vsub.s32 3, %v5507
  %v5509 = vrot.slane %v3108, %v5508
  %v5510 = vmul.f32 %v5078, %v5509
  %v5511 = vmul.f32 %v5079, %v5509
  %v5512 = vmul.f32 %v5080, %v5509
  %v5513 = vmul.f32 %v5081, %v5509
  %v5514 = vmul.f32 %v5082, %v5509
  %v5515 = vmul.f32 %v5083, %v5509
  %v5516 = vmul.f32 %v5084, %v5509
  %v5517 = vmul.f32 %v5085, %v5509
  %v5518 = vmul.f32 %v5086, %v5509
  %v5519 = vmul.f32 %v5087, %v5509
  %v5520 = vmul.f32 %v5088, %v5509
  %v5521 = vmul.f32 %v5089, %v5509
  %v5522 = vmul.f32 %v5090, %v5509
  %v5523 = vmul.f32 %v5091, %v5509
  %v5524 = vmul.f32 %v5100, %v5509
  %v5525 = vmul.f32 %v5101, %v5509
  %v5526 = vmul.f32 %v5102, %v5509
  %v5527 = vmul.f32 %v5103, %v5509
  %v5528 = vmul.f32 %v5104, %v5509
  %v5529 = vmul.f32 %v5105, %v5509
  %v5530 = vmul.f32 %v5106, %v5509
  %v5531 = vmul.f32 %v5107, %v5509
  %v5532 = vmul.f32 %v5108, %v5509
  %v5533 = vmul.f32 %v5109, %v5509
  %v5534 = vmul.f32 %v5110, %v5509
  %v5535 = vmul.f32 %v5111, %v5509
  %v5536 = vmul.f32 %v5112, %v5509
  %v5537 = vmul.f32 %v5113, %v5509
  %v5566 = vrot.slane %v5510, 4
  %v5567 = vrot.slane %v5511, 4
  %v5568 = vsel %vm2347, %v5566, %v5567
  %v5569 = vrot.slane %v5512, 4
  %v5570 = vrot.slane %v5513, 4
  %v5571 = vsel %vm2347, %v5569, %v5570
  %v5572 = vrot.slane %v5514, 4
  %v5573 = vrot.slane %v5515, 4
  %v5574 = vsel %vm2347, %v5572, %v5573
  %v5575 = vrot.slane %v5516, 4
  %v5576 = vrot.slane %v5517, 4
  %v5577 = vsel %vm2347, %v5575, %v5576
  %v5578 = vrot.slane %v5518, 4
  %v5579 = vrot.slane %v5519, 4
  %v5580 = vsel %vm2347, %v5578, %v5579
  %v5581 = vrot.slane %v5520, 4
  %v5582 = vrot.slane %v5521, 4
  %v5583 = vsel %vm2347, %v5581, %v5582
  %v5584 = vrot.slane %v5522, 4
  %v5585 = vrot.slane %v5523, 4
  %v5586 = vsel %vm2347, %v5584, %v5585
  %v5587 = vrot.slane %v5524, 4
  %v5588 = vrot.slane %v5525, 4
  %v5589 = vsel %vm2347, %v5587, %v5588
  %v5590 = vrot.slane %v5526, 4
  %v5591 = vrot.slane %v5527, 4
  %v5592 = vsel %vm2347, %v5590, %v5591
  %v5593 = vrot.slane %v5528, 4
  %v5594 = vrot.slane %v5529, 4
  %v5595 = vsel %vm2347, %v5593, %v5594
  %v5596 = vrot.slane %v5530, 4
  %v5597 = vrot.slane %v5531, 4
  %v5598 = vsel %vm2347, %v5596, %v5597
  %v5599 = vrot.slane %v5532, 4
  %v5600 = vrot.slane %v5533, 4
  %v5601 = vsel %vm2347, %v5599, %v5600
  %v5602 = vrot.slane %v5534, 4
  %v5603 = vrot.slane %v5535, 4
  %v5604 = vsel %vm2347, %v5602, %v5603
  %v5605 = vrot.slane %v5536, 4
  %v5606 = vrot.slane %v5537, 4
  %v5607 = vsel %vm2347, %v5605, %v5606
  %v5622 = vadd.f32 %v5362, %v5568
  %v5623 = vadd.f32 %v5363, %v5571
  %v5624 = vadd.f32 %v5364, %v5574
  %v5625 = vadd.f32 %v5365, %v5577
  %v5626 = vadd.f32 %v5366, %v5580
  %v5627 = vadd.f32 %v5367, %v5583
  %v5628 = vadd.f32 %v5368, %v5586
  %v5629 = vadd.f32 %v5369, %v5589
  %v5630 = vadd.f32 %v5370, %v5592
  %v5631 = vadd.f32 %v5371, %v5595
  %v5632 = vadd.f32 %v5372, %v5598
  %v5633 = vadd.f32 %v5373, %v5601
  %v5634 = vadd.f32 %v5374, %v5604
  %v5635 = vadd.f32 %v5375, %v5607
  %v5636 = vlaneseq
  %v5637 = vshrl.u32 %v5636, 7
  %v5638 = vsub.s32 0, %v5637
  %v5639 = vrot.slane %v3109, %v5638
  %v5640 = vmul.f32 %v5080, %v5639
  %v5641 = vmul.f32 %v5081, %v5639
  %v5642 = vmul.f32 %v5082, %v5639
  %v5643 = vmul.f32 %v5083, %v5639
  %v5644 = vmul.f32 %v5084, %v5639
  %v5645 = vmul.f32 %v5085, %v5639
  %v5646 = vmul.f32 %v5086, %v5639
  %v5647 = vmul.f32 %v5087, %v5639
  %v5648 = vmul.f32 %v5088, %v5639
  %v5649 = vmul.f32 %v5089, %v5639
  %v5650 = vmul.f32 %v5090, %v5639
  %v5651 = vmul.f32 %v5091, %v5639
  %v5652 = vmul.f32 %v5092, %v5639
  %v5653 = vmul.f32 %v5093, %v5639
  %v5654 = vmul.f32 %v5102, %v5639
  %v5655 = vmul.f32 %v5103, %v5639
  %v5656 = vmul.f32 %v5104, %v5639
  %v5657 = vmul.f32 %v5105, %v5639
  %v5658 = vmul.f32 %v5106, %v5639
  %v5659 = vmul.f32 %v5107, %v5639
  %v5660 = vmul.f32 %v5108, %v5639
  %v5661 = vmul.f32 %v5109, %v5639
  %v5662 = vmul.f32 %v5110, %v5639
  %v5663 = vmul.f32 %v5111, %v5639
  %v5664 = vmul.f32 %v5112, %v5639
  %v5665 = vmul.f32 %v5113, %v5639
  %v5666 = vmul.f32 %v5114, %v5639
  %v5667 = vmul.f32 %v5115, %v5639
  %v5696 = vrot.slane %v5640, 4
  %v5697 = vrot.slane %v5641, 4
  %v5698 = vsel %vm2347, %v5696, %v5697
  %v5699 = vrot.slane %v5642, 4
  %v5700 = vrot.slane %v5643, 4
  %v5701 = vsel %vm2347, %v5699, %v5700
  %v5702 = vrot.slane %v5644, 4
  %v5703 = vrot.slane %v5645, 4
  %v5704 = vsel %vm2347, %v5702, %v5703
  %v5705 = vrot.slane %v5646, 4
  %v5706 = vrot.slane %v5647, 4
  %v5707 = vsel %vm2347, %v5705, %v5706
  %v5708 = vrot.slane %v5648, 4
  %v5709 = vrot.slane %v5649, 4
  %v5710 = vsel %vm2347, %v5708, %v5709
  %v5711 = vrot.slane %v5650, 4
  %v5712 = vrot.slane %v5651, 4
  %v5713 = vsel %vm2347, %v5711, %v5712
  %v5714 = vrot.slane %v5652, 4
  %v5715 = vrot.slane %v5653, 4
  %v5716 = vsel %vm2347, %v5714, %v5715
  %v5717 = vrot.slane %v5654, 4
  %v5718 = vrot.slane %v5655, 4
  %v5719 = vsel %vm2347, %v5717, %v5718
  %v5720 = vrot.slane %v5656, 4
  %v5721 = vrot.slane %v5657, 4
  %v5722 = vsel %vm2347, %v5720, %v5721
  %v5723 = vrot.slane %v5658, 4
  %v5724 = vrot.slane %v5659, 4
  %v5725 = vsel %vm2347, %v5723, %v5724
  %v5726 = vrot.slane %v5660, 4
  %v5727 = vrot.slane %v5661, 4
  %v5728 = vsel %vm2347, %v5726, %v5727
  %v5729 = vrot.slane %v5662, 4
  %v5730 = vrot.slane %v5663, 4
  %v5731 = vsel %vm2347, %v5729, %v5730
  %v5732 = vrot.slane %v5664, 4
  %v5733 = vrot.slane %v5665, 4
  %v5734 = vsel %vm2347, %v5732, %v5733
  %v5735 = vrot.slane %v5666, 4
  %v5736 = vrot.slane %v5667, 4
  %v5737 = vsel %vm2347, %v5735, %v5736
  %v5752 = vadd.f32 %v5492, %v5698
  %v5753 = vadd.f32 %v5493, %v5701
  %v5754 = vadd.f32 %v5494, %v5704
  %v5755 = vadd.f32 %v5495, %v5707
  %v5756 = vadd.f32 %v5496, %v5710
  %v5757 = vadd.f32 %v5497, %v5713
  %v5758 = vadd.f32 %v5498, %v5716
  %v5759 = vadd.f32 %v5499, %v5719
  %v5760 = vadd.f32 %v5500, %v5722
  %v5761 = vadd.f32 %v5501, %v5725
  %v5762 = vadd.f32 %v5502, %v5728
  %v5763 = vadd.f32 %v5503, %v5731
  %v5764 = vadd.f32 %v5504, %v5734
  %v5765 = vadd.f32 %v5505, %v5737
  %v5766 = vadd.f32 %v5752, %v5622
  %v5767 = vadd.f32 %v5753, %v5623
  %v5768 = vadd.f32 %v5754, %v5624
  %v5769 = vadd.f32 %v5755, %v5625
  %v5770 = vadd.f32 %v5756, %v5626
  %v5771 = vadd.f32 %v5757, %v5627
  %v5772 = vadd.f32 %v5758, %v5628
  %v5773 = vadd.f32 %v5759, %v5629
  %v5774 = vadd.f32 %v5760, %v5630
  %v5775 = vadd.f32 %v5761, %v5631
  %v5776 = vadd.f32 %v5762, %v5632
  %v5777 = vadd.f32 %v5763, %v5633
  %v5778 = vadd.f32 %v5764, %v5634
  %v5779 = vadd.f32 %v5765, %v5635
  %v5780 = vsel %vm2952, %v5766, 0.0
  %v5781 = vsel %vm2952, %v5767, 0.0
  %v5782 = vadd.f32 %v5780, %v5781
  %v5783 = vsel %vm2952, %v5768, 0.0
  %v5784 = vadd.f32 %v5782, %v5783
  %v5785 = vsel %vm2952, %v5769, 0.0
  %v5786 = vadd.f32 %v5784, %v5785
  %v5787 = vsel %vm2952, %v5770, 0.0
  %v5788 = vadd.f32 %v5786, %v5787
  %v5789 = vsel %vm2952, %v5771, 0.0
  %v5790 = vadd.f32 %v5788, %v5789
  %v5791 = vsel %vm2952, %v5772, 0.0
  %v5792 = vadd.f32 %v5790, %v5791
  %v5793 = vsel %vm2952, %v5773, 0.0
  %v5794 = vadd.f32 %v5792, %v5793
  %v5795 = vsel %vm2952, %v5774, 0.0
  %v5796 = vadd.f32 %v5794, %v5795
  %v5797 = vsel %vm2952, %v5775, 0.0
  %v5798 = vadd.f32 %v5796, %v5797
  %v5799 = vsel %vm2952, %v5776, 0.0
  %v5800 = vadd.f32 %v5798, %v5799
  %v5801 = vsel %vm2952, %v5777, 0.0
  %v5802 = vadd.f32 %v5800, %v5801
  %v5803 = vsel %vm2952, %v5778, 0.0
  %v5804 = vadd.f32 %v5802, %v5803
  %v5805 = vsel %vm2952, %v5779, 0.0
  %v5806 = vadd.f32 %v5804, %v5805
  %v5807 = vrot.slane %v5806, 4
  %v5808 = vadd.f32 %v5806, %v5807
  %v5809 = vrot.slane %v5808, 2
  %v5810 = vadd.f32 %v5808, %v5809
  %v5811 = vrot.slane %v5810, 1
  %v5812 = vadd.f32 %v5810, %v5811
  %v5813 = vmul.f32 %v5812, 0.010204081
  %v5814 = vsub.f32 %v5766, %v5813
  %v5815 = vsub.f32 %v5767, %v5813
  %v5816 = vsub.f32 %v5768, %v5813
  %v5817 = vsub.f32 %v5769, %v5813
  %v5818 = vsub.f32 %v5770, %v5813
  %v5819 = vsub.f32 %v5771, %v5813
  %v5820 = vsub.f32 %v5772, %v5813
  %v5821 = vsub.f32 %v5773, %v5813
  %v5822 = vsub.f32 %v5774, %v5813
  %v5823 = vsub.f32 %v5775, %v5813
  %v5824 = vsub.f32 %v5776, %v5813
  %v5825 = vsub.f32 %v5777, %v5813
  %v5826 = vsub.f32 %v5778, %v5813
  %v5827 = vsub.f32 %v5779, %v5813
  %v5828 = vmul.f32 %v5814, %v5814
  %v5829 = vmul.f32 %v5815, %v5815
  %v5830 = vmul.f32 %v5816, %v5816
  %v5831 = vmul.f32 %v5817, %v5817
  %v5832 = vmul.f32 %v5818, %v5818
  %v5833 = vmul.f32 %v5819, %v5819
  %v5834 = vmul.f32 %v5820, %v5820
  %v5835 = vmul.f32 %v5821, %v5821
  %v5836 = vmul.f32 %v5822, %v5822
  %v5837 = vmul.f32 %v5823, %v5823
  %v5838 = vmul.f32 %v5824, %v5824
  %v5839 = vmul.f32 %v5825, %v5825
  %v5840 = vmul.f32 %v5826, %v5826
  %v5841 = vmul.f32 %v5827, %v5827
  %v5842 = vsel %vm2952, %v5828, 0.0
  %v5843 = vsel %vm2952, %v5829, 0.0
  %v5844 = vadd.f32 %v5842, %v5843
  %v5845 = vsel %vm2952, %v5830, 0.0
  %v5846 = vadd.f32 %v5844, %v5845
  %v5847 = vsel %vm2952, %v5831, 0.0
  %v5848 = vadd.f32 %v5846, %v5847
  %v5849 = vsel %vm2952, %v5832, 0.0
  %v5850 = vadd.f32 %v5848, %v5849
  %v5851 = vsel %vm2952, %v5833, 0.0
  %v5852 = vadd.f32 %v5850, %v5851
  %v5853 = vsel %vm2952, %v5834, 0.0
  %v5854 = vadd.f32 %v5852, %v5853
  %v5855 = vsel %vm2952, %v5835, 0.0
  %v5856 = vadd.f32 %v5854, %v5855
  %v5857 = vsel %vm2952, %v5836, 0.0
  %v5858 = vadd.f32 %v5856, %v5857
  %v5859 = vsel %vm2952, %v5837, 0.0
  %v5860 = vadd.f32 %v5858, %v5859
  %v5861 = vsel %vm2952, %v5838, 0.0
  %v5862 = vadd.f32 %v5860, %v5861
  %v5863 = vsel %vm2952, %v5839, 0.0
  %v5864 = vadd.f32 %v5862, %v5863
  %v5865 = vsel %vm2952, %v5840, 0.0
  %v5866 = vadd.f32 %v5864, %v5865
  %v5867 = vsel %vm2952, %v5841, 0.0
  %v5868 = vadd.f32 %v5866, %v5867
  %v5869 = vrot.slane %v5868, 4
  %v5870 = vadd.f32 %v5868, %v5869
  %v5871 = vrot.slane %v5870, 2
  %v5872 = vadd.f32 %v5870, %v5871
  %v5873 = vrot.slane %v5872, 1
  %v5874 = vadd.f32 %v5872, %v5873
  %v5875 = vmul.f32 %v5874, 0.010204081
  %v5876 = vadd.f32 %v5875, 0.001
  %v5877 = vrsqrt.pop %v5876
  %v5878 = vld [vmem:[%s2 + $0x1] sm:$0x1]
  %v5879 = vld [vmem:[%s3 + $0x1] sm:$0x1]
  %v5880 = vmul.f32 %v5877, %v5878
  %v5881 = vlaneseq
  %v5882 = vshrl.u32 %v5881, 7
  %v5883 = vsub.s32 0, %v5882
  %v5884 = vrot.slane %v5880, %v5883
  %v5885 = vmul.f32 %v5814, %v5884
  %v5886 = vmul.f32 %v5815, %v5884
  %v5887 = vmul.f32 %v5816, %v5884
  %v5888 = vmul.f32 %v5817, %v5884
  %v5889 = vmul.f32 %v5818, %v5884
  %v5890 = vmul.f32 %v5819, %v5884
  %v5891 = vmul.f32 %v5820, %v5884
  %v5892 = vmul.f32 %v5821, %v5884
  %v5893 = vmul.f32 %v5822, %v5884
  %v5894 = vmul.f32 %v5823, %v5884
  %v5895 = vmul.f32 %v5824, %v5884
  %v5896 = vmul.f32 %v5825, %v5884
  %v5897 = vmul.f32 %v5826, %v5884
  %v5898 = vmul.f32 %v5827, %v5884
  %v5900 = vlaneseq
  %v5901 = vshrl.u32 %v5900, 7
  %v5902 = vsub.s32 0, %v5901
  %v5903 = vrot.slane %v5879, %v5902
  %v5905 = vadd.f32 %v5885, %v5903
  %v5906 = vadd.f32 %v5886, %v5903
  %v5907 = vadd.f32 %v5887, %v5903
  %v5908 = vadd.f32 %v5888, %v5903
  %v5909 = vadd.f32 %v5889, %v5903
  %v5910 = vadd.f32 %v5890, %v5903
  %v5911 = vadd.f32 %v5891, %v5903
  %v5912 = vadd.f32 %v5892, %v5903
  %v5913 = vadd.f32 %v5893, %v5903
  %v5914 = vadd.f32 %v5894, %v5903
  %v5915 = vadd.f32 %v5895, %v5903
  %v5916 = vadd.f32 %v5896, %v5903
  %v5917 = vadd.f32 %v5897, %v5903
  %v5918 = vadd.f32 %v5898, %v5903
  %5919 = vst [vmem:[%s4 + $0x8] sm:$0x7f] %v5905
  %5920 = vst [vmem:[%s4 + $0x18] sm:$0x7f] %v5906
  %5921 = vst [vmem:[%s4 + $0x28] sm:$0x7f] %v5907
  %5922 = vst [vmem:[%s4 + $0x38] sm:$0x7f] %v5908
  %5923 = vst [vmem:[%s4 + $0x48] sm:$0x7f] %v5909
  %5924 = vst [vmem:[%s4 + $0x58] sm:$0x7f] %v5910
  %5925 = vst [vmem:[%s4 + $0x68] sm:$0x7f] %v5911
  %5926 = vst [vmem:[%s4 + $0x78] sm:$0x7f] %v5912
  %5927 = vst [vmem:[%s4 + $0x88] sm:$0x7f] %v5913
  %5928 = vst [vmem:[%s4 + $0x98] sm:$0x7f] %v5914
  %5929 = vst [vmem:[%s4 + $0xa8] sm:$0x7f] %v5915
  %5930 = vst [vmem:[%s4 + $0xb8] sm:$0x7f] %v5916
  %5931 = vst [vmem:[%s4 + $0xc8] sm:$0x7f] %v5917
  %5932 = vst [vmem:[%s4 + $0xd8] sm:$0x7f] %v5918
  // Predicated region
  $region18: #{tpu_custom_call.1} parent=0 // pred_check
    _
  $region19: #{tpu_custom_call.1} parent=0 // pred_check_branch
    %5934 = sbr.rel (0) target = $region21
  $region20: #{tpu_custom_call.1} parent=0 // pred_region
    _
  $region21: #{tpu_custom_call.1} parent=0 // pred_fallthru
    _
  // Predicated region
  $region22: #{tpu_custom_call.1} parent=0 // pred_check
    _
  $region23: #{tpu_custom_call.1} parent=0 // pred_check_branch
    %5936 = sbr.rel (0) target = $region25
  $region24: #{tpu_custom_call.1} parent=0 // pred_region
    _
  $region25: #{tpu_custom_call.1} parent=0 // pred_fallthru
    _

</llo_original>
